<compile_context>
chip_gen: v6e
topology: v6e:2x2x1
jax: 0.10.0
libtpu: 0.0.40
codegen_flags: <defaults>
</compile_context>

<pallas_src>
import numpy as np
import jax
import jax.numpy as jnp
from jax.experimental import pallas as pl
from jax.experimental.pallas import tpu as pltpu

# ---------------- static configuration (matches the PyTorch module) ---------
EMBD = 32                         # embd_dim (C)
HEADS = 4                         # n_heads
HEAD_DIM = EMBD // HEADS          # 8
T = 32                            # time steps per sequence
B = 4                             # sequences packed along the lane axis
BT = B * T                        # packed sequence length (= 128 lanes)
EXPANSION = 4
HID = EMBD * EXPANSION            # FFN hidden width (128)
EPS = 1e-5
SCALE = 1.0 / (HEAD_DIM ** 0.25)  # 1/sqrt(sqrt(head_dim)); folded into Wq/Wk
NEG_INF = -1e30                   # finite masked logit (exp underflows to 0)

# ---- column layout of the packed per-channel parameter table (HID, N_VEC) --
V_LN_ATTN_W, V_LN_ATTN_B = 0, 1
V_QCONV, V_KCONV, V_VCONV = 2, 5, 8      # 3 depthwise taps each
V_B_QKV = 11                             # rows 0:3*EMBD (scale + LN folded)
V_B_PROJ = 12                            # LayerScale folded
V_LN_FFN_W, V_LN_FFN_B = 13, 14
V_B_FC = 15                              # rows 0:HID
V_B_PR = 16                              # LayerScale folded
N_VEC = 17


def _erf(x):
    # TODO(synk): lax.erf has no guaranteed Mosaic lowering; use a float32
    # rational approximation (|err| <= 1.2e-7) to match nn.GELU() exact-erf.
    a = jnp.abs(x)
    t = 1.0 / (1.0 + 0.5 * a)
    poly = t * jnp.exp(
        -a * a - 1.26551223 + t * (1.00002368 + t * (0.37409196 + t * (
            0.09678418 + t * (-0.18628806 + t * (0.27886807 + t * (
                -1.13520398 + t * (1.48851587 + t * (
                    -0.82215223 + t * 0.17087277)))))))))
    return jnp.where(x >= 0.0, 1.0 - poly, poly - 1.0)


def _gelu_exact(x):
    return 0.5 * x * (1.0 + _erf(x * 0.7071067811865476))


def transformer_encoder_kernel(x_ref, mask_ref, shift_ref, bias_ref,
                               hsel_ref, segmap_ref, wqkv_ref, wmisc_ref,
                               vec_ref, out_ref, feat_ref):
    C, N, H = EMBD, BT, HEADS
    f32 = jnp.float32

    x = x_ref[...]                   # (C, N)   packed (channels, batch*time)
    mask = mask_ref[...]             # (1, N)   1. valid / 0. padded
    Wqkv = wqkv_ref[...]             # (3C, 3C) block-diag, scale + LN folded
    Wm = wmisc_ref[...]              # (C + 2*HID, C) = [Wp' ; Wfc ; Wpr'^T]
    V = vec_ref[...]                 # (HID, N_VEC) packed per-channel vectors

    def vcol(col, rows=C):
        return V[0:rows, col:col + 1]                     # (rows, 1)

    def layernorm_c(u, w, b):
        # torch LayerNorm over the channel (sublane) axis, biased variance.
        mu = jnp.mean(u, axis=0, keepdims=True)
        uc = u - mu
        var = jnp.mean(uc * uc, axis=0, keepdims=True)
        return uc * jax.lax.rsqrt(var + EPS) * w + b

    def standardize_c(u):
        # q/k/v LayerNorms: affine already folded into Wqkv / b_qkv.
        mu = jnp.mean(u, axis=0, keepdims=True)
        uc = u - mu
        var = jnp.mean(uc * uc, axis=0, keepdims=True)
        return uc * jax.lax.rsqrt(var + EPS)

    # ---------------- TransformerEncoder.forward -----------------------------
    xm = x * mask                                         # x = x*mask ; skip
    xln = layernorm_c(xm, vcol(V_LN_ATTN_W), vcol(V_LN_ATTN_B))

    # MaskedConv1D (depthwise, k=3, stride=1, pad=1, no bias): the neighbour
    # gather for the whole packed batch is ONE matmul against a static shift
    # matrix that already encodes the per-sequence zero padding.
    xlm = xln * mask                                      # conv input
    shifted = jnp.dot(xlm, shift_ref[...],
                      preferred_element_type=f32)         # (C, 2N)
    u_prev = shifted[:, 0:N]                              # xlm[:, t-1], 0-pad
    u_next = shifted[:, N:2 * N]                          # xlm[:, t+1], 0-pad

    def dw3(c0):                                          # per-channel taps
        w = V[0:C, c0:c0 + 3]
        return w[:, 0:1] * u_prev + w[:, 1:2] * xlm + w[:, 2:3] * u_next

    # branch results go into one VMEM scratch (no sublane concatenation)
    feat_ref[0:C, :] = standardize_c(dw3(V_QCONV))
    feat_ref[C:2 * C, :] = standardize_c(dw3(V_KCONV))
    feat_ref[2 * C:3 * C, :] = standardize_c(dw3(V_VCONV))

    # fused Q/K/V 1x1 conv: one MXU matmul; block-diagonal weight already
    # contains the q/k/v LayerNorm affines and the attention scale.
    qkv = (jnp.dot(Wqkv, feat_ref[...], preferred_element_type=f32)
           + vcol(V_B_QKV, 3 * C))
    q = qkv[0:C, :]
    k = qkv[C:2 * C, :]
    v = qkv[2 * C:3 * C, :]

    # ------------- MaskedMHA (window_size == 0, dense attention) -------------
    # Heads batched by expanding K/V into per-head lane blocks:
    #   k_bd[c, h*N + j] = k[c, j] if head(c) == h else 0
    hsel = hsel_ref[...]                                  # (C, H*N) static
    k_bd = jnp.concatenate([k] * H, axis=1) * hsel        # (C, H*N)
    v_bd = jnp.concatenate([v] * H, axis=1) * hsel        # (C, H*N)

    # logits[i, h*N + j] = <q[:, i], k[:, j]>_head_h + additive mask bias
    logits = jax.lax.dot_general(q, k_bd, (((0,), (0,)), ((), ())),
                                 preferred_element_type=f32)       # (N, H*N)
    logits = logits + bias_ref[...]           # same-batch + key-validity mask

    # segmented softmax: shared row max, one exp, per-head sums via two tiny
    # MXU matmuls (segment-sum + broadcast back), exact divide.
    m = jnp.max(logits, axis=-1, keepdims=True)           # (N, 1)
    p = jnp.exp(logits - m)                               # (N, H*N)
    segmap = segmap_ref[...]                              # (H*N, H) static
    ssum = jnp.dot(p, segmap, preferred_element_type=f32)          # (N, H)
    inv = 1.0 / ssum                                      # exact (parity)
    inv_b = jax.lax.dot_general(inv, segmap, (((1,), (1,)), ((), ())),
                                preferred_element_type=f32)        # (N, H*N)
    attn = p * inv_b

    # ctx[c, i] = sum_j v[c, j] * attn[i, head(c)*N + j]
    ctx = jax.lax.dot_general(v_bd, attn, (((1,), (1,)), ((), ())),
                              preferred_element_type=f32)          # (C, N)

    # output projection (LayerScale folded into Wp'/bp').  NOTE: matching the
    # reference window_size==0 path, the projected attention output is
    # intentionally NOT re-masked before the residual.
    wp = Wm[0:C, :]
    x1 = xm + jnp.dot(wp, ctx, preferred_element_type=f32) + vcol(V_B_PROJ)

    # ---------------- FFN branch ---------------------------------------------
    w_fc = Wm[C:C + HID, :]                               # (HID, C)
    w_prT = Wm[C + HID:C + 2 * HID, :]                    # (HID, C) == Wpr'^T

    xn = layernorm_c(x1, vcol(V_LN_FFN_W), vcol(V_LN_FFN_B))
    hid = jnp.dot(w_fc, xn, preferred_element_type=f32) + vcol(V_B_FC, HID)
    hid = _gelu_exact(hid)
    ffn = jax.lax.dot_general(w_prT, hid, (((0,), (0,)), ((), ())),
                              preferred_element_type=f32) + vcol(V_B_PR)
    out_ref[...] = x1 + ffn * mask                        # LayerScale folded


# ---------------------------- host-side helpers ------------------------------
def init_params(key):
    """Parameters in their natural (PyTorch state-dict-like) shapes."""
    C, Ch = EMBD, HID
    ks = jax.random.split(key, 16)

    def rnd(k, shape, s=0.05):
        return (s * jax.random.normal(k, shape)).astype(jnp.float32)

    ones = lambda shape: jnp.ones(shape, jnp.float32)
    zeros = lambda shape: jnp.zeros(shape, jnp.float32)
    return dict(
        ln_attn_w=ones((C, 1)), ln_attn_b=zeros((C, 1)),
        q_conv_w=rnd(ks[0], (C, 3)),
        k_conv_w=rnd(ks[1], (C, 3)),
        v_conv_w=rnd(ks[2], (C, 3)),
        qn_w=ones((C, 1)), qn_b=zeros((C, 1)),
        kn_w=ones((C, 1)), kn_b=zeros((C, 1)),
        vn_w=ones((C, 1)), vn_b=zeros((C, 1)),
        wq=rnd(ks[3], (C, C)), bq=rnd(ks[4], (C, 1)),
        wk=rnd(ks[5], (C, C)), bk=rnd(ks[6], (C, 1)),
        wv=rnd(ks[7], (C, C)), bv=rnd(ks[8], (C, 1)),
        wp=rnd(ks[9], (C, C)), bp=rnd(ks[10], (C, 1)),
        ls_attn=1e-4 * ones((C, 1)),
        ln_ffn_w=ones((C, 1)), ln_ffn_b=zeros((C, 1)),
        w_fc=rnd(ks[11], (Ch, C)), b_fc=rnd(ks[12], (Ch, 1)),
        w_pr=rnd(ks[13], (C, Ch)), b_pr=rnd(ks[14], (C, 1)),
        ls_ffn=1e-4 * ones((C, 1)),
    )


def pack_params(p):
    """Folds LN affines / attention scale / LayerScale into the weights and
    packs 29 natural parameters into 3 arrays.  Called ONCE, outside jit."""
    C, Ch = EMBD, HID
    z = jnp.zeros((C, C), jnp.float32)
    # fold q/k/v LayerNorm affines + attention scale into the 1x1 convs
    wq_f = SCALE * (p["wq"] * p["qn_w"].T)
    wk_f = SCALE * (p["wk"] * p["kn_w"].T)
    wv_f = p["wv"] * p["vn_w"].T
    bq_f = SCALE * (p["bq"] + p["wq"] @ p["qn_b"])
    bk_f = SCALE * (p["bk"] + p["wk"] @ p["kn_b"])
    bv_f = p["bv"] + p["wv"] @ p["vn_b"]
    w_qkv_bd = jnp.concatenate([
        jnp.concatenate([wq_f, z, z], axis=1),
        jnp.concatenate([z, wk_f, z], axis=1),
        jnp.concatenate([z, z, wv_f], axis=1)], axis=0)            # (3C, 3C)
    # fold LayerScale into the attention / FFN output projections
    wp_f, bp_f = p["ls_attn"] * p["wp"], p["ls_attn"] * p["bp"]
    wpr_f, bpr_f = p["ls_ffn"] * p["w_pr"], p["ls_ffn"] * p["b_pr"]
    w_misc = jnp.concatenate([wp_f, p["w_fc"], wpr_f.T], axis=0)   # (C+2H, C)

    def col(v):                          # pad a (rows, 1) column to (HID, 1)
        return jnp.pad(v, ((0, Ch - v.shape[0]), (0, 0)))

    b_qkv = jnp.concatenate([bq_f, bk_f, bv_f], axis=0)
    column_vals = [
        p["ln_attn_w"], p["ln_attn_b"],
        p["q_conv_w"][:, 0:1], p["q_conv_w"][:, 1:2], p["q_conv_w"][:, 2:3],
        p["k_conv_w"][:, 0:1], p["k_conv_w"][:, 1:2], p["k_conv_w"][:, 2:3],
        p["v_conv_w"][:, 0:1], p["v_conv_w"][:, 1:2], p["v_conv_w"][:, 2:3],
        b_qkv, bp_f,
        p["ln_ffn_w"], p["ln_ffn_b"],
        p["b_fc"], bpr_f,
    ]
    assert len(column_vals) == N_VEC
    vec = jnp.concatenate([col(v) for v in column_vals], axis=1)   # (HID, 17)
    return w_qkv_bd, w_misc, vec


def make_statics():
    """Host-precomputed static selector tables.  Built ONCE, outside jit."""
    N, HN = BT, HEADS * BT
    idx = np.arange(N)
    t_in = idx % T
    # depthwise-conv neighbour gather with per-sequence zero padding baked in
    s_prev = np.zeros((N, N), np.float32)
    s_next = np.zeros((N, N), np.float32)
    s_prev[idx[t_in > 0] - 1, idx[t_in > 0]] = 1.0     # u_prev[:, i] = x[:, i-1]
    s_next[idx[t_in < T - 1] + 1, idx[t_in < T - 1]] = 1.0
    shift_pn = np.concatenate([s_prev, s_next], axis=1)            # (N, 2N)
    # head selector: head_sel[c, h*N + j] = (c // HEAD_DIM == h)
    head_sel = (np.arange(EMBD)[:, None] // HEAD_DIM
                == np.arange(HN)[None, :] // N).astype(np.float32)  # (C, H*N)
    # same-batch additive bias: 0 if key j is in the same packed sequence as i
    same_b = (idx[:, None] // T) == ((np.arange(HN)[None, :] % N) // T)
    bias_sb = np.where(same_b, 0.0, NEG_INF).astype(np.float32)     # (N, H*N)
    # head-segment map for the MXU segment-sum / broadcast in the softmax
    seg_map = (np.arange(HN)[:, None] // N
               == np.arange(HEADS)[None, :]).astype(np.float32)     # (H*N, H)
    return (jnp.asarray(shift_pn), jnp.asarray(head_sel),
            jnp.asarray(bias_sb), jnp.asarray(seg_map))


@jax.jit
def transformer_encoder(x, mask_bool, w_qkv_bd, w_misc, vec,
                        shift_pn, head_sel, bias_sb, seg_map):
    """x: (B, C, T) float32, mask_bool: (B, 1, T) bool.  Returns (y, mask)."""
    Bn, C, Tn = x.shape
    assert (Bn, C, Tn) == (B, EMBD, T)
    N = Bn * Tn
    # pack the batch along the lane axis: (B, C, T) -> (C, B*T)
    x_packed = jnp.transpose(x, (1, 0, 2)).reshape(C, N)
    mask_packed = mask_bool.astype(x.dtype).reshape(1, N)
    # fold the runtime key-validity mask into the static same-batch bias
    key_bias = jnp.where(mask_packed > 0.0, 0.0, NEG_INF)           # (1, N)
    attn_bias = bias_sb + jnp.tile(key_bias, (1, HEADS))            # (N, H*N)

    vmem = pl.BlockSpec(memory_space=pltpu.MemorySpace.VMEM)
    y_packed = pl.pallas_call(
        transformer_encoder_kernel,
        out_shape=jax.ShapeDtypeStruct((C, N), x.dtype),
        in_specs=[vmem] * 9,
        out_specs=vmem,
        scratch_shapes=[pltpu.VMEM((3 * EMBD, BT), jnp.float32)],
    )(x_packed, mask_packed, shift_pn, attn_bias, head_sel, seg_map,
      w_qkv_bd, w_misc, vec)

    y = jnp.transpose(y_packed.reshape(C, Bn, Tn), (1, 0, 2))
    # stride == 1 -> the mask passes through unchanged
    return y, mask_bool


if __name__ == "__main__":
    key = jax.random.PRNGKey(0)
    kx, kp = jax.random.split(key)
    x = jax.random.normal(kx, (B, EMBD, T), dtype=jnp.float32)
    # per-sequence valid lengths (last two sequences carry padding)
    valid_len = jnp.array([T, T, T - 8, T // 2])
    t_idx = jnp.arange(T)[None, None, :]
    mask = t_idx < valid_len[:, None, None]               # (B, 1, T) bool

    params = init_params(kp)
    packed = pack_params(params)      # folded + packed weights: built once
    statics = make_statics()          # static selector tables: built once

    y, out_mask = transformer_encoder(x, mask, *packed, *statics)
    jax.block_until_ready(y)
    assert y.shape == (B, EMBD, T)
    print("KERNEL_OK")
</pallas_src>

<mosaic_0001>
module attributes {stable_mosaic.version = 11 : i64} {
  func.func @transformer_encoder_kernel(%arg0: memref<32x128xf32, #tpu.memory_space<vmem>>, %arg1: memref<1x128xf32, #tpu.memory_space<vmem>>, %arg2: memref<128x256xf32, #tpu.memory_space<vmem>>, %arg3: memref<128x512xf32, #tpu.memory_space<vmem>>, %arg4: memref<32x512xf32, #tpu.memory_space<vmem>>, %arg5: memref<512x4xf32, #tpu.memory_space<vmem>>, %arg6: memref<96x96xf32, #tpu.memory_space<vmem>>, %arg7: memref<288x32xf32, #tpu.memory_space<vmem>>, %arg8: memref<128x17xf32, #tpu.memory_space<vmem>>, %arg9: memref<32x128xf32, #tpu.memory_space<vmem>>, %arg10: memref<96x128xf32, #tpu.memory_space<vmem>>) attributes {dimension_semantics = [], scalar_prefetch = 0 : i64, scratch_operands = 1 : i64, tpu.core_type = #tpu.core_type<tc>} {
    %c0 = arith.constant 0 : index
    %c0_0 = arith.constant 0 : index
    %0 = vector.load %arg0[%c0, %c0_0] : memref<32x128xf32, #tpu.memory_space<vmem>>, vector<32x128xf32>
    %c0_1 = arith.constant 0 : index
    %c0_2 = arith.constant 0 : index
    %1 = vector.load %arg1[%c0_1, %c0_2] : memref<1x128xf32, #tpu.memory_space<vmem>>, vector<1x128xf32>
    %c0_3 = arith.constant 0 : index
    %c0_4 = arith.constant 0 : index
    %2 = vector.load %arg6[%c0_3, %c0_4] : memref<96x96xf32, #tpu.memory_space<vmem>>, vector<96x96xf32>
    %c0_5 = arith.constant 0 : index
    %c0_6 = arith.constant 0 : index
    %3 = vector.load %arg7[%c0_5, %c0_6] : memref<288x32xf32, #tpu.memory_space<vmem>>, vector<288x32xf32>
    %c0_7 = arith.constant 0 : index
    %c0_8 = arith.constant 0 : index
    %4 = vector.load %arg8[%c0_7, %c0_8] : memref<128x17xf32, #tpu.memory_space<vmem>>, vector<128x17xf32>
    %5 = vector.broadcast %1 : vector<1x128xf32> to vector<32x128xf32>
    %6 = arith.mulf %0, %5 : vector<32x128xf32>
    %7 = vector.extract_strided_slice %4 {offsets = [0, 0], sizes = [32, 1], strides = [1, 1]} : vector<128x17xf32> to vector<32x1xf32>
    %8 = vector.extract_strided_slice %4 {offsets = [0, 1], sizes = [32, 1], strides = [1, 1]} : vector<128x17xf32> to vector<32x1xf32>
    %cst = arith.constant dense<0.000000e+00> : vector<128xf32>
    %9 = vector.multi_reduction <add>, %6, %cst [0] : vector<32x128xf32> to vector<128xf32>
    %10 = vector.shape_cast %9 : vector<128xf32> to vector<1x128xf32>
    %cst_9 = arith.constant 3.200000e+01 : f32
    %11 = vector.broadcast %cst_9 : f32 to vector<1x128xf32>
    %12 = arith.divf %10, %11 : vector<1x128xf32>
    %13 = vector.broadcast %12 : vector<1x128xf32> to vector<32x128xf32>
    %14 = arith.subf %6, %13 : vector<32x128xf32>
    %15 = arith.mulf %14, %14 : vector<32x128xf32>
    %cst_10 = arith.constant dense<0.000000e+00> : vector<128xf32>
    %16 = vector.multi_reduction <add>, %15, %cst_10 [0] : vector<32x128xf32> to vector<128xf32>
    %17 = vector.shape_cast %16 : vector<128xf32> to vector<1x128xf32>
    %cst_11 = arith.constant 3.200000e+01 : f32
    %18 = vector.broadcast %cst_11 : f32 to vector<1x128xf32>
    %19 = arith.divf %17, %18 : vector<1x128xf32>
    %cst_12 = arith.constant 9.99999974E-6 : f32
    %20 = vector.broadcast %cst_12 : f32 to vector<1x128xf32>
    %21 = arith.addf %19, %20 : vector<1x128xf32>
    %22 = math.rsqrt %21 : vector<1x128xf32>
    %23 = vector.broadcast %22 : vector<1x128xf32> to vector<32x128xf32>
    %24 = arith.mulf %14, %23 : vector<32x128xf32>
    %25 = vector.broadcast %7 : vector<32x1xf32> to vector<32x128xf32>
    %26 = arith.mulf %24, %25 : vector<32x128xf32>
    %27 = vector.broadcast %8 : vector<32x1xf32> to vector<32x128xf32>
    %28 = arith.addf %26, %27 : vector<32x128xf32>
    %29 = vector.broadcast %1 : vector<1x128xf32> to vector<32x128xf32>
    %30 = arith.mulf %28, %29 : vector<32x128xf32>
    %c0_13 = arith.constant 0 : index
    %c0_14 = arith.constant 0 : index
    %31 = vector.load %arg2[%c0_13, %c0_14] : memref<128x256xf32, #tpu.memory_space<vmem>>, vector<128x256xf32>
    %cst_15 = arith.constant dense<0.000000e+00> : vector<32x256xf32>
    %32 = tpu.matmul %30, %31, %cst_15 {dimension_numbers = #tpu.dot_dimension_numbers<[1], [0], [0], [1], [0, 0, 1, 1], [], []>} : vector<32x128xf32>, vector<128x256xf32>, vector<32x256xf32> -> vector<32x256xf32>
    %33 = vector.extract_strided_slice %32 {offsets = [0, 0], sizes = [32, 128], strides = [1, 1]} : vector<32x256xf32> to vector<32x128xf32>
    %34 = vector.extract_strided_slice %32 {offsets = [0, 128], sizes = [32, 128], strides = [1, 1]} : vector<32x256xf32> to vector<32x128xf32>
    %35 = vector.extract_strided_slice %4 {offsets = [0, 2], sizes = [32, 3], strides = [1, 1]} : vector<128x17xf32> to vector<32x3xf32>
    %36 = vector.extract_strided_slice %35 {offsets = [0, 0], sizes = [32, 1], strides = [1, 1]} : vector<32x3xf32> to vector<32x1xf32>
    %37 = vector.broadcast %36 : vector<32x1xf32> to vector<32x128xf32>
    %38 = arith.mulf %37, %33 : vector<32x128xf32>
    %39 = vector.extract_strided_slice %35 {offsets = [0, 1], sizes = [32, 1], strides = [1, 1]} : vector<32x3xf32> to vector<32x1xf32>
    %40 = vector.broadcast %39 : vector<32x1xf32> to vector<32x128xf32>
    %41 = arith.mulf %40, %30 : vector<32x128xf32>
    %42 = arith.addf %38, %41 : vector<32x128xf32>
    %43 = vector.extract_strided_slice %35 {offsets = [0, 2], sizes = [32, 1], strides = [1, 1]} : vector<32x3xf32> to vector<32x1xf32>
    %44 = vector.broadcast %43 : vector<32x1xf32> to vector<32x128xf32>
    %45 = arith.mulf %44, %34 : vector<32x128xf32>
    %46 = arith.addf %42, %45 : vector<32x128xf32>
    %cst_16 = arith.constant dense<0.000000e+00> : vector<128xf32>
    %47 = vector.multi_reduction <add>, %46, %cst_16 [0] : vector<32x128xf32> to vector<128xf32>
    %48 = vector.shape_cast %47 : vector<128xf32> to vector<1x128xf32>
    %cst_17 = arith.constant 3.200000e+01 : f32
    %49 = vector.broadcast %cst_17 : f32 to vector<1x128xf32>
    %50 = arith.divf %48, %49 : vector<1x128xf32>
    %51 = vector.broadcast %50 : vector<1x128xf32> to vector<32x128xf32>
    %52 = arith.subf %46, %51 : vector<32x128xf32>
    %53 = arith.mulf %52, %52 : vector<32x128xf32>
    %cst_18 = arith.constant dense<0.000000e+00> : vector<128xf32>
    %54 = vector.multi_reduction <add>, %53, %cst_18 [0] : vector<32x128xf32> to vector<128xf32>
    %55 = vector.shape_cast %54 : vector<128xf32> to vector<1x128xf32>
    %cst_19 = arith.constant 3.200000e+01 : f32
    %56 = vector.broadcast %cst_19 : f32 to vector<1x128xf32>
    %57 = arith.divf %55, %56 : vector<1x128xf32>
    %cst_20 = arith.constant 9.99999974E-6 : f32
    %58 = vector.broadcast %cst_20 : f32 to vector<1x128xf32>
    %59 = arith.addf %57, %58 : vector<1x128xf32>
    %60 = math.rsqrt %59 : vector<1x128xf32>
    %61 = vector.broadcast %60 : vector<1x128xf32> to vector<32x128xf32>
    %62 = arith.mulf %52, %61 : vector<32x128xf32>
    %c0_21 = arith.constant 0 : index
    %c0_22 = arith.constant 0 : index
    %63 = vector.load %arg10[%c0_21, %c0_22] : memref<96x128xf32, #tpu.memory_space<vmem>>, vector<32x128xf32>
    tpu.vector_store %arg10[%c0_21, %c0_22], %62 {strides = array<i32>} : memref<96x128xf32, #tpu.memory_space<vmem>>, vector<32x128xf32>,
    %64 = vector.extract_strided_slice %4 {offsets = [0, 5], sizes = [32, 3], strides = [1, 1]} : vector<128x17xf32> to vector<32x3xf32>
    %65 = vector.extract_strided_slice %64 {offsets = [0, 0], sizes = [32, 1], strides = [1, 1]} : vector<32x3xf32> to vector<32x1xf32>
    %66 = vector.broadcast %65 : vector<32x1xf32> to vector<32x128xf32>
    %67 = arith.mulf %66, %33 : vector<32x128xf32>
    %68 = vector.extract_strided_slice %64 {offsets = [0, 1], sizes = [32, 1], strides = [1, 1]} : vector<32x3xf32> to vector<32x1xf32>
    %69 = vector.broadcast %68 : vector<32x1xf32> to vector<32x128xf32>
    %70 = arith.mulf %69, %30 : vector<32x128xf32>
    %71 = arith.addf %67, %70 : vector<32x128xf32>
    %72 = vector.extract_strided_slice %64 {offsets = [0, 2], sizes = [32, 1], strides = [1, 1]} : vector<32x3xf32> to vector<32x1xf32>
    %73 = vector.broadcast %72 : vector<32x1xf32> to vector<32x128xf32>
    %74 = arith.mulf %73, %34 : vector<32x128xf32>
    %75 = arith.addf %71, %74 : vector<32x128xf32>
    %cst_23 = arith.constant dense<0.000000e+00> : vector<128xf32>
    %76 = vector.multi_reduction <add>, %75, %cst_23 [0] : vector<32x128xf32> to vector<128xf32>
    %77 = vector.shape_cast %76 : vector<128xf32> to vector<1x128xf32>
    %cst_24 = arith.constant 3.200000e+01 : f32
    %78 = vector.broadcast %cst_24 : f32 to vector<1x128xf32>
    %79 = arith.divf %77, %78 : vector<1x128xf32>
    %80 = vector.broadcast %79 : vector<1x128xf32> to vector<32x128xf32>
    %81 = arith.subf %75, %80 : vector<32x128xf32>
    %82 = arith.mulf %81, %81 : vector<32x128xf32>
    %cst_25 = arith.constant dense<0.000000e+00> : vector<128xf32>
    %83 = vector.multi_reduction <add>, %82, %cst_25 [0] : vector<32x128xf32> to vector<128xf32>
    %84 = vector.shape_cast %83 : vector<128xf32> to vector<1x128xf32>
    %cst_26 = arith.constant 3.200000e+01 : f32
    %85 = vector.broadcast %cst_26 : f32 to vector<1x128xf32>
    %86 = arith.divf %84, %85 : vector<1x128xf32>
    %cst_27 = arith.constant 9.99999974E-6 : f32
    %87 = vector.broadcast %cst_27 : f32 to vector<1x128xf32>
    %88 = arith.addf %86, %87 : vector<1x128xf32>
    %89 = math.rsqrt %88 : vector<1x128xf32>
    %90 = vector.broadcast %89 : vector<1x128xf32> to vector<32x128xf32>
    %91 = arith.mulf %81, %90 : vector<32x128xf32>
    %c32 = arith.constant 32 : index
    %c0_28 = arith.constant 0 : index
    %92 = vector.load %arg10[%c32, %c0_28] : memref<96x128xf32, #tpu.memory_space<vmem>>, vector<32x128xf32>
    tpu.vector_store %arg10[%c32, %c0_28], %91 {strides = array<i32>} : memref<96x128xf32, #tpu.memory_space<vmem>>, vector<32x128xf32>,
    %93 = vector.extract_strided_slice %4 {offsets = [0, 8], sizes = [32, 3], strides = [1, 1]} : vector<128x17xf32> to vector<32x3xf32>
    %94 = vector.extract_strided_slice %93 {offsets = [0, 0], sizes = [32, 1], strides = [1, 1]} : vector<32x3xf32> to vector<32x1xf32>
    %95 = vector.broadcast %94 : vector<32x1xf32> to vector<32x128xf32>
    %96 = arith.mulf %95, %33 : vector<32x128xf32>
    %97 = vector.extract_strided_slice %93 {offsets = [0, 1], sizes = [32, 1], strides = [1, 1]} : vector<32x3xf32> to vector<32x1xf32>
    %98 = vector.broadcast %97 : vector<32x1xf32> to vector<32x128xf32>
    %99 = arith.mulf %98, %30 : vector<32x128xf32>
    %100 = arith.addf %96, %99 : vector<32x128xf32>
    %101 = vector.extract_strided_slice %93 {offsets = [0, 2], sizes = [32, 1], strides = [1, 1]} : vector<32x3xf32> to vector<32x1xf32>
    %102 = vector.broadcast %101 : vector<32x1xf32> to vector<32x128xf32>
    %103 = arith.mulf %102, %34 : vector<32x128xf32>
    %104 = arith.addf %100, %103 : vector<32x128xf32>
    %cst_29 = arith.constant dense<0.000000e+00> : vector<128xf32>
    %105 = vector.multi_reduction <add>, %104, %cst_29 [0] : vector<32x128xf32> to vector<128xf32>
    %106 = vector.shape_cast %105 : vector<128xf32> to vector<1x128xf32>
    %cst_30 = arith.constant 3.200000e+01 : f32
    %107 = vector.broadcast %cst_30 : f32 to vector<1x128xf32>
    %108 = arith.divf %106, %107 : vector<1x128xf32>
    %109 = vector.broadcast %108 : vector<1x128xf32> to vector<32x128xf32>
    %110 = arith.subf %104, %109 : vector<32x128xf32>
    %111 = arith.mulf %110, %110 : vector<32x128xf32>
    %cst_31 = arith.constant dense<0.000000e+00> : vector<128xf32>
    %112 = vector.multi_reduction <add>, %111, %cst_31 [0] : vector<32x128xf32> to vector<128xf32>
    %113 = vector.shape_cast %112 : vector<128xf32> to vector<1x128xf32>
    %cst_32 = arith.constant 3.200000e+01 : f32
    %114 = vector.broadcast %cst_32 : f32 to vector<1x128xf32>
    %115 = arith.divf %113, %114 : vector<1x128xf32>
    %cst_33 = arith.constant 9.99999974E-6 : f32
    %116 = vector.broadcast %cst_33 : f32 to vector<1x128xf32>
    %117 = arith.addf %115, %116 : vector<1x128xf32>
    %118 = math.rsqrt %117 : vector<1x128xf32>
    %119 = vector.broadcast %118 : vector<1x128xf32> to vector<32x128xf32>
    %120 = arith.mulf %110, %119 : vector<32x128xf32>
    %c64 = arith.constant 64 : index
    %c0_34 = arith.constant 0 : index
    %121 = vector.load %arg10[%c64, %c0_34] : memref<96x128xf32, #tpu.memory_space<vmem>>, vector<32x128xf32>
    tpu.vector_store %arg10[%c64, %c0_34], %120 {strides = array<i32>} : memref<96x128xf32, #tpu.memory_space<vmem>>, vector<32x128xf32>,
    %c0_35 = arith.constant 0 : index
    %c0_36 = arith.constant 0 : index
    %122 = vector.load %arg10[%c0_35, %c0_36] : memref<96x128xf32, #tpu.memory_space<vmem>>, vector<96x128xf32>
    %cst_37 = arith.constant dense<0.000000e+00> : vector<96x128xf32>
    %123 = tpu.matmul %2, %122, %cst_37 {dimension_numbers = #tpu.dot_dimension_numbers<[1], [0], [0], [1], [0, 0, 1, 1], [], []>} : vector<96x96xf32>, vector<96x128xf32>, vector<96x128xf32> -> vector<96x128xf32>
    %124 = vector.extract_strided_slice %4 {offsets = [0, 11], sizes = [96, 1], strides = [1, 1]} : vector<128x17xf32> to vector<96x1xf32>
    %125 = vector.broadcast %124 : vector<96x1xf32> to vector<96x128xf32>
    %126 = arith.addf %123, %125 : vector<96x128xf32>
    %127 = vector.extract_strided_slice %126 {offsets = [0, 0], sizes = [32, 128], strides = [1, 1]} : vector<96x128xf32> to vector<32x128xf32>
    %128 = vector.extract_strided_slice %126 {offsets = [32, 0], sizes = [32, 128], strides = [1, 1]} : vector<96x128xf32> to vector<32x128xf32>
    %129 = vector.extract_strided_slice %126 {offsets = [64, 0], sizes = [32, 128], strides = [1, 1]} : vector<96x128xf32> to vector<32x128xf32>
    %c0_38 = arith.constant 0 : index
    %c0_39 = arith.constant 0 : index
    %130 = vector.load %arg4[%c0_38, %c0_39] : memref<32x512xf32, #tpu.memory_space<vmem>>, vector<32x512xf32>
    %131 = tpu.concatenate %128, %128, %128, %128 in 1 : vector<32x128xf32>, vector<32x128xf32>, vector<32x128xf32>, vector<32x128xf32> -> vector<32x512xf32>
    %132 = arith.mulf %131, %130 : vector<32x512xf32>
    %133 = tpu.concatenate %129, %129, %129, %129 in 1 : vector<32x128xf32>, vector<32x128xf32>, vector<32x128xf32>, vector<32x128xf32> -> vector<32x512xf32>
    %134 = arith.mulf %133, %130 : vector<32x512xf32>
    %cst_40 = arith.constant dense<0.000000e+00> : vector<128x512xf32>
    %135 = tpu.matmul %127, %132, %cst_40 {dimension_numbers = #tpu.dot_dimension_numbers<[0], [0], [1], [1], [0, 1, 1, 1], [], []>} : vector<32x128xf32>, vector<32x512xf32>, vector<128x512xf32> -> vector<128x512xf32>
    %c0_41 = arith.constant 0 : index
    %c0_42 = arith.constant 0 : index
    %136 = vector.load %arg3[%c0_41, %c0_42] : memref<128x512xf32, #tpu.memory_space<vmem>>, vector<128x512xf32>
    %137 = arith.addf %135, %136 : vector<128x512xf32>
    %cst_43 = arith.constant dense<0xFF800000> : vector<128xf32>
    %138 = vector.multi_reduction <maximumf>, %137, %cst_43 [1] : vector<128x512xf32> to vector<128xf32>
    %139 = vector.shape_cast %138 : vector<128xf32> to vector<128x1xf32>
    %140 = vector.broadcast %139 : vector<128x1xf32> to vector<128x512xf32>
    %141 = arith.subf %137, %140 : vector<128x512xf32>
    %142 = math.exp %141 : vector<128x512xf32>
    %c0_44 = arith.constant 0 : index
    %c0_45 = arith.constant 0 : index
    %143 = vector.load %arg5[%c0_44, %c0_45] : memref<512x4xf32, #tpu.memory_space<vmem>>, vector<512x4xf32>
    %cst_46 = arith.constant dense<0.000000e+00> : vector<128x4xf32>
    %144 = tpu.matmul %142, %143, %cst_46 {dimension_numbers = #tpu.dot_dimension_numbers<[1], [0], [0], [1], [0, 0, 1, 1], [], []>} : vector<128x512xf32>, vector<512x4xf32>, vector<128x4xf32> -> vector<128x4xf32>
    %cst_47 = arith.constant 1.000000e+00 : f32
    %145 = vector.broadcast %cst_47 : f32 to vector<128x4xf32>
    %146 = arith.divf %145, %144 : vector<128x4xf32>
    %cst_48 = arith.constant dense<0.000000e+00> : vector<128x512xf32>
    %147 = tpu.matmul %146, %143, %cst_48 {dimension_numbers = #tpu.dot_dimension_numbers<[1], [1], [0], [0], [0, 0, 1, 0], [], []>} : vector<128x4xf32>, vector<512x4xf32>, vector<128x512xf32> -> vector<128x512xf32>
    %148 = arith.mulf %142, %147 : vector<128x512xf32>
    %cst_49 = arith.constant dense<0.000000e+00> : vector<32x128xf32>
    %149 = tpu.matmul %134, %148, %cst_49 {dimension_numbers = #tpu.dot_dimension_numbers<[1], [1], [0], [0], [0, 0, 1, 0], [], []>} : vector<32x512xf32>, vector<128x512xf32>, vector<32x128xf32> -> vector<32x128xf32>
    %150 = vector.extract_strided_slice %3 {offsets = [0, 0], sizes = [32, 32], strides = [1, 1]} : vector<288x32xf32> to vector<32x32xf32>
    %cst_50 = arith.constant dense<0.000000e+00> : vector<32x128xf32>
    %151 = tpu.matmul %150, %149, %cst_50 {dimension_numbers = #tpu.dot_dimension_numbers<[1], [0], [0], [1], [0, 0, 1, 1], [], []>} : vector<32x32xf32>, vector<32x128xf32>, vector<32x128xf32> -> vector<32x128xf32>
    %152 = arith.addf %6, %151 : vector<32x128xf32>
    %153 = vector.extract_strided_slice %4 {offsets = [0, 12], sizes = [32, 1], strides = [1, 1]} : vector<128x17xf32> to vector<32x1xf32>
    %154 = vector.broadcast %153 : vector<32x1xf32> to vector<32x128xf32>
    %155 = arith.addf %152, %154 : vector<32x128xf32>
    %156 = vector.extract_strided_slice %3 {offsets = [32, 0], sizes = [128, 32], strides = [1, 1]} : vector<288x32xf32> to vector<128x32xf32>
    %157 = vector.extract_strided_slice %3 {offsets = [160, 0], sizes = [128, 32], strides = [1, 1]} : vector<288x32xf32> to vector<128x32xf32>
    %158 = vector.extract_strided_slice %4 {offsets = [0, 13], sizes = [32, 1], strides = [1, 1]} : vector<128x17xf32> to vector<32x1xf32>
    %159 = vector.extract_strided_slice %4 {offsets = [0, 14], sizes = [32, 1], strides = [1, 1]} : vector<128x17xf32> to vector<32x1xf32>
    %cst_51 = arith.constant dense<0.000000e+00> : vector<128xf32>
    %160 = vector.multi_reduction <add>, %155, %cst_51 [0] : vector<32x128xf32> to vector<128xf32>
    %161 = vector.shape_cast %160 : vector<128xf32> to vector<1x128xf32>
    %cst_52 = arith.constant 3.200000e+01 : f32
    %162 = vector.broadcast %cst_52 : f32 to vector<1x128xf32>
    %163 = arith.divf %161, %162 : vector<1x128xf32>
    %164 = vector.broadcast %163 : vector<1x128xf32> to vector<32x128xf32>
    %165 = arith.subf %155, %164 : vector<32x128xf32>
    %166 = arith.mulf %165, %165 : vector<32x128xf32>
    %cst_53 = arith.constant dense<0.000000e+00> : vector<128xf32>
    %167 = vector.multi_reduction <add>, %166, %cst_53 [0] : vector<32x128xf32> to vector<128xf32>
    %168 = vector.shape_cast %167 : vector<128xf32> to vector<1x128xf32>
    %cst_54 = arith.constant 3.200000e+01 : f32
    %169 = vector.broadcast %cst_54 : f32 to vector<1x128xf32>
    %170 = arith.divf %168, %169 : vector<1x128xf32>
    %cst_55 = arith.constant 9.99999974E-6 : f32
    %171 = vector.broadcast %cst_55 : f32 to vector<1x128xf32>
    %172 = arith.addf %170, %171 : vector<1x128xf32>
    %173 = math.rsqrt %172 : vector<1x128xf32>
    %174 = vector.broadcast %173 : vector<1x128xf32> to vector<32x128xf32>
    %175 = arith.mulf %165, %174 : vector<32x128xf32>
    %176 = vector.broadcast %158 : vector<32x1xf32> to vector<32x128xf32>
    %177 = arith.mulf %175, %176 : vector<32x128xf32>
    %178 = vector.broadcast %159 : vector<32x1xf32> to vector<32x128xf32>
    %179 = arith.addf %177, %178 : vector<32x128xf32>
    %cst_56 = arith.constant dense<0.000000e+00> : vector<128x128xf32>
    %180 = tpu.matmul %156, %179, %cst_56 {dimension_numbers = #tpu.dot_dimension_numbers<[1], [0], [0], [1], [0, 0, 1, 1], [], []>} : vector<128x32xf32>, vector<32x128xf32>, vector<128x128xf32> -> vector<128x128xf32>
    %181 = vector.extract_strided_slice %4 {offsets = [0, 15], sizes = [128, 1], strides = [1, 1]} : vector<128x17xf32> to vector<128x1xf32>
    %182 = vector.broadcast %181 : vector<128x1xf32> to vector<128x128xf32>
    %183 = arith.addf %180, %182 : vector<128x128xf32>
    %cst_57 = arith.constant 5.000000e-01 : f32
    %184 = vector.broadcast %cst_57 : f32 to vector<128x128xf32>
    %185 = arith.mulf %184, %183 : vector<128x128xf32>
    %cst_58 = arith.constant 0.707106769 : f32
    %186 = vector.broadcast %cst_58 : f32 to vector<128x128xf32>
    %187 = arith.mulf %183, %186 : vector<128x128xf32>
    %188 = math.absf %187 : vector<128x128xf32>
    %cst_59 = arith.constant 5.000000e-01 : f32
    %189 = vector.broadcast %cst_59 : f32 to vector<128x128xf32>
    %190 = arith.mulf %189, %188 : vector<128x128xf32>
    %cst_60 = arith.constant 1.000000e+00 : f32
    %191 = vector.broadcast %cst_60 : f32 to vector<128x128xf32>
    %192 = arith.addf %191, %190 : vector<128x128xf32>
    %cst_61 = arith.constant 1.000000e+00 : f32
    %193 = vector.broadcast %cst_61 : f32 to vector<128x128xf32>
    %194 = arith.divf %193, %192 : vector<128x128xf32>
    %cst_62 = arith.constant 0.000000e+00 : f32
    %195 = vector.broadcast %cst_62 : f32 to vector<128x128xf32>
    %196 = arith.subf %195, %188 : vector<128x128xf32>
    %197 = arith.mulf %196, %188 : vector<128x128xf32>
    %cst_63 = arith.constant 1.26551223 : f32
    %198 = vector.broadcast %cst_63 : f32 to vector<128x128xf32>
    %199 = arith.subf %197, %198 : vector<128x128xf32>
    %cst_64 = arith.constant 0.170872763 : f32
    %200 = vector.broadcast %cst_64 : f32 to vector<128x128xf32>
    %201 = arith.mulf %194, %200 : vector<128x128xf32>
    %cst_65 = arith.constant -0.822152256 : f32
    %202 = vector.broadcast %cst_65 : f32 to vector<128x128xf32>
    %203 = arith.addf %202, %201 : vector<128x128xf32>
    %204 = arith.mulf %194, %203 : vector<128x128xf32>
    %cst_66 = arith.constant 1.48851585 : f32
    %205 = vector.broadcast %cst_66 : f32 to vector<128x128xf32>
    %206 = arith.addf %205, %204 : vector<128x128xf32>
    %207 = arith.mulf %194, %206 : vector<128x128xf32>
    %cst_67 = arith.constant -1.13520396 : f32
    %208 = vector.broadcast %cst_67 : f32 to vector<128x128xf32>
    %209 = arith.addf %208, %207 : vector<128x128xf32>
    %210 = arith.mulf %194, %209 : vector<128x128xf32>
    %cst_68 = arith.constant 0.278868079 : f32
    %211 = vector.broadcast %cst_68 : f32 to vector<128x128xf32>
    %212 = arith.addf %211, %210 : vector<128x128xf32>
    %213 = arith.mulf %194, %212 : vector<128x128xf32>
    %cst_69 = arith.constant -0.186288059 : f32
    %214 = vector.broadcast %cst_69 : f32 to vector<128x128xf32>
    %215 = arith.addf %214, %213 : vector<128x128xf32>
    %216 = arith.mulf %194, %215 : vector<128x128xf32>
    %cst_70 = arith.constant 0.0967841818 : f32
    %217 = vector.broadcast %cst_70 : f32 to vector<128x128xf32>
    %218 = arith.addf %217, %216 : vector<128x128xf32>
    %219 = arith.mulf %194, %218 : vector<128x128xf32>
    %cst_71 = arith.constant 0.374091953 : f32
    %220 = vector.broadcast %cst_71 : f32 to vector<128x128xf32>
    %221 = arith.addf %220, %219 : vector<128x128xf32>
    %222 = arith.mulf %194, %221 : vector<128x128xf32>
    %cst_72 = arith.constant 1.00002372 : f32
    %223 = vector.broadcast %cst_72 : f32 to vector<128x128xf32>
    %224 = arith.addf %223, %222 : vector<128x128xf32>
    %225 = arith.mulf %194, %224 : vector<128x128xf32>
    %226 = arith.addf %199, %225 : vector<128x128xf32>
    %227 = math.exp %226 : vector<128x128xf32>
    %228 = arith.mulf %194, %227 : vector<128x128xf32>
    %cst_73 = arith.constant 0.000000e+00 : f32
    %229 = vector.broadcast %cst_73 : f32 to vector<128x128xf32>
    %230 = arith.cmpf oge, %187, %229 : vector<128x128xf32>
    %cst_74 = arith.constant 1.000000e+00 : f32
    %231 = vector.broadcast %cst_74 : f32 to vector<128x128xf32>
    %232 = arith.subf %231, %228 : vector<128x128xf32>
    %cst_75 = arith.constant 1.000000e+00 : f32
    %233 = vector.broadcast %cst_75 : f32 to vector<128x128xf32>
    %234 = arith.subf %228, %233 : vector<128x128xf32>
    %235 = arith.select %230, %232, %234 : vector<128x128xi1>, vector<128x128xf32>
    %cst_76 = arith.constant 1.000000e+00 : f32
    %236 = vector.broadcast %cst_76 : f32 to vector<128x128xf32>
    %237 = arith.addf %236, %235 : vector<128x128xf32>
    %238 = arith.mulf %185, %237 : vector<128x128xf32>
    %cst_77 = arith.constant dense<0.000000e+00> : vector<32x128xf32>
    %239 = tpu.matmul %157, %238, %cst_77 {dimension_numbers = #tpu.dot_dimension_numbers<[0], [0], [1], [1], [0, 1, 1, 1], [], []>} : vector<128x32xf32>, vector<128x128xf32>, vector<32x128xf32> -> vector<32x128xf32>
    %240 = vector.extract_strided_slice %4 {offsets = [0, 16], sizes = [32, 1], strides = [1, 1]} : vector<128x17xf32> to vector<32x1xf32>
    %241 = vector.broadcast %240 : vector<32x1xf32> to vector<32x128xf32>
    %242 = arith.addf %239, %241 : vector<32x128xf32>
    %243 = vector.broadcast %1 : vector<1x128xf32> to vector<32x128xf32>
    %244 = arith.mulf %242, %243 : vector<32x128xf32>
    %245 = arith.addf %155, %244 : vector<32x128xf32>
    %c0_78 = arith.constant 0 : index
    %c0_79 = arith.constant 0 : index
    %246 = vector.load %arg9[%c0_78, %c0_79] : memref<32x128xf32, #tpu.memory_space<vmem>>, vector<32x128xf32>
    tpu.vector_store %arg9[%c0_78, %c0_79], %245 {strides = array<i32>} : memref<32x128xf32, #tpu.memory_space<vmem>>, vector<32x128xf32>,
    return
  }
}

</mosaic_0001>

<llo_original>
// kernel: transformer_encoder.1
$region0: #{transformer_encoder.1}
  #allocation0 [shape = 'u32[]', space=smem, size = 0x4, offset = 0x4, fixed_abs, tag = 'smem constant byte address 0x4 - core index']
  #allocation1 [shape = 'u32[144,128]{1,0:T(1,128)}', space=vmem, size = 0x12000, scoped, tag = 'internal scratch']
  #allocation2 [shape = 'f32[96,128]{1,0:T(8,128)}', space=vmem, size = 0xc000, scoped, tag = 'scratch operand']
  %s0 = inlined_call_operand.vmem [shape: f32[32,128], index: 0, kind: input, shape index: {}]
  %s1 = inlined_call_operand.vmem [shape: f32[1,128], index: 1, kind: input, shape index: {}]
  %s2 = inlined_call_operand.vmem [shape: f32[128,256], index: 2, kind: input, shape index: {}]
  %s3 = inlined_call_operand.vmem [shape: f32[128,512], index: 3, kind: input, shape index: {}]
  %s4 = inlined_call_operand.vmem [shape: f32[32,512], index: 4, kind: input, shape index: {}]
  %s5 = inlined_call_operand.vmem [shape: f32[512,4], index: 5, kind: input, shape index: {}]
  %s6 = inlined_call_operand.vmem [shape: f32[96,96], index: 6, kind: input, shape index: {}]
  %s7 = inlined_call_operand.vmem [shape: f32[288,32], index: 7, kind: input, shape index: {}]
  %s8 = inlined_call_operand.vmem [shape: f32[128,17], index: 8, kind: input, shape index: {}]
  %s9 = inlined_call_operand.vmem [shape: f32[32,128], index: 9, kind: output, shape index: {}]
  %s10 = sld [smem:[#allocation0]]
  $region46: #{transformer_encoder.1} parent=0
    _
  %s12 = ssub.s32 1, %s10
  %s13 = scalar_select 0, %s12, %s10
  // Predicated region
  $region2: #{transformer_encoder.1} parent=0 // pred_check
    _
  $region3: #{transformer_encoder.1} parent=0 // pred_check_branch
    %15 = sbr.rel (0) target = $region5
  $region4: #{transformer_encoder.1} parent=0 // pred_region
    _
  $region5: #{transformer_encoder.1} parent=0 // pred_fallthru
    _
  // Predicated region
  $region6: #{transformer_encoder.1} parent=0 // pred_check
    _
  $region7: #{transformer_encoder.1} parent=0 // pred_check_branch
    %17 = sbr.rel (0) target = $region9
  $region8: #{transformer_encoder.1} parent=0 // pred_region
    _
  $region9: #{transformer_encoder.1} parent=0 // pred_fallthru
    _
  // Predicated region
  $region10: #{transformer_encoder.1} parent=0 // pred_check
    _
  $region11: #{transformer_encoder.1} parent=0 // pred_check_branch
    %19 = sbr.rel (0) target = $region13
  $region12: #{transformer_encoder.1} parent=0 // pred_region
    _
  $region13: #{transformer_encoder.1} parent=0 // pred_fallthru
    _
  // Predicated region
  $region14: #{transformer_encoder.1} parent=0 // pred_check
    _
  $region15: #{transformer_encoder.1} parent=0 // pred_check_branch
    %21 = sbr.rel (0) target = $region17
  $region16: #{transformer_encoder.1} parent=0 // pred_region
    _
  $region17: #{transformer_encoder.1} parent=0 // pred_fallthru
    _
  // Predicated region
  $region18: #{transformer_encoder.1} parent=0 // pred_check
    _
  $region19: #{transformer_encoder.1} parent=0 // pred_check_branch
    %23 = sbr.rel (0) target = $region21
  $region20: #{transformer_encoder.1} parent=0 // pred_region
    _
  $region21: #{transformer_encoder.1} parent=0 // pred_fallthru
    _
  // Predicated region
  $region22: #{transformer_encoder.1} parent=0 // pred_check
    _
  $region23: #{transformer_encoder.1} parent=0 // pred_check_branch
    %25 = sbr.rel (0) target = $region25
  $region24: #{transformer_encoder.1} parent=0 // pred_region
    _
  $region25: #{transformer_encoder.1} parent=0 // pred_fallthru
    _
  // Predicated region
  $region26: #{transformer_encoder.1} parent=0 // pred_check
    _
  $region27: #{transformer_encoder.1} parent=0 // pred_check_branch
    %27 = sbr.rel (0) target = $region29
  $region28: #{transformer_encoder.1} parent=0 // pred_region
    _
  $region29: #{transformer_encoder.1} parent=0 // pred_fallthru
    _
  // Predicated region
  $region30: #{transformer_encoder.1} parent=0 // pred_check
    _
  $region31: #{transformer_encoder.1} parent=0 // pred_check_branch
    %29 = sbr.rel (0) target = $region33
  $region32: #{transformer_encoder.1} parent=0 // pred_region
    _
  $region33: #{transformer_encoder.1} parent=0 // pred_fallthru
    _
  // Predicated region
  $region34: #{transformer_encoder.1} parent=0 // pred_check
    _
  $region35: #{transformer_encoder.1} parent=0 // pred_check_branch
    %31 = sbr.rel (0) target = $region37
  $region36: #{transformer_encoder.1} parent=0 // pred_region
    _
  $region37: #{transformer_encoder.1} parent=0 // pred_fallthru
    _
  %v32 = vld [vmem:[%s0] sm:$0xff]
  %v33 = vld [vmem:[%s0 + $0x8] sm:$0xff]
  %v34 = vld [vmem:[%s0 + $0x10] sm:$0xff]
  %v35 = vld [vmem:[%s0 + $0x18] sm:$0xff]
  %v36 = vld [vmem:[%s1] sm:$0x1]
  %v37 = vld [vmem:[%s6] sm:$0xff]
  %v38 = vld [vmem:[%s6 + $0x8] sm:$0xff]
  %v39 = vld [vmem:[%s6 + $0x10] sm:$0xff]
  %v40 = vld [vmem:[%s6 + $0x18] sm:$0xff]
  %v41 = vld [vmem:[%s6 + $0x20] sm:$0xff]
  %v42 = vld [vmem:[%s6 + $0x28] sm:$0xff]
  %v43 = vld [vmem:[%s6 + $0x30] sm:$0xff]
  %v44 = vld [vmem:[%s6 + $0x38] sm:$0xff]
  %v45 = vld [vmem:[%s6 + $0x40] sm:$0xff]
  %v46 = vld [vmem:[%s6 + $0x48] sm:$0xff]
  %v47 = vld [vmem:[%s6 + $0x50] sm:$0xff]
  %v48 = vld [vmem:[%s6 + $0x58] sm:$0xff]
  %v49 = vld [vmem:[%s7] sm:$0xff]
  %v50 = vld [vmem:[%s7 + $0x8] sm:$0xff]
  %v51 = vld [vmem:[%s7 + $0x10] sm:$0xff]
  %v52 = vld [vmem:[%s7 + $0x18] sm:$0xff]
  %v53 = vld [vmem:[%s7 + $0x20] sm:$0xff]
  %v54 = vld [vmem:[%s7 + $0x28] sm:$0xff]
  %v55 = vld [vmem:[%s7 + $0x30] sm:$0xff]
  %v56 = vld [vmem:[%s7 + $0x38] sm:$0xff]
  %v57 = vld [vmem:[%s7 + $0x40] sm:$0xff]
  %v58 = vld [vmem:[%s7 + $0x48] sm:$0xff]
  %v59 = vld [vmem:[%s7 + $0x50] sm:$0xff]
  %v60 = vld [vmem:[%s7 + $0x58] sm:$0xff]
  %v61 = vld [vmem:[%s7 + $0x60] sm:$0xff]
  %v62 = vld [vmem:[%s7 + $0x68] sm:$0xff]
  %v63 = vld [vmem:[%s7 + $0x70] sm:$0xff]
  %v64 = vld [vmem:[%s7 + $0x78] sm:$0xff]
  %v65 = vld [vmem:[%s7 + $0x80] sm:$0xff]
  %v66 = vld [vmem:[%s7 + $0x88] sm:$0xff]
  %v67 = vld [vmem:[%s7 + $0x90] sm:$0xff]
  %v68 = vld [vmem:[%s7 + $0x98] sm:$0xff]
  %v69 = vld [vmem:[%s7 + $0xa0] sm:$0xff]
  %v70 = vld [vmem:[%s7 + $0xa8] sm:$0xff]
  %v71 = vld [vmem:[%s7 + $0xb0] sm:$0xff]
  %v72 = vld [vmem:[%s7 + $0xb8] sm:$0xff]
  %v73 = vld [vmem:[%s7 + $0xc0] sm:$0xff]
  %v74 = vld [vmem:[%s7 + $0xc8] sm:$0xff]
  %v75 = vld [vmem:[%s7 + $0xd0] sm:$0xff]
  %v76 = vld [vmem:[%s7 + $0xd8] sm:$0xff]
  %v77 = vld [vmem:[%s7 + $0xe0] sm:$0xff]
  %v78 = vld [vmem:[%s7 + $0xe8] sm:$0xff]
  %v79 = vld [vmem:[%s7 + $0xf0] sm:$0xff]
  %v80 = vld [vmem:[%s7 + $0xf8] sm:$0xff]
  %v81 = vld [vmem:[%s7 + $0x100] sm:$0xff]
  %v82 = vld [vmem:[%s7 + $0x108] sm:$0xff]
  %v83 = vld [vmem:[%s7 + $0x110] sm:$0xff]
  %v84 = vld [vmem:[%s7 + $0x118] sm:$0xff]
  %v85 = vld [vmem:[%s8] sm:$0xff]
  %v86 = vld [vmem:[%s8 + $0x8] sm:$0xff]
  %v87 = vld [vmem:[%s8 + $0x10] sm:$0xff]
  %v88 = vld [vmem:[%s8 + $0x18] sm:$0xff]
  %v89 = vld [vmem:[%s8 + $0x20] sm:$0xff]
  %v90 = vld [vmem:[%s8 + $0x28] sm:$0xff]
  %v91 = vld [vmem:[%s8 + $0x30] sm:$0xff]
  %v92 = vld [vmem:[%s8 + $0x38] sm:$0xff]
  %v93 = vld [vmem:[%s8 + $0x40] sm:$0xff]
  %v94 = vld [vmem:[%s8 + $0x48] sm:$0xff]
  %v95 = vld [vmem:[%s8 + $0x50] sm:$0xff]
  %v96 = vld [vmem:[%s8 + $0x58] sm:$0xff]
  %v97 = vld [vmem:[%s8 + $0x60] sm:$0xff]
  %v98 = vld [vmem:[%s8 + $0x68] sm:$0xff]
  %v99 = vld [vmem:[%s8 + $0x70] sm:$0xff]
  %v100 = vld [vmem:[%s8 + $0x78] sm:$0xff]
  %v102 = vlaneseq
  %v103 = vshrl.u32 %v102, 7
  %v104 = vsub.s32 0, %v103
  %v105 = vrot.slane %v36, %v104
  %v107 = vmul.f32 %v32, %v105
  %v108 = vmul.f32 %v33, %v105
  %v109 = vmul.f32 %v34, %v105
  %v110 = vmul.f32 %v35, %v105
  %v111 = vadd.f32 %v107, %v108
  %v112 = vadd.f32 %v111, %v109
  %v113 = vadd.f32 %v112, %v110
  %v114 = vrot.slane %v113, 4
  %v115 = vadd.f32 %v113, %v114
  %v116 = vrot.slane %v115, 2
  %v117 = vadd.f32 %v115, %v116
  %v118 = vrot.slane %v117, 1
  %v119 = vadd.f32 %v117, %v118
  %v120 = vrcp.pop 32.0
  %v121 = vmul.f32 %v119, %v120
  %v122 = vsub.f32 %v107, %v121
  %v123 = vsub.f32 %v108, %v121
  %v124 = vsub.f32 %v109, %v121
  %v125 = vsub.f32 %v110, %v121
  %v126 = vmul.f32 %v122, %v122
  %v127 = vmul.f32 %v123, %v123
  %v128 = vmul.f32 %v124, %v124
  %v129 = vmul.f32 %v125, %v125
  %v130 = vadd.f32 %v126, %v127
  %v131 = vadd.f32 %v130, %v128
  %v132 = vadd.f32 %v131, %v129
  %v133 = vrot.slane %v132, 4
  %v134 = vadd.f32 %v132, %v133
  %v135 = vrot.slane %v134, 2
  %v136 = vadd.f32 %v134, %v135
  %v137 = vrot.slane %v136, 1
  %v138 = vadd.f32 %v136, %v137
  %v139 = vmul.f32 %v138, %v120
  %v140 = vadd.f32 %v139, 1e-05
  %v141 = vrsqrt.pop %v140
  %v142 = vmul.f32 %v122, %v141
  %v143 = vmul.f32 %v123, %v141
  %v144 = vmul.f32 %v124, %v141
  %v145 = vmul.f32 %v125, %v141
  %147 = vset.pattern.permute.xlu0 0
  %148 = vperm.xlu0 %147, %v85
  %v149 = vpop.permute.xlu0 %148
  %152 = vset.pattern.permute.xlu0 0
  %153 = vperm.xlu0 %152, %v86
  %v154 = vpop.permute.xlu0 %153
  %157 = vset.pattern.permute.xlu0 0
  %158 = vperm.xlu0 %157, %v87
  %v159 = vpop.permute.xlu0 %158
  %162 = vset.pattern.permute.xlu0 0
  %163 = vperm.xlu0 %162, %v88
  %v164 = vpop.permute.xlu0 %163
  %v166 = vmul.f32 %v142, %v149
  %v167 = vmul.f32 %v143, %v154
  %v168 = vmul.f32 %v144, %v159
  %v169 = vmul.f32 %v145, %v164
  %170 = vset.pattern.permute.xlu0 1
  %171 = vperm.xlu0 %170, %v85
  %v172 = vpop.permute.xlu0 %171
  %174 = vset.pattern.permute.xlu0 1
  %175 = vperm.xlu0 %174, %v86
  %v176 = vpop.permute.xlu0 %175
  %178 = vset.pattern.permute.xlu0 1
  %179 = vperm.xlu0 %178, %v87
  %v180 = vpop.permute.xlu0 %179
  %182 = vset.pattern.permute.xlu0 1
  %183 = vperm.xlu0 %182, %v88
  %v184 = vpop.permute.xlu0 %183
  %v186 = vadd.f32 %v166, %v172
  %v187 = vadd.f32 %v167, %v176
  %v188 = vadd.f32 %v168, %v180
  %v189 = vadd.f32 %v169, %v184
  %v190 = vmul.f32 %v186, %v105
  %v191 = vmul.f32 %v187, %v105
  %v192 = vmul.f32 %v188, %v105
  %v193 = vmul.f32 %v189, %v105
  %v194 = vld [vmem:[%s2] sm:$0xff]
  %v195 = vld [vmem:[%s2 + $0x8] sm:$0xff]
  %v196 = vld [vmem:[%s2 + $0x10] sm:$0xff]
  %v197 = vld [vmem:[%s2 + $0x18] sm:$0xff]
  %v198 = vld [vmem:[%s2 + $0x20] sm:$0xff]
  %v199 = vld [vmem:[%s2 + $0x28] sm:$0xff]
  %v200 = vld [vmem:[%s2 + $0x30] sm:$0xff]
  %v201 = vld [vmem:[%s2 + $0x38] sm:$0xff]
  %v202 = vld [vmem:[%s2 + $0x40] sm:$0xff]
  %v203 = vld [vmem:[%s2 + $0x48] sm:$0xff]
  %v204 = vld [vmem:[%s2 + $0x50] sm:$0xff]
  %v205 = vld [vmem:[%s2 + $0x58] sm:$0xff]
  %v206 = vld [vmem:[%s2 + $0x60] sm:$0xff]
  %v207 = vld [vmem:[%s2 + $0x68] sm:$0xff]
  %v208 = vld [vmem:[%s2 + $0x70] sm:$0xff]
  %v209 = vld [vmem:[%s2 + $0x78] sm:$0xff]
  %v210 = vld [vmem:[%s2 + $0x80] sm:$0xff]
  %v211 = vld [vmem:[%s2 + $0x88] sm:$0xff]
  %v212 = vld [vmem:[%s2 + $0x90] sm:$0xff]
  %v213 = vld [vmem:[%s2 + $0x98] sm:$0xff]
  %v214 = vld [vmem:[%s2 + $0xa0] sm:$0xff]
  %v215 = vld [vmem:[%s2 + $0xa8] sm:$0xff]
  %v216 = vld [vmem:[%s2 + $0xb0] sm:$0xff]
  %v217 = vld [vmem:[%s2 + $0xb8] sm:$0xff]
  %v218 = vld [vmem:[%s2 + $0xc0] sm:$0xff]
  %v219 = vld [vmem:[%s2 + $0xc8] sm:$0xff]
  %v220 = vld [vmem:[%s2 + $0xd0] sm:$0xff]
  %v221 = vld [vmem:[%s2 + $0xd8] sm:$0xff]
  %v222 = vld [vmem:[%s2 + $0xe0] sm:$0xff]
  %v223 = vld [vmem:[%s2 + $0xe8] sm:$0xff]
  %v224 = vld [vmem:[%s2 + $0xf0] sm:$0xff]
  %v225 = vld [vmem:[%s2 + $0xf8] sm:$0xff]
  %226 = vmatprep.subr.mxu0 %v225
  %227 = vmatpush1.msra.mxu0 %v224
  %228 = vmatprep.subr.mxu0 %v223
  %229 = vmatpush1.msra.mxu0 %v222
  %230 = vmatprep.subr.mxu0 %v221
  %231 = vmatpush1.msra.mxu0 %v220
  %232 = vmatprep.subr.mxu0 %v219
  %233 = vmatpush1.msra.mxu0 %v218
  %234 = vmatprep.subr.mxu0 %v217
  %235 = vmatpush1.msra.mxu0 %v216
  %236 = vmatprep.subr.mxu0 %v215
  %237 = vmatpush1.msra.mxu0 %v214
  %238 = vmatprep.subr.mxu0 %v213
  %239 = vmatpush1.msra.mxu0 %v212
  %240 = vmatprep.subr.mxu0 %v211
  %241 = vmatpush1.msra.mxu0 %v210
  %242 = vmatprep.subr.mxu0 %v209
  %243 = vmatpush1.msra.mxu0 %v208
  %244 = vmatprep.subr.mxu0 %v207
  %245 = vmatpush1.msra.mxu0 %v206
  %246 = vmatprep.subr.mxu0 %v205
  %247 = vmatpush1.msra.mxu0 %v204
  %248 = vmatprep.subr.mxu0 %v203
  %249 = vmatpush1.msra.mxu0 %v202
  %250 = vmatprep.subr.mxu0 %v201
  %251 = vmatpush1.msra.mxu0 %v200
  %252 = vmatprep.subr.mxu0 %v199
  %253 = vmatpush1.msra.mxu0 %v198
  %254 = vmatprep.subr.mxu0 %v197
  %255 = vmatpush1.msra.mxu0 %v196
  %256 = vmatprep.subr.mxu0 %v195
  %257 = vmatpush1.msra.mxu0 %v194
  %258 = vmatprep.subr.mxu0 0.0
  %259 = vmatpush2.msra.mxu0 0.0
  %260 = vmatprep.subr.mxu0 0.0
  %261 = vmatpush2.msra.mxu0 0.0
  %262 = vmatprep.subr.mxu0 0.0
  %263 = vmatpush2.msra.mxu0 0.0
  %264 = vmatprep.subr.mxu0 0.0
  %265 = vmatpush2.msra.mxu0 0.0
  %266 = vmatprep.subr.mxu0 0.0
  %267 = vmatpush2.msra.mxu0 0.0
  %268 = vmatprep.subr.mxu0 0.0
  %269 = vmatpush2.msra.mxu0 0.0
  %270 = vmatprep.subr.mxu0 0.0
  %271 = vmatpush2.msra.mxu0 0.0
  %272 = vmatprep.subr.mxu0 0.0
  %273 = vmatpush2.msra.mxu0 0.0
  %274 = vmatprep.subr.mxu0 0.0
  %275 = vmatpush2.msra.mxu0 0.0
  %276 = vmatprep.subr.mxu0 0.0
  %277 = vmatpush2.msra.mxu0 0.0
  %278 = vmatprep.subr.mxu0 0.0
  %279 = vmatpush2.msra.mxu0 0.0
  %280 = vmatprep.subr.mxu0 0.0
  %281 = vmatpush2.msra.mxu0 0.0
  %282 = vmatprep.subr.mxu0 0.0
  %283 = vmatpush2.msra.mxu0 0.0
  %284 = vmatprep.subr.mxu0 0.0
  %285 = vmatpush2.msra.mxu0 0.0
  %286 = vmatprep.subr.mxu0 0.0
  %287 = vmatpush2.msra.mxu0 0.0
  %288 = vmatprep.subr.mxu0 0.0
  %289 = vmatpush2.msra.mxu0 0.0
  %290 = vmatprep.mubr.f32.mxu0 0.0
  %291 = vmatmul.mubr.f32.gmra.mxu0 %v190
  %v292 = vpop.f32.mrf.mxu0
  %v293 = vadd.f32 0.0, %v292
  %v294 = vpop.f32.mrf.mxu0
  %v295 = vadd.f32 0.0, %v294
  %296 = vmatprep.mubr.f32.mxu0 0.0
  %297 = vmatmul.mubr.f32.gmra.mxu0 %v191
  %v298 = vpop.f32.mrf.mxu0
  %v299 = vadd.f32 0.0, %v298
  %v300 = vpop.f32.mrf.mxu0
  %v301 = vadd.f32 0.0, %v300
  %302 = vmatprep.mubr.f32.mxu0 0.0
  %303 = vmatmul.mubr.f32.gmra.mxu0 %v192
  %v304 = vpop.f32.mrf.mxu0
  %v305 = vadd.f32 0.0, %v304
  %v306 = vpop.f32.mrf.mxu0
  %v307 = vadd.f32 0.0, %v306
  %308 = vmatprep.mubr.f32.mxu0 0.0
  %309 = vmatmul.mubr.f32.gmra.mxu0 %v193
  %v310 = vpop.f32.mrf.mxu0
  %v311 = vadd.f32 0.0, %v310
  %v312 = vpop.f32.mrf.mxu0
  %v313 = vadd.f32 0.0, %v312
  %314 = vdwg.mxu0
  %315 = vset.pattern.permute.xlu0 2
  %316 = vperm.xlu0 %315, %v85
  %v317 = vpop.permute.xlu0 %316
  %319 = vset.pattern.permute.xlu0 2
  %320 = vperm.xlu0 %319, %v86
  %v321 = vpop.permute.xlu0 %320
  %323 = vset.pattern.permute.xlu0 2
  %324 = vperm.xlu0 %323, %v87
  %v325 = vpop.permute.xlu0 %324
  %327 = vset.pattern.permute.xlu0 2
  %328 = vperm.xlu0 %327, %v88
  %v329 = vpop.permute.xlu0 %328
  %v331 = vmul.f32 %v317, %v293
  %v332 = vmul.f32 %v321, %v299
  %v333 = vmul.f32 %v325, %v305
  %v334 = vmul.f32 %v329, %v311
  %335 = vset.pattern.permute.xlu0 3
  %336 = vperm.xlu0 %335, %v85
  %v337 = vpop.permute.xlu0 %336
  %339 = vset.pattern.permute.xlu0 3
  %340 = vperm.xlu0 %339, %v86
  %v341 = vpop.permute.xlu0 %340
  %343 = vset.pattern.permute.xlu0 3
  %344 = vperm.xlu0 %343, %v87
  %v345 = vpop.permute.xlu0 %344
  %347 = vset.pattern.permute.xlu0 3
  %348 = vperm.xlu0 %347, %v88
  %v349 = vpop.permute.xlu0 %348
  %v351 = vmul.f32 %v337, %v190
  %v352 = vmul.f32 %v341, %v191
  %v353 = vmul.f32 %v345, %v192
  %v354 = vmul.f32 %v349, %v193
  %v355 = vadd.f32 %v331, %v351
  %v356 = vadd.f32 %v332, %v352
  %v357 = vadd.f32 %v333, %v353
  %v358 = vadd.f32 %v334, %v354
  %359 = vset.pattern.permute.xlu0 4
  %360 = vperm.xlu0 %359, %v85
  %v361 = vpop.permute.xlu0 %360
  %363 = vset.pattern.permute.xlu0 4
  %364 = vperm.xlu0 %363, %v86
  %v365 = vpop.permute.xlu0 %364
  %367 = vset.pattern.permute.xlu0 4
  %368 = vperm.xlu0 %367, %v87
  %v369 = vpop.permute.xlu0 %368
  %371 = vset.pattern.permute.xlu0 4
  %372 = vperm.xlu0 %371, %v88
  %v373 = vpop.permute.xlu0 %372
  %v375 = vmul.f32 %v361, %v295
  %v376 = vmul.f32 %v365, %v301
  %v377 = vmul.f32 %v369, %v307
  %v378 = vmul.f32 %v373, %v313
  %v379 = vadd.f32 %v355, %v375
  %v380 = vadd.f32 %v356, %v376
  %v381 = vadd.f32 %v357, %v377
  %v382 = vadd.f32 %v358, %v378
  %v383 = vadd.f32 %v379, %v380
  %v384 = vadd.f32 %v383, %v381
  %v385 = vadd.f32 %v384, %v382
  %v386 = vrot.slane %v385, 4
  %v387 = vadd.f32 %v385, %v386
  %v388 = vrot.slane %v387, 2
  %v389 = vadd.f32 %v387, %v388
  %v390 = vrot.slane %v389, 1
  %v391 = vadd.f32 %v389, %v390
  %v392 = vmul.f32 %v391, %v120
  %v393 = vsub.f32 %v379, %v392
  %v394 = vsub.f32 %v380, %v392
  %v395 = vsub.f32 %v381, %v392
  %v396 = vsub.f32 %v382, %v392
  %v397 = vmul.f32 %v393, %v393
  %v398 = vmul.f32 %v394, %v394
  %v399 = vmul.f32 %v395, %v395
  %v400 = vmul.f32 %v396, %v396
  %v401 = vadd.f32 %v397, %v398
  %v402 = vadd.f32 %v401, %v399
  %v403 = vadd.f32 %v402, %v400
  %v404 = vrot.slane %v403, 4
  %v405 = vadd.f32 %v403, %v404
  %v406 = vrot.slane %v405, 2
  %v407 = vadd.f32 %v405, %v406
  %v408 = vrot.slane %v407, 1
  %v409 = vadd.f32 %v407, %v408
  %v410 = vmul.f32 %v409, %v120
  %v411 = vadd.f32 %v410, 1e-05
  %v412 = vrsqrt.pop %v411
  %v413 = vmul.f32 %v393, %v412
  %v414 = vmul.f32 %v394, %v412
  %v415 = vmul.f32 %v395, %v412
  %v416 = vmul.f32 %v396, %v412
  %417 = vst [vmem:[#allocation2] sm:$0xff] %v413
  %418 = vst [vmem:[#allocation2 + $0x8] sm:$0xff] %v414
  %419 = vst [vmem:[#allocation2 + $0x10] sm:$0xff] %v415
  %420 = vst [vmem:[#allocation2 + $0x18] sm:$0xff] %v416
  %421 = vset.pattern.permute.xlu0 5
  %422 = vperm.xlu0 %421, %v85
  %v423 = vpop.permute.xlu0 %422
  %425 = vset.pattern.permute.xlu0 5
  %426 = vperm.xlu0 %425, %v86
  %v427 = vpop.permute.xlu0 %426
  %429 = vset.pattern.permute.xlu0 5
  %430 = vperm.xlu0 %429, %v87
  %v431 = vpop.permute.xlu0 %430
  %433 = vset.pattern.permute.xlu0 5
  %434 = vperm.xlu0 %433, %v88
  %v435 = vpop.permute.xlu0 %434
  %v437 = vmul.f32 %v423, %v293
  %v438 = vmul.f32 %v427, %v299
  %v439 = vmul.f32 %v431, %v305
  %v440 = vmul.f32 %v435, %v311
  %441 = vset.pattern.permute.xlu0 6
  %442 = vperm.xlu0 %441, %v85
  %v443 = vpop.permute.xlu0 %442
  %445 = vset.pattern.permute.xlu0 6
  %446 = vperm.xlu0 %445, %v86
  %v447 = vpop.permute.xlu0 %446
  %449 = vset.pattern.permute.xlu0 6
  %450 = vperm.xlu0 %449, %v87
  %v451 = vpop.permute.xlu0 %450
  %453 = vset.pattern.permute.xlu0 6
  %454 = vperm.xlu0 %453, %v88
  %v455 = vpop.permute.xlu0 %454
  %v457 = vmul.f32 %v443, %v190
  %v458 = vmul.f32 %v447, %v191
  %v459 = vmul.f32 %v451, %v192
  %v460 = vmul.f32 %v455, %v193
  %v461 = vadd.f32 %v437, %v457
  %v462 = vadd.f32 %v438, %v458
  %v463 = vadd.f32 %v439, %v459
  %v464 = vadd.f32 %v440, %v460
  %465 = vset.pattern.permute.xlu0 7
  %466 = vperm.xlu0 %465, %v85
  %v467 = vpop.permute.xlu0 %466
  %469 = vset.pattern.permute.xlu0 7
  %470 = vperm.xlu0 %469, %v86
  %v471 = vpop.permute.xlu0 %470
  %473 = vset.pattern.permute.xlu0 7
  %474 = vperm.xlu0 %473, %v87
  %v475 = vpop.permute.xlu0 %474
  %477 = vset.pattern.permute.xlu0 7
  %478 = vperm.xlu0 %477, %v88
  %v479 = vpop.permute.xlu0 %478
  %v481 = vmul.f32 %v467, %v295
  %v482 = vmul.f32 %v471, %v301
  %v483 = vmul.f32 %v475, %v307
  %v484 = vmul.f32 %v479, %v313
  %v485 = vadd.f32 %v461, %v481
  %v486 = vadd.f32 %v462, %v482
  %v487 = vadd.f32 %v463, %v483
  %v488 = vadd.f32 %v464, %v484
  %v489 = vadd.f32 %v485, %v486
  %v490 = vadd.f32 %v489, %v487
  %v491 = vadd.f32 %v490, %v488
  %v492 = vrot.slane %v491, 4
  %v493 = vadd.f32 %v491, %v492
  %v494 = vrot.slane %v493, 2
  %v495 = vadd.f32 %v493, %v494
  %v496 = vrot.slane %v495, 1
  %v497 = vadd.f32 %v495, %v496
  %v498 = vmul.f32 %v497, %v120
  %v499 = vsub.f32 %v485, %v498
  %v500 = vsub.f32 %v486, %v498
  %v501 = vsub.f32 %v487, %v498
  %v502 = vsub.f32 %v488, %v498
  %v503 = vmul.f32 %v499, %v499
  %v504 = vmul.f32 %v500, %v500
  %v505 = vmul.f32 %v501, %v501
  %v506 = vmul.f32 %v502, %v502
  %v507 = vadd.f32 %v503, %v504
  %v508 = vadd.f32 %v507, %v505
  %v509 = vadd.f32 %v508, %v506
  %v510 = vrot.slane %v509, 4
  %v511 = vadd.f32 %v509, %v510
  %v512 = vrot.slane %v511, 2
  %v513 = vadd.f32 %v511, %v512
  %v514 = vrot.slane %v513, 1
  %v515 = vadd.f32 %v513, %v514
  %v516 = vmul.f32 %v515, %v120
  %v517 = vadd.f32 %v516, 1e-05
  %v518 = vrsqrt.pop %v517
  %v519 = vmul.f32 %v499, %v518
  %v520 = vmul.f32 %v500, %v518
  %v521 = vmul.f32 %v501, %v518
  %v522 = vmul.f32 %v502, %v518
  %523 = vst [vmem:[#allocation2 + $0x20] sm:$0xff] %v519
  %524 = vst [vmem:[#allocation2 + $0x28] sm:$0xff] %v520
  %525 = vst [vmem:[#allocation2 + $0x30] sm:$0xff] %v521
  %526 = vst [vmem:[#allocation2 + $0x38] sm:$0xff] %v522
  %527 = vset.pattern.permute.xlu0 8
  %528 = vperm.xlu0 %527, %v85
  %v529 = vpop.permute.xlu0 %528
  %531 = vset.pattern.permute.xlu0 8
  %532 = vperm.xlu0 %531, %v86
  %v533 = vpop.permute.xlu0 %532
  %535 = vset.pattern.permute.xlu0 8
  %536 = vperm.xlu0 %535, %v87
  %v537 = vpop.permute.xlu0 %536
  %539 = vset.pattern.permute.xlu0 8
  %540 = vperm.xlu0 %539, %v88
  %v541 = vpop.permute.xlu0 %540
  %v543 = vmul.f32 %v529, %v293
  %v544 = vmul.f32 %v533, %v299
  %v545 = vmul.f32 %v537, %v305
  %v546 = vmul.f32 %v541, %v311
  %547 = vset.pattern.permute.xlu0 9
  %548 = vperm.xlu0 %547, %v85
  %v549 = vpop.permute.xlu0 %548
  %551 = vset.pattern.permute.xlu0 9
  %552 = vperm.xlu0 %551, %v86
  %v553 = vpop.permute.xlu0 %552
  %555 = vset.pattern.permute.xlu0 9
  %556 = vperm.xlu0 %555, %v87
  %v557 = vpop.permute.xlu0 %556
  %559 = vset.pattern.permute.xlu0 9
  %560 = vperm.xlu0 %559, %v88
  %v561 = vpop.permute.xlu0 %560
  %v563 = vmul.f32 %v549, %v190
  %v564 = vmul.f32 %v553, %v191
  %v565 = vmul.f32 %v557, %v192
  %v566 = vmul.f32 %v561, %v193
  %v567 = vadd.f32 %v543, %v563
  %v568 = vadd.f32 %v544, %v564
  %v569 = vadd.f32 %v545, %v565
  %v570 = vadd.f32 %v546, %v566
  %571 = vset.pattern.permute.xlu0 10
  %572 = vperm.xlu0 %571, %v85
  %v573 = vpop.permute.xlu0 %572
  %575 = vset.pattern.permute.xlu0 10
  %576 = vperm.xlu0 %575, %v86
  %v577 = vpop.permute.xlu0 %576
  %579 = vset.pattern.permute.xlu0 10
  %580 = vperm.xlu0 %579, %v87
  %v581 = vpop.permute.xlu0 %580
  %583 = vset.pattern.permute.xlu0 10
  %584 = vperm.xlu0 %583, %v88
  %v585 = vpop.permute.xlu0 %584
  %v587 = vmul.f32 %v573, %v295
  %v588 = vmul.f32 %v577, %v301
  %v589 = vmul.f32 %v581, %v307
  %v590 = vmul.f32 %v585, %v313
  %v591 = vadd.f32 %v567, %v587
  %v592 = vadd.f32 %v568, %v588
  %v593 = vadd.f32 %v569, %v589
  %v594 = vadd.f32 %v570, %v590
  %v595 = vadd.f32 %v591, %v592
  %v596 = vadd.f32 %v595, %v593
  %v597 = vadd.f32 %v596, %v594
  %v598 = vrot.slane %v597, 4
  %v599 = vadd.f32 %v597, %v598
  %v600 = vrot.slane %v599, 2
  %v601 = vadd.f32 %v599, %v600
  %v602 = vrot.slane %v601, 1
  %v603 = vadd.f32 %v601, %v602
  %v604 = vmul.f32 %v603, %v120
  %v605 = vsub.f32 %v591, %v604
  %v606 = vsub.f32 %v592, %v604
  %v607 = vsub.f32 %v593, %v604
  %v608 = vsub.f32 %v594, %v604
  %v609 = vmul.f32 %v605, %v605
  %v610 = vmul.f32 %v606, %v606
  %v611 = vmul.f32 %v607, %v607
  %v612 = vmul.f32 %v608, %v608
  %v613 = vadd.f32 %v609, %v610
  %v614 = vadd.f32 %v613, %v611
  %v615 = vadd.f32 %v614, %v612
  %v616 = vrot.slane %v615, 4
  %v617 = vadd.f32 %v615, %v616
  %v618 = vrot.slane %v617, 2
  %v619 = vadd.f32 %v617, %v618
  %v620 = vrot.slane %v619, 1
  %v621 = vadd.f32 %v619, %v620
  %v622 = vmul.f32 %v621, %v120
  %v623 = vadd.f32 %v622, 1e-05
  %v624 = vrsqrt.pop %v623
  %v625 = vmul.f32 %v605, %v624
  %v626 = vmul.f32 %v606, %v624
  %v627 = vmul.f32 %v607, %v624
  %v628 = vmul.f32 %v608, %v624
  %629 = vst [vmem:[#allocation2 + $0x40] sm:$0xff] %v625
  %630 = vst [vmem:[#allocation2 + $0x48] sm:$0xff] %v626
  %631 = vst [vmem:[#allocation2 + $0x50] sm:$0xff] %v627
  %632 = vst [vmem:[#allocation2 + $0x58] sm:$0xff] %v628
  %v633 = vld [vmem:[#allocation2] sm:$0xff]
  %v634 = vld [vmem:[#allocation2 + $0x8] sm:$0xff]
  %v635 = vld [vmem:[#allocation2 + $0x10] sm:$0xff]
  %v636 = vld [vmem:[#allocation2 + $0x18] sm:$0xff]
  %v637 = vld [vmem:[#allocation2 + $0x20] sm:$0xff]
  %v638 = vld [vmem:[#allocation2 + $0x28] sm:$0xff]
  %v639 = vld [vmem:[#allocation2 + $0x30] sm:$0xff]
  %v640 = vld [vmem:[#allocation2 + $0x38] sm:$0xff]
  %v641 = vld [vmem:[#allocation2 + $0x40] sm:$0xff]
  %v642 = vld [vmem:[#allocation2 + $0x48] sm:$0xff]
  %v643 = vld [vmem:[#allocation2 + $0x50] sm:$0xff]
  %v644 = vld [vmem:[#allocation2 + $0x58] sm:$0xff]
  %645 = vset.pattern.permute.xlu0 11
  %646 = vperm.xlu0 %645, %v85
  %v647 = vpop.permute.xlu0 %646
  %649 = vset.pattern.permute.xlu0 11
  %650 = vperm.xlu0 %649, %v86
  %v651 = vpop.permute.xlu0 %650
  %653 = vset.pattern.permute.xlu0 11
  %654 = vperm.xlu0 %653, %v87
  %v655 = vpop.permute.xlu0 %654
  %657 = vset.pattern.permute.xlu0 11
  %658 = vperm.xlu0 %657, %v88
  %v659 = vpop.permute.xlu0 %658
  %662 = vset.pattern.permute.xlu0 11
  %663 = vperm.xlu0 %662, %v89
  %v664 = vpop.permute.xlu0 %663
  %667 = vset.pattern.permute.xlu0 11
  %668 = vperm.xlu0 %667, %v90
  %v669 = vpop.permute.xlu0 %668
  %672 = vset.pattern.permute.xlu0 11
  %673 = vperm.xlu0 %672, %v91
  %v674 = vpop.permute.xlu0 %673
  %677 = vset.pattern.permute.xlu0 11
  %678 = vperm.xlu0 %677, %v92
  %v679 = vpop.permute.xlu0 %678
  %682 = vset.pattern.permute.xlu0 11
  %683 = vperm.xlu0 %682, %v93
  %v684 = vpop.permute.xlu0 %683
  %687 = vset.pattern.permute.xlu0 11
  %688 = vperm.xlu0 %687, %v94
  %v689 = vpop.permute.xlu0 %688
  %692 = vset.pattern.permute.xlu0 11
  %693 = vperm.xlu0 %692, %v95
  %v694 = vpop.permute.xlu0 %693
  %697 = vset.pattern.permute.xlu0 11
  %698 = vperm.xlu0 %697, %v96
  %v699 = vpop.permute.xlu0 %698
  %vm701 = vcmask 785408
  %v703 = vsel %vm701, %v37, 0
  %v706 = vsel %vm701, %v38, 0
  %v709 = vsel %vm701, %v39, 0
  %v712 = vsel %vm701, %v40, 0
  %v715 = vsel %vm701, %v41, 0
  %v718 = vsel %vm701, %v42, 0
  %v721 = vsel %vm701, %v43, 0
  %v724 = vsel %vm701, %v44, 0
  %v727 = vsel %vm701, %v45, 0
  %v730 = vsel %vm701, %v46, 0
  %v733 = vsel %vm701, %v47, 0
  %v736 = vsel %vm701, %v48, 0
  %738 = vmatprep.subr.mxu0 0.0
  %739 = vmatpush1.msra.mxu0 0.0
  %740 = vmatprep.subr.mxu0 0.0
  %741 = vmatpush1.msra.mxu0 0.0
  %742 = vmatprep.subr.mxu0 0.0
  %743 = vmatpush1.msra.mxu0 0.0
  %744 = vmatprep.subr.mxu0 0.0
  %745 = vmatpush1.msra.mxu0 0.0
  %746 = vmatprep.subr.mxu0 0.0
  %747 = vmatpush1.msra.mxu0 %v644
  %748 = vmatprep.subr.mxu0 0.0
  %749 = vmatpush1.msra.mxu0 %v643
  %750 = vmatprep.subr.mxu0 0.0
  %751 = vmatpush1.msra.mxu0 %v642
  %752 = vmatprep.subr.mxu0 0.0
  %753 = vmatpush1.msra.mxu0 %v641
  %754 = vmatprep.subr.mxu0 0.0
  %755 = vmatpush1.msra.mxu0 %v640
  %756 = vmatprep.subr.mxu0 0.0
  %757 = vmatpush1.msra.mxu0 %v639
  %758 = vmatprep.subr.mxu0 0.0
  %759 = vmatpush1.msra.mxu0 %v638
  %760 = vmatprep.subr.mxu0 0.0
  %761 = vmatpush1.msra.mxu0 %v637
  %762 = vmatprep.subr.mxu0 0.0
  %763 = vmatpush1.msra.mxu0 %v636
  %764 = vmatprep.subr.mxu0 0.0
  %765 = vmatpush1.msra.mxu0 %v635
  %766 = vmatprep.subr.mxu0 0.0
  %767 = vmatpush1.msra.mxu0 %v634
  %768 = vmatprep.subr.mxu0 0.0
  %769 = vmatpush1.msra.mxu0 %v633
  %770 = vmatprep.subr.mxu0 0.0
  %771 = vmatpush2.msra.mxu0 0.0
  %772 = vmatprep.subr.mxu0 0.0
  %773 = vmatpush2.msra.mxu0 0.0
  %774 = vmatprep.subr.mxu0 0.0
  %775 = vmatpush2.msra.mxu0 0.0
  %776 = vmatprep.subr.mxu0 0.0
  %777 = vmatpush2.msra.mxu0 0.0
  %778 = vmatprep.subr.mxu0 0.0
  %779 = vmatpush2.msra.mxu0 0.0
  %780 = vmatprep.subr.mxu0 0.0
  %781 = vmatpush2.msra.mxu0 0.0
  %782 = vmatprep.subr.mxu0 0.0
  %783 = vmatpush2.msra.mxu0 0.0
  %784 = vmatprep.subr.mxu0 0.0
  %785 = vmatpush2.msra.mxu0 0.0
  %786 = vmatprep.subr.mxu0 0.0
  %787 = vmatpush2.msra.mxu0 0.0
  %788 = vmatprep.subr.mxu0 0.0
  %789 = vmatpush2.msra.mxu0 0.0
  %790 = vmatprep.subr.mxu0 0.0
  %791 = vmatpush2.msra.mxu0 0.0
  %792 = vmatprep.subr.mxu0 0.0
  %793 = vmatpush2.msra.mxu0 0.0
  %794 = vmatprep.subr.mxu0 0.0
  %795 = vmatpush2.msra.mxu0 0.0
  %796 = vmatprep.subr.mxu0 0.0
  %797 = vmatpush2.msra.mxu0 0.0
  %798 = vmatprep.subr.mxu0 0.0
  %799 = vmatpush2.msra.mxu0 0.0
  %800 = vmatprep.subr.mxu0 0.0
  %801 = vmatpush2.msra.mxu0 0.0
  %802 = vmatprep.mubr.f32.mxu0 0.0
  %803 = vmatmul.mubr.f32.gmra.mxu0 %v703
  %v804 = vpop.f32.mrf.mxu0
  %v805 = vadd.f32 %v647, %v804
  %v806 = vpop.f32.mrf.mxu0
  %807 = vmatprep.mubr.f32.mxu0 0.0
  %808 = vmatmul.mubr.f32.gmra.mxu0 %v706
  %v809 = vpop.f32.mrf.mxu0
  %v810 = vadd.f32 %v651, %v809
  %v811 = vpop.f32.mrf.mxu0
  %812 = vmatprep.mubr.f32.mxu0 0.0
  %813 = vmatmul.mubr.f32.gmra.mxu0 %v709
  %v814 = vpop.f32.mrf.mxu0
  %v815 = vadd.f32 %v655, %v814
  %v816 = vpop.f32.mrf.mxu0
  %817 = vmatprep.mubr.f32.mxu0 0.0
  %818 = vmatmul.mubr.f32.gmra.mxu0 %v712
  %v819 = vpop.f32.mrf.mxu0
  %v820 = vadd.f32 %v659, %v819
  %v821 = vpop.f32.mrf.mxu0
  %822 = vmatprep.mubr.f32.mxu0 0.0
  %823 = vmatmul.mubr.f32.gmra.mxu0 %v715
  %v824 = vpop.f32.mrf.mxu0
  %v825 = vadd.f32 %v664, %v824
  %v826 = vpop.f32.mrf.mxu0
  %827 = vmatprep.mubr.f32.mxu0 0.0
  %828 = vmatmul.mubr.f32.gmra.mxu0 %v718
  %v829 = vpop.f32.mrf.mxu0
  %v830 = vadd.f32 %v669, %v829
  %v831 = vpop.f32.mrf.mxu0
  %832 = vmatprep.mubr.f32.mxu0 0.0
  %833 = vmatmul.mubr.f32.gmra.mxu0 %v721
  %v834 = vpop.f32.mrf.mxu0
  %v835 = vadd.f32 %v674, %v834
  %v836 = vpop.f32.mrf.mxu0
  %837 = vmatprep.mubr.f32.mxu0 0.0
  %838 = vmatmul.mubr.f32.gmra.mxu0 %v724
  %v839 = vpop.f32.mrf.mxu0
  %v840 = vadd.f32 %v679, %v839
  %v841 = vpop.f32.mrf.mxu0
  %842 = vmatprep.mubr.f32.mxu0 0.0
  %843 = vmatmul.mubr.f32.gmra.mxu0 %v727
  %v844 = vpop.f32.mrf.mxu0
  %v845 = vadd.f32 %v684, %v844
  %v846 = vpop.f32.mrf.mxu0
  %847 = vmatprep.mubr.f32.mxu0 0.0
  %848 = vmatmul.mubr.f32.gmra.mxu0 %v730
  %v849 = vpop.f32.mrf.mxu0
  %v850 = vadd.f32 %v689, %v849
  %v851 = vpop.f32.mrf.mxu0
  %852 = vmatprep.mubr.f32.mxu0 0.0
  %853 = vmatmul.mubr.f32.gmra.mxu0 %v733
  %v854 = vpop.f32.mrf.mxu0
  %v855 = vadd.f32 %v694, %v854
  %v856 = vpop.f32.mrf.mxu0
  %857 = vmatprep.mubr.f32.mxu0 0.0
  %858 = vmatmul.mubr.f32.gmra.mxu0 %v736
  %v859 = vpop.f32.mrf.mxu0
  %v860 = vadd.f32 %v699, %v859
  %v861 = vpop.f32.mrf.mxu0
  %862 = vdwg.mxu0
  %v863 = vld [vmem:[%s4] sm:$0xff]
  %v864 = vld [vmem:[%s4 + $0x8] sm:$0xff]
  %v865 = vld [vmem:[%s4 + $0x10] sm:$0xff]
  %v866 = vld [vmem:[%s4 + $0x18] sm:$0xff]
  %v867 = vld [vmem:[%s4 + $0x20] sm:$0xff]
  %v868 = vld [vmem:[%s4 + $0x28] sm:$0xff]
  %v869 = vld [vmem:[%s4 + $0x30] sm:$0xff]
  %v870 = vld [vmem:[%s4 + $0x38] sm:$0xff]
  %v871 = vld [vmem:[%s4 + $0x40] sm:$0xff]
  %v872 = vld [vmem:[%s4 + $0x48] sm:$0xff]
  %v873 = vld [vmem:[%s4 + $0x50] sm:$0xff]
  %v874 = vld [vmem:[%s4 + $0x58] sm:$0xff]
  %v875 = vld [vmem:[%s4 + $0x60] sm:$0xff]
  %v876 = vld [vmem:[%s4 + $0x68] sm:$0xff]
  %v877 = vld [vmem:[%s4 + $0x70] sm:$0xff]
  %v878 = vld [vmem:[%s4 + $0x78] sm:$0xff]
  %v879 = vmul.f32 %v825, %v863
  %v880 = vmul.f32 %v825, %v864
  %v881 = vmul.f32 %v825, %v865
  %v882 = vmul.f32 %v825, %v866
  %v883 = vmul.f32 %v830, %v867
  %v884 = vmul.f32 %v830, %v868
  %v885 = vmul.f32 %v830, %v869
  %v886 = vmul.f32 %v830, %v870
  %v887 = vmul.f32 %v835, %v871
  %v888 = vmul.f32 %v835, %v872
  %v889 = vmul.f32 %v835, %v873
  %v890 = vmul.f32 %v835, %v874
  %v891 = vmul.f32 %v840, %v875
  %v892 = vmul.f32 %v840, %v876
  %v893 = vmul.f32 %v840, %v877
  %v894 = vmul.f32 %v840, %v878
  %v895 = vmul.f32 %v845, %v863
  %v896 = vmul.f32 %v845, %v864
  %v897 = vmul.f32 %v845, %v865
  %v898 = vmul.f32 %v845, %v866
  %v899 = vmul.f32 %v850, %v867
  %v900 = vmul.f32 %v850, %v868
  %v901 = vmul.f32 %v850, %v869
  %v902 = vmul.f32 %v850, %v870
  %v903 = vmul.f32 %v855, %v871
  %v904 = vmul.f32 %v855, %v872
  %v905 = vmul.f32 %v855, %v873
  %v906 = vmul.f32 %v855, %v874
  %v907 = vmul.f32 %v860, %v875
  %v908 = vmul.f32 %v860, %v876
  %v909 = vmul.f32 %v860, %v877
  %v910 = vmul.f32 %v860, %v878
  %v911 = vld [vmem:[%s3] sm:$0xff]
  %v912 = vld [vmem:[%s3 + $0x8] sm:$0xff]
  %v913 = vld [vmem:[%s3 + $0x10] sm:$0xff]
  %v914 = vld [vmem:[%s3 + $0x18] sm:$0xff]
  %v915 = vld [vmem:[%s3 + $0x20] sm:$0xff]
  %v916 = vld [vmem:[%s3 + $0x28] sm:$0xff]
  %v917 = vld [vmem:[%s3 + $0x30] sm:$0xff]
  %v918 = vld [vmem:[%s3 + $0x38] sm:$0xff]
  %v919 = vld [vmem:[%s3 + $0x40] sm:$0xff]
  %v920 = vld [vmem:[%s3 + $0x48] sm:$0xff]
  %v921 = vld [vmem:[%s3 + $0x50] sm:$0xff]
  %v922 = vld [vmem:[%s3 + $0x58] sm:$0xff]
  %v923 = vld [vmem:[%s3 + $0x60] sm:$0xff]
  %v924 = vld [vmem:[%s3 + $0x68] sm:$0xff]
  %v925 = vld [vmem:[%s3 + $0x70] sm:$0xff]
  %v926 = vld [vmem:[%s3 + $0x78] sm:$0xff]
  %v927 = vld [vmem:[%s3 + $0x80] sm:$0xff]
  %v928 = vld [vmem:[%s3 + $0x88] sm:$0xff]
  %v929 = vld [vmem:[%s3 + $0x90] sm:$0xff]
  %v930 = vld [vmem:[%s3 + $0x98] sm:$0xff]
  %v931 = vld [vmem:[%s3 + $0xa0] sm:$0xff]
  %v932 = vld [vmem:[%s3 + $0xa8] sm:$0xff]
  %v933 = vld [vmem:[%s3 + $0xb0] sm:$0xff]
  %v934 = vld [vmem:[%s3 + $0xb8] sm:$0xff]
  %v935 = vld [vmem:[%s3 + $0xc0] sm:$0xff]
  %v936 = vld [vmem:[%s3 + $0xc8] sm:$0xff]
  %v937 = vld [vmem:[%s3 + $0xd0] sm:$0xff]
  %v938 = vld [vmem:[%s3 + $0xd8] sm:$0xff]
  %v939 = vld [vmem:[%s3 + $0xe0] sm:$0xff]
  %v940 = vld [vmem:[%s3 + $0xe8] sm:$0xff]
  %v941 = vld [vmem:[%s3 + $0xf0] sm:$0xff]
  %v942 = vld [vmem:[%s3 + $0xf8] sm:$0xff]
  %v943 = vld [vmem:[%s3 + $0x100] sm:$0xff]
  %v944 = vld [vmem:[%s3 + $0x108] sm:$0xff]
  %v945 = vld [vmem:[%s3 + $0x110] sm:$0xff]
  %v946 = vld [vmem:[%s3 + $0x118] sm:$0xff]
  %v947 = vld [vmem:[%s3 + $0x120] sm:$0xff]
  %v948 = vld [vmem:[%s3 + $0x128] sm:$0xff]
  %v949 = vld [vmem:[%s3 + $0x130] sm:$0xff]
  %v950 = vld [vmem:[%s3 + $0x138] sm:$0xff]
  %v951 = vld [vmem:[%s3 + $0x140] sm:$0xff]
  %v952 = vld [vmem:[%s3 + $0x148] sm:$0xff]
  %v953 = vld [vmem:[%s3 + $0x150] sm:$0xff]
  %v954 = vld [vmem:[%s3 + $0x158] sm:$0xff]
  %v955 = vld [vmem:[%s3 + $0x160] sm:$0xff]
  %v956 = vld [vmem:[%s3 + $0x168] sm:$0xff]
  %v957 = vld [vmem:[%s3 + $0x170] sm:$0xff]
  %v958 = vld [vmem:[%s3 + $0x178] sm:$0xff]
  %v959 = vld [vmem:[%s3 + $0x180] sm:$0xff]
  %v960 = vld [vmem:[%s3 + $0x188] sm:$0xff]
  %v961 = vld [vmem:[%s3 + $0x190] sm:$0xff]
  %v962 = vld [vmem:[%s3 + $0x198] sm:$0xff]
  %v963 = vld [vmem:[%s3 + $0x1a0] sm:$0xff]
  %v964 = vld [vmem:[%s3 + $0x1a8] sm:$0xff]
  %v965 = vld [vmem:[%s3 + $0x1b0] sm:$0xff]
  %v966 = vld [vmem:[%s3 + $0x1b8] sm:$0xff]
  %v967 = vld [vmem:[%s3 + $0x1c0] sm:$0xff]
  %v968 = vld [vmem:[%s3 + $0x1c8] sm:$0xff]
  %v969 = vld [vmem:[%s3 + $0x1d0] sm:$0xff]
  %v970 = vld [vmem:[%s3 + $0x1d8] sm:$0xff]
  %v971 = vld [vmem:[%s3 + $0x1e0] sm:$0xff]
  %v972 = vld [vmem:[%s3 + $0x1e8] sm:$0xff]
  %v973 = vld [vmem:[%s3 + $0x1f0] sm:$0xff]
  %v974 = vld [vmem:[%s3 + $0x1f8] sm:$0xff]
  %975 = vxpose.xlu0.b32.start [1/16] %v805, 128
  %976 = vxpose.xlu0.b32.cont [2/16] %v810, 128
  %977 = vxpose.xlu0.b32.cont [3/16] %v815, 128
  %978 = vxpose.xlu0.b32.cont [4/16] %v820, 128
  %979 = vxpose.xlu0.b32.cont [5/16] 0.0, 128
  %980 = vxpose.xlu0.b32.cont [6/16] 0.0, 128
  %981 = vxpose.xlu0.b32.cont [7/16] 0.0, 128
  %982 = vxpose.xlu0.b32.cont [8/16] 0.0, 128
  %983 = vxpose.xlu0.b32.cont [9/16] 0.0, 128
  %984 = vxpose.xlu0.b32.cont [10/16] 0.0, 128
  %985 = vxpose.xlu0.b32.cont [11/16] 0.0, 128
  %986 = vxpose.xlu0.b32.cont [12/16] 0.0, 128
  %987 = vxpose.xlu0.b32.cont [13/16] 0.0, 128
  %988 = vxpose.xlu0.b32.cont [14/16] 0.0, 128
  %989 = vxpose.xlu0.b32.cont [15/16] 0.0, 128
  %990 = vxpose.xlu0.b32.end [16/16] 0.0, 128
  %v991 = vpop.trf.xlu0
  %v992 = vpop.trf.xlu0
  %v993 = vpop.trf.xlu0
  %v994 = vpop.trf.xlu0
  %v995 = vpop.trf.xlu0
  %v996 = vpop.trf.xlu0
  %v997 = vpop.trf.xlu0
  %v998 = vpop.trf.xlu0
  %v999 = vpop.trf.xlu0
  %v1000 = vpop.trf.xlu0
  %v1001 = vpop.trf.xlu0
  %v1002 = vpop.trf.xlu0
  %v1003 = vpop.trf.xlu0
  %v1004 = vpop.trf.xlu0
  %v1005 = vpop.trf.xlu0
  %v1006 = vpop.trf.xlu0
  %vm1007 = vcmask 261120
  %v1009 = vsel %vm1007, %v991, 0
  %v1012 = vsel %vm1007, %v992, 0
  %v1015 = vsel %vm1007, %v993, 0
  %v1018 = vsel %vm1007, %v994, 0
  %v1021 = vsel %vm1007, %v995, 0
  %v1024 = vsel %vm1007, %v996, 0
  %v1027 = vsel %vm1007, %v997, 0
  %v1030 = vsel %vm1007, %v998, 0
  %v1033 = vsel %vm1007, %v999, 0
  %v1036 = vsel %vm1007, %v1000, 0
  %v1039 = vsel %vm1007, %v1001, 0
  %v1042 = vsel %vm1007, %v1002, 0
  %v1045 = vsel %vm1007, %v1003, 0
  %v1048 = vsel %vm1007, %v1004, 0
  %v1051 = vsel %vm1007, %v1005, 0
  %v1054 = vsel %vm1007, %v1006, 0
  %1056 = vmatprep.subr.mxu0 0.0
  %1057 = vmatpush1.msra.mxu0 0.0
  %1058 = vmatprep.subr.mxu0 0.0
  %1059 = vmatpush1.msra.mxu0 0.0
  %1060 = vmatprep.subr.mxu0 0.0
  %1061 = vmatpush1.msra.mxu0 0.0
  %1062 = vmatprep.subr.mxu0 0.0
  %1063 = vmatpush1.msra.mxu0 0.0
  %1064 = vmatprep.subr.mxu0 0.0
  %1065 = vmatpush1.msra.mxu0 0.0
  %1066 = vmatprep.subr.mxu0 0.0
  %1067 = vmatpush1.msra.mxu0 0.0
  %1068 = vmatprep.subr.mxu0 0.0
  %1069 = vmatpush1.msra.mxu0 0.0
  %1070 = vmatprep.subr.mxu0 0.0
  %1071 = vmatpush1.msra.mxu0 0.0
  %1072 = vmatprep.subr.mxu0 0.0
  %1073 = vmatpush1.msra.mxu0 0.0
  %1074 = vmatprep.subr.mxu0 0.0
  %1075 = vmatpush1.msra.mxu0 0.0
  %1076 = vmatprep.subr.mxu0 0.0
  %1077 = vmatpush1.msra.mxu0 0.0
  %1078 = vmatprep.subr.mxu0 0.0
  %1079 = vmatpush1.msra.mxu0 0.0
  %1080 = vmatprep.subr.mxu0 %v892
  %1081 = vmatpush1.msra.mxu0 %v891
  %1082 = vmatprep.subr.mxu0 %v888
  %1083 = vmatpush1.msra.mxu0 %v887
  %1084 = vmatprep.subr.mxu0 %v884
  %1085 = vmatpush1.msra.mxu0 %v883
  %1086 = vmatprep.subr.mxu0 %v880
  %1087 = vmatpush1.msra.mxu0 %v879
  %1088 = vmatprep.subr.mxu0 0.0
  %1089 = vmatpush2.msra.mxu0 0.0
  %1090 = vmatprep.subr.mxu0 0.0
  %1091 = vmatpush2.msra.mxu0 0.0
  %1092 = vmatprep.subr.mxu0 0.0
  %1093 = vmatpush2.msra.mxu0 0.0
  %1094 = vmatprep.subr.mxu0 0.0
  %1095 = vmatpush2.msra.mxu0 0.0
  %1096 = vmatprep.subr.mxu0 0.0
  %1097 = vmatpush2.msra.mxu0 0.0
  %1098 = vmatprep.subr.mxu0 0.0
  %1099 = vmatpush2.msra.mxu0 0.0
  %1100 = vmatprep.subr.mxu0 0.0
  %1101 = vmatpush2.msra.mxu0 0.0
  %1102 = vmatprep.subr.mxu0 0.0
  %1103 = vmatpush2.msra.mxu0 0.0
  %1104 = vmatprep.subr.mxu0 0.0
  %1105 = vmatpush2.msra.mxu0 0.0
  %1106 = vmatprep.subr.mxu0 0.0
  %1107 = vmatpush2.msra.mxu0 0.0
  %1108 = vmatprep.subr.mxu0 0.0
  %1109 = vmatpush2.msra.mxu0 0.0
  %1110 = vmatprep.subr.mxu0 0.0
  %1111 = vmatpush2.msra.mxu0 0.0
  %1112 = vmatprep.subr.mxu0 0.0
  %1113 = vmatpush2.msra.mxu0 0.0
  %1114 = vmatprep.subr.mxu0 0.0
  %1115 = vmatpush2.msra.mxu0 0.0
  %1116 = vmatprep.subr.mxu0 0.0
  %1117 = vmatpush2.msra.mxu0 0.0
  %1118 = vmatprep.subr.mxu0 0.0
  %1119 = vmatpush2.msra.mxu0 0.0
  %1120 = vmatprep.mubr.f32.mxu0 0.0
  %1121 = vmatmul.mubr.f32.gmra.mxu0 %v1009
  %v1122 = vpop.f32.mrf.mxu0
  %v1123 = vadd.f32 %v911, %v1122
  %v1124 = vpop.f32.mrf.mxu0
  %v1125 = vadd.f32 %v912, %v1124
  %1126 = vmatprep.mubr.f32.mxu0 0.0
  %1127 = vmatmul.mubr.f32.gmra.mxu0 %v1012
  %v1128 = vpop.f32.mrf.mxu0
  %v1129 = vadd.f32 %v915, %v1128
  %v1130 = vpop.f32.mrf.mxu0
  %v1131 = vadd.f32 %v916, %v1130
  %1132 = vmatprep.mubr.f32.mxu0 0.0
  %1133 = vmatmul.mubr.f32.gmra.mxu0 %v1015
  %v1134 = vpop.f32.mrf.mxu0
  %v1135 = vadd.f32 %v919, %v1134
  %v1136 = vpop.f32.mrf.mxu0
  %v1137 = vadd.f32 %v920, %v1136
  %1138 = vmatprep.mubr.f32.mxu0 0.0
  %1139 = vmatmul.mubr.f32.gmra.mxu0 %v1018
  %v1140 = vpop.f32.mrf.mxu0
  %v1141 = vadd.f32 %v923, %v1140
  %v1142 = vpop.f32.mrf.mxu0
  %v1143 = vadd.f32 %v924, %v1142
  %1144 = vmatprep.mubr.f32.mxu0 0.0
  %1145 = vmatmul.mubr.f32.gmra.mxu0 %v1021
  %v1146 = vpop.f32.mrf.mxu0
  %v1147 = vadd.f32 %v927, %v1146
  %v1148 = vpop.f32.mrf.mxu0
  %v1149 = vadd.f32 %v928, %v1148
  %1150 = vmatprep.mubr.f32.mxu0 0.0
  %1151 = vmatmul.mubr.f32.gmra.mxu0 %v1024
  %v1152 = vpop.f32.mrf.mxu0
  %v1153 = vadd.f32 %v931, %v1152
  %v1154 = vpop.f32.mrf.mxu0
  %v1155 = vadd.f32 %v932, %v1154
  %1156 = vmatprep.mubr.f32.mxu0 0.0
  %1157 = vmatmul.mubr.f32.gmra.mxu0 %v1027
  %v1158 = vpop.f32.mrf.mxu0
  %v1159 = vadd.f32 %v935, %v1158
  %v1160 = vpop.f32.mrf.mxu0
  %v1161 = vadd.f32 %v936, %v1160
  %1162 = vmatprep.mubr.f32.mxu0 0.0
  %1163 = vmatmul.mubr.f32.gmra.mxu0 %v1030
  %v1164 = vpop.f32.mrf.mxu0
  %v1165 = vadd.f32 %v939, %v1164
  %v1166 = vpop.f32.mrf.mxu0
  %v1167 = vadd.f32 %v940, %v1166
  %1168 = vmatprep.mubr.f32.mxu0 0.0
  %1169 = vmatmul.mubr.f32.gmra.mxu0 %v1033
  %v1170 = vpop.f32.mrf.mxu0
  %v1171 = vadd.f32 %v943, %v1170
  %v1172 = vpop.f32.mrf.mxu0
  %v1173 = vadd.f32 %v944, %v1172
  %1174 = vmatprep.mubr.f32.mxu0 0.0
  %1175 = vmatmul.mubr.f32.gmra.mxu0 %v1036
  %v1176 = vpop.f32.mrf.mxu0
  %v1177 = vadd.f32 %v947, %v1176
  %v1178 = vpop.f32.mrf.mxu0
  %v1179 = vadd.f32 %v948, %v1178
  %1180 = vmatprep.mubr.f32.mxu0 0.0
  %1181 = vmatmul.mubr.f32.gmra.mxu0 %v1039
  %v1182 = vpop.f32.mrf.mxu0
  %v1183 = vadd.f32 %v951, %v1182
  %v1184 = vpop.f32.mrf.mxu0
  %v1185 = vadd.f32 %v952, %v1184
  %1186 = vmatprep.mubr.f32.mxu0 0.0
  %1187 = vmatmul.mubr.f32.gmra.mxu0 %v1042
  %v1188 = vpop.f32.mrf.mxu0
  %v1189 = vadd.f32 %v955, %v1188
  %v1190 = vpop.f32.mrf.mxu0
  %v1191 = vadd.f32 %v956, %v1190
  %1192 = vmatprep.mubr.f32.mxu0 0.0
  %1193 = vmatmul.mubr.f32.gmra.mxu0 %v1045
  %v1194 = vpop.f32.mrf.mxu0
  %v1195 = vadd.f32 %v959, %v1194
  %v1196 = vpop.f32.mrf.mxu0
  %v1197 = vadd.f32 %v960, %v1196
  %1198 = vmatprep.mubr.f32.mxu0 0.0
  %1199 = vmatmul.mubr.f32.gmra.mxu0 %v1048
  %v1200 = vpop.f32.mrf.mxu0
  %v1201 = vadd.f32 %v963, %v1200
  %v1202 = vpop.f32.mrf.mxu0
  %v1203 = vadd.f32 %v964, %v1202
  %1204 = vmatprep.mubr.f32.mxu0 0.0
  %1205 = vmatmul.mubr.f32.gmra.mxu0 %v1051
  %v1206 = vpop.f32.mrf.mxu0
  %v1207 = vadd.f32 %v967, %v1206
  %v1208 = vpop.f32.mrf.mxu0
  %v1209 = vadd.f32 %v968, %v1208
  %1210 = vmatprep.mubr.f32.mxu0 0.0
  %1211 = vmatmul.mubr.f32.gmra.mxu0 %v1054
  %v1212 = vpop.f32.mrf.mxu0
  %v1213 = vadd.f32 %v971, %v1212
  %v1214 = vpop.f32.mrf.mxu0
  %v1215 = vadd.f32 %v972, %v1214
  %1216 = vdwg.mxu0
  %1217 = vmatprep.subr.mxu0 0.0
  %1218 = vmatpush1.msra.mxu0 0.0
  %1219 = vmatprep.subr.mxu0 0.0
  %1220 = vmatpush1.msra.mxu0 0.0
  %1221 = vmatprep.subr.mxu0 0.0
  %1222 = vmatpush1.msra.mxu0 0.0
  %1223 = vmatprep.subr.mxu0 0.0
  %1224 = vmatpush1.msra.mxu0 0.0
  %1225 = vmatprep.subr.mxu0 0.0
  %1226 = vmatpush1.msra.mxu0 0.0
  %1227 = vmatprep.subr.mxu0 0.0
  %1228 = vmatpush1.msra.mxu0 0.0
  %1229 = vmatprep.subr.mxu0 0.0
  %1230 = vmatpush1.msra.mxu0 0.0
  %1231 = vmatprep.subr.mxu0 0.0
  %1232 = vmatpush1.msra.mxu0 0.0
  %1233 = vmatprep.subr.mxu0 0.0
  %1234 = vmatpush1.msra.mxu0 0.0
  %1235 = vmatprep.subr.mxu0 0.0
  %1236 = vmatpush1.msra.mxu0 0.0
  %1237 = vmatprep.subr.mxu0 0.0
  %1238 = vmatpush1.msra.mxu0 0.0
  %1239 = vmatprep.subr.mxu0 0.0
  %1240 = vmatpush1.msra.mxu0 0.0
  %1241 = vmatprep.subr.mxu0 %v894
  %1242 = vmatpush1.msra.mxu0 %v893
  %1243 = vmatprep.subr.mxu0 %v890
  %1244 = vmatpush1.msra.mxu0 %v889
  %1245 = vmatprep.subr.mxu0 %v886
  %1246 = vmatpush1.msra.mxu0 %v885
  %1247 = vmatprep.subr.mxu0 %v882
  %1248 = vmatpush1.msra.mxu0 %v881
  %1249 = vmatprep.subr.mxu0 0.0
  %1250 = vmatpush2.msra.mxu0 0.0
  %1251 = vmatprep.subr.mxu0 0.0
  %1252 = vmatpush2.msra.mxu0 0.0
  %1253 = vmatprep.subr.mxu0 0.0
  %1254 = vmatpush2.msra.mxu0 0.0
  %1255 = vmatprep.subr.mxu0 0.0
  %1256 = vmatpush2.msra.mxu0 0.0
  %1257 = vmatprep.subr.mxu0 0.0
  %1258 = vmatpush2.msra.mxu0 0.0
  %1259 = vmatprep.subr.mxu0 0.0
  %1260 = vmatpush2.msra.mxu0 0.0
  %1261 = vmatprep.subr.mxu0 0.0
  %1262 = vmatpush2.msra.mxu0 0.0
  %1263 = vmatprep.subr.mxu0 0.0
  %1264 = vmatpush2.msra.mxu0 0.0
  %1265 = vmatprep.subr.mxu0 0.0
  %1266 = vmatpush2.msra.mxu0 0.0
  %1267 = vmatprep.subr.mxu0 0.0
  %1268 = vmatpush2.msra.mxu0 0.0
  %1269 = vmatprep.subr.mxu0 0.0
  %1270 = vmatpush2.msra.mxu0 0.0
  %1271 = vmatprep.subr.mxu0 0.0
  %1272 = vmatpush2.msra.mxu0 0.0
  %1273 = vmatprep.subr.mxu0 0.0
  %1274 = vmatpush2.msra.mxu0 0.0
  %1275 = vmatprep.subr.mxu0 0.0
  %1276 = vmatpush2.msra.mxu0 0.0
  %1277 = vmatprep.subr.mxu0 0.0
  %1278 = vmatpush2.msra.mxu0 0.0
  %1279 = vmatprep.subr.mxu0 0.0
  %1280 = vmatpush2.msra.mxu0 0.0
  %1281 = vmatprep.mubr.f32.mxu0 0.0
  %1282 = vmatmul.mubr.f32.gmra.mxu0 %v1009
  %v1283 = vpop.f32.mrf.mxu0
  %v1284 = vadd.f32 %v913, %v1283
  %v1285 = vpop.f32.mrf.mxu0
  %v1286 = vadd.f32 %v914, %v1285
  %1287 = vmatprep.mubr.f32.mxu0 0.0
  %1288 = vmatmul.mubr.f32.gmra.mxu0 %v1012
  %v1289 = vpop.f32.mrf.mxu0
  %v1290 = vadd.f32 %v917, %v1289
  %v1291 = vpop.f32.mrf.mxu0
  %v1292 = vadd.f32 %v918, %v1291
  %1293 = vmatprep.mubr.f32.mxu0 0.0
  %1294 = vmatmul.mubr.f32.gmra.mxu0 %v1015
  %v1295 = vpop.f32.mrf.mxu0
  %v1296 = vadd.f32 %v921, %v1295
  %v1297 = vpop.f32.mrf.mxu0
  %v1298 = vadd.f32 %v922, %v1297
  %1299 = vmatprep.mubr.f32.mxu0 0.0
  %1300 = vmatmul.mubr.f32.gmra.mxu0 %v1018
  %v1301 = vpop.f32.mrf.mxu0
  %v1302 = vadd.f32 %v925, %v1301
  %v1303 = vpop.f32.mrf.mxu0
  %v1304 = vadd.f32 %v926, %v1303
  %1305 = vmatprep.mubr.f32.mxu0 0.0
  %1306 = vmatmul.mubr.f32.gmra.mxu0 %v1021
  %v1307 = vpop.f32.mrf.mxu0
  %v1308 = vadd.f32 %v929, %v1307
  %v1309 = vpop.f32.mrf.mxu0
  %v1310 = vadd.f32 %v930, %v1309
  %1311 = vmatprep.mubr.f32.mxu0 0.0
  %1312 = vmatmul.mubr.f32.gmra.mxu0 %v1024
  %v1313 = vpop.f32.mrf.mxu0
  %v1314 = vadd.f32 %v933, %v1313
  %v1315 = vpop.f32.mrf.mxu0
  %v1316 = vadd.f32 %v934, %v1315
  %1317 = vmatprep.mubr.f32.mxu0 0.0
  %1318 = vmatmul.mubr.f32.gmra.mxu0 %v1027
  %v1319 = vpop.f32.mrf.mxu0
  %v1320 = vadd.f32 %v937, %v1319
  %v1321 = vpop.f32.mrf.mxu0
  %v1322 = vadd.f32 %v938, %v1321
  %1323 = vmatprep.mubr.f32.mxu0 0.0
  %1324 = vmatmul.mubr.f32.gmra.mxu0 %v1030
  %v1325 = vpop.f32.mrf.mxu0
  %v1326 = vadd.f32 %v941, %v1325
  %v1327 = vpop.f32.mrf.mxu0
  %v1328 = vadd.f32 %v942, %v1327
  %1329 = vmatprep.mubr.f32.mxu0 0.0
  %1330 = vmatmul.mubr.f32.gmra.mxu0 %v1033
  %v1331 = vpop.f32.mrf.mxu0
  %v1332 = vadd.f32 %v945, %v1331
  %v1333 = vpop.f32.mrf.mxu0
  %v1334 = vadd.f32 %v946, %v1333
  %1335 = vmatprep.mubr.f32.mxu0 0.0
  %1336 = vmatmul.mubr.f32.gmra.mxu0 %v1036
  %v1337 = vpop.f32.mrf.mxu0
  %v1338 = vadd.f32 %v949, %v1337
  %v1339 = vpop.f32.mrf.mxu0
  %v1340 = vadd.f32 %v950, %v1339
  %1341 = vmatprep.mubr.f32.mxu0 0.0
  %1342 = vmatmul.mubr.f32.gmra.mxu0 %v1039
  %v1343 = vpop.f32.mrf.mxu0
  %v1344 = vadd.f32 %v953, %v1343
  %v1345 = vpop.f32.mrf.mxu0
  %v1346 = vadd.f32 %v954, %v1345
  %1347 = vmatprep.mubr.f32.mxu0 0.0
  %1348 = vmatmul.mubr.f32.gmra.mxu0 %v1042
  %v1349 = vpop.f32.mrf.mxu0
  %v1350 = vadd.f32 %v957, %v1349
  %v1351 = vpop.f32.mrf.mxu0
  %v1352 = vadd.f32 %v958, %v1351
  %1353 = vmatprep.mubr.f32.mxu0 0.0
  %1354 = vmatmul.mubr.f32.gmra.mxu0 %v1045
  %v1355 = vpop.f32.mrf.mxu0
  %v1356 = vadd.f32 %v961, %v1355
  %v1357 = vpop.f32.mrf.mxu0
  %v1358 = vadd.f32 %v962, %v1357
  %1359 = vmatprep.mubr.f32.mxu0 0.0
  %1360 = vmatmul.mubr.f32.gmra.mxu0 %v1048
  %v1361 = vpop.f32.mrf.mxu0
  %v1362 = vadd.f32 %v965, %v1361
  %v1363 = vpop.f32.mrf.mxu0
  %v1364 = vadd.f32 %v966, %v1363
  %1365 = vmatprep.mubr.f32.mxu0 0.0
  %1366 = vmatmul.mubr.f32.gmra.mxu0 %v1051
  %v1367 = vpop.f32.mrf.mxu0
  %v1368 = vadd.f32 %v969, %v1367
  %v1369 = vpop.f32.mrf.mxu0
  %v1370 = vadd.f32 %v970, %v1369
  %1371 = vmatprep.mubr.f32.mxu0 0.0
  %1372 = vmatmul.mubr.f32.gmra.mxu0 %v1054
  %v1373 = vpop.f32.mrf.mxu0
  %v1374 = vadd.f32 %v973, %v1373
  %v1375 = vpop.f32.mrf.mxu0
  %v1376 = vadd.f32 %v974, %v1375
  %1377 = vdwg.mxu0
  %v1378 = vmax.f32 %v1123, %v1125
  %v1379 = vmax.f32 %v1378, %v1284
  %v1380 = vmax.f32 %v1379, %v1286
  %1381 = vmax.xlane.f32.xlu0 %v1380
  %v1382 = vpop.xlane.xlu0 %1381
  %v1383 = vmax.f32 %v1129, %v1131
  %v1384 = vmax.f32 %v1383, %v1290
  %v1385 = vmax.f32 %v1384, %v1292
  %1386 = vmax.xlane.f32.xlu0 %v1385
  %v1387 = vpop.xlane.xlu0 %1386
  %v1388 = vmax.f32 %v1135, %v1137
  %v1389 = vmax.f32 %v1388, %v1296
  %v1390 = vmax.f32 %v1389, %v1298
  %1391 = vmax.xlane.f32.xlu0 %v1390
  %v1392 = vpop.xlane.xlu0 %1391
  %v1393 = vmax.f32 %v1141, %v1143
  %v1394 = vmax.f32 %v1393, %v1302
  %v1395 = vmax.f32 %v1394, %v1304
  %1396 = vmax.xlane.f32.xlu0 %v1395
  %v1397 = vpop.xlane.xlu0 %1396
  %v1398 = vmax.f32 %v1147, %v1149
  %v1399 = vmax.f32 %v1398, %v1308
  %v1400 = vmax.f32 %v1399, %v1310
  %1401 = vmax.xlane.f32.xlu0 %v1400
  %v1402 = vpop.xlane.xlu0 %1401
  %v1403 = vmax.f32 %v1153, %v1155
  %v1404 = vmax.f32 %v1403, %v1314
  %v1405 = vmax.f32 %v1404, %v1316
  %1406 = vmax.xlane.f32.xlu0 %v1405
  %v1407 = vpop.xlane.xlu0 %1406
  %v1408 = vmax.f32 %v1159, %v1161
  %v1409 = vmax.f32 %v1408, %v1320
  %v1410 = vmax.f32 %v1409, %v1322
  %1411 = vmax.xlane.f32.xlu0 %v1410
  %v1412 = vpop.xlane.xlu0 %1411
  %v1413 = vmax.f32 %v1165, %v1167
  %v1414 = vmax.f32 %v1413, %v1326
  %v1415 = vmax.f32 %v1414, %v1328
  %1416 = vmax.xlane.f32.xlu0 %v1415
  %v1417 = vpop.xlane.xlu0 %1416
  %v1418 = vmax.f32 %v1171, %v1173
  %v1419 = vmax.f32 %v1418, %v1332
  %v1420 = vmax.f32 %v1419, %v1334
  %1421 = vmax.xlane.f32.xlu0 %v1420
  %v1422 = vpop.xlane.xlu0 %1421
  %v1423 = vmax.f32 %v1177, %v1179
  %v1424 = vmax.f32 %v1423, %v1338
  %v1425 = vmax.f32 %v1424, %v1340
  %1426 = vmax.xlane.f32.xlu0 %v1425
  %v1427 = vpop.xlane.xlu0 %1426
  %v1428 = vmax.f32 %v1183, %v1185
  %v1429 = vmax.f32 %v1428, %v1344
  %v1430 = vmax.f32 %v1429, %v1346
  %1431 = vmax.xlane.f32.xlu0 %v1430
  %v1432 = vpop.xlane.xlu0 %1431
  %v1433 = vmax.f32 %v1189, %v1191
  %v1434 = vmax.f32 %v1433, %v1350
  %v1435 = vmax.f32 %v1434, %v1352
  %1436 = vmax.xlane.f32.xlu0 %v1435
  %v1437 = vpop.xlane.xlu0 %1436
  %v1438 = vmax.f32 %v1195, %v1197
  %v1439 = vmax.f32 %v1438, %v1356
  %v1440 = vmax.f32 %v1439, %v1358
  %1441 = vmax.xlane.f32.xlu0 %v1440
  %v1442 = vpop.xlane.xlu0 %1441
  %v1443 = vmax.f32 %v1201, %v1203
  %v1444 = vmax.f32 %v1443, %v1362
  %v1445 = vmax.f32 %v1444, %v1364
  %1446 = vmax.xlane.f32.xlu0 %v1445
  %v1447 = vpop.xlane.xlu0 %1446
  %v1448 = vmax.f32 %v1207, %v1209
  %v1449 = vmax.f32 %v1448, %v1368
  %v1450 = vmax.f32 %v1449, %v1370
  %1451 = vmax.xlane.f32.xlu0 %v1450
  %v1452 = vpop.xlane.xlu0 %1451
  %v1453 = vmax.f32 %v1213, %v1215
  %v1454 = vmax.f32 %v1453, %v1374
  %v1455 = vmax.f32 %v1454, %v1376
  %1456 = vmax.xlane.f32.xlu0 %v1455
  %v1457 = vpop.xlane.xlu0 %1456
  %v1458 = vsub.f32 %v1123, %v1382
  %v1459 = vsub.f32 %v1125, %v1382
  %v1460 = vsub.f32 %v1284, %v1382
  %v1461 = vsub.f32 %v1286, %v1382
  %v1462 = vsub.f32 %v1129, %v1387
  %v1463 = vsub.f32 %v1131, %v1387
  %v1464 = vsub.f32 %v1290, %v1387
  %v1465 = vsub.f32 %v1292, %v1387
  %v1466 = vsub.f32 %v1135, %v1392
  %v1467 = vsub.f32 %v1137, %v1392
  %v1468 = vsub.f32 %v1296, %v1392
  %v1469 = vsub.f32 %v1298, %v1392
  %v1470 = vsub.f32 %v1141, %v1397
  %v1471 = vsub.f32 %v1143, %v1397
  %v1472 = vsub.f32 %v1302, %v1397
  %v1473 = vsub.f32 %v1304, %v1397
  %v1474 = vsub.f32 %v1147, %v1402
  %v1475 = vsub.f32 %v1149, %v1402
  %v1476 = vsub.f32 %v1308, %v1402
  %v1477 = vsub.f32 %v1310, %v1402
  %v1478 = vsub.f32 %v1153, %v1407
  %v1479 = vsub.f32 %v1155, %v1407
  %v1480 = vsub.f32 %v1314, %v1407
  %v1481 = vsub.f32 %v1316, %v1407
  %v1482 = vsub.f32 %v1159, %v1412
  %v1483 = vsub.f32 %v1161, %v1412
  %v1484 = vsub.f32 %v1320, %v1412
  %v1485 = vsub.f32 %v1322, %v1412
  %v1486 = vsub.f32 %v1165, %v1417
  %v1487 = vsub.f32 %v1167, %v1417
  %v1488 = vsub.f32 %v1326, %v1417
  %v1489 = vsub.f32 %v1328, %v1417
  %v1490 = vsub.f32 %v1171, %v1422
  %v1491 = vsub.f32 %v1173, %v1422
  %v1492 = vsub.f32 %v1332, %v1422
  %v1493 = vsub.f32 %v1334, %v1422
  %v1494 = vsub.f32 %v1177, %v1427
  %v1495 = vsub.f32 %v1179, %v1427
  %v1496 = vsub.f32 %v1338, %v1427
  %v1497 = vsub.f32 %v1340, %v1427
  %v1498 = vsub.f32 %v1183, %v1432
  %v1499 = vsub.f32 %v1185, %v1432
  %v1500 = vsub.f32 %v1344, %v1432
  %v1501 = vsub.f32 %v1346, %v1432
  %v1502 = vsub.f32 %v1189, %v1437
  %v1503 = vsub.f32 %v1191, %v1437
  %v1504 = vsub.f32 %v1350, %v1437
  %v1505 = vsub.f32 %v1352, %v1437
  %v1506 = vsub.f32 %v1195, %v1442
  %v1507 = vsub.f32 %v1197, %v1442
  %v1508 = vsub.f32 %v1356, %v1442
  %v1509 = vsub.f32 %v1358, %v1442
  %v1510 = vsub.f32 %v1201, %v1447
  %v1511 = vsub.f32 %v1203, %v1447
  %v1512 = vsub.f32 %v1362, %v1447
  %v1513 = vsub.f32 %v1364, %v1447
  %v1514 = vsub.f32 %v1207, %v1452
  %v1515 = vsub.f32 %v1209, %v1452
  %v1516 = vsub.f32 %v1368, %v1452
  %v1517 = vsub.f32 %v1370, %v1452
  %v1518 = vsub.f32 %v1213, %v1457
  %v1519 = vsub.f32 %v1215, %v1457
  %v1520 = vsub.f32 %v1374, %v1457
  %v1521 = vsub.f32 %v1376, %v1457
  %v1522 = vmul.f32 %v1458, 1.442695
  %v1523 = vpow.pop %v1522
  %v1524 = vmul.f32 %v1459, 1.442695
  %v1525 = vpow.pop %v1524
  %v1526 = vmul.f32 %v1460, 1.442695
  %v1527 = vpow.pop %v1526
  %v1528 = vmul.f32 %v1461, 1.442695
  %v1529 = vpow.pop %v1528
  %v1530 = vmul.f32 %v1462, 1.442695
  %v1531 = vpow.pop %v1530
  %v1532 = vmul.f32 %v1463, 1.442695
  %v1533 = vpow.pop %v1532
  %v1534 = vmul.f32 %v1464, 1.442695
  %v1535 = vpow.pop %v1534
  %v1536 = vmul.f32 %v1465, 1.442695
  %v1537 = vpow.pop %v1536
  %v1538 = vmul.f32 %v1466, 1.442695
  %v1539 = vpow.pop %v1538
  %v1540 = vmul.f32 %v1467, 1.442695
  %v1541 = vpow.pop %v1540
  %v1542 = vmul.f32 %v1468, 1.442695
  %v1543 = vpow.pop %v1542
  %v1544 = vmul.f32 %v1469, 1.442695
  %v1545 = vpow.pop %v1544
  %v1546 = vmul.f32 %v1470, 1.442695
  %v1547 = vpow.pop %v1546
  %v1548 = vmul.f32 %v1471, 1.442695
  %v1549 = vpow.pop %v1548
  %v1550 = vmul.f32 %v1472, 1.442695
  %v1551 = vpow.pop %v1550
  %v1552 = vmul.f32 %v1473, 1.442695
  %v1553 = vpow.pop %v1552
  %v1554 = vmul.f32 %v1474, 1.442695
  %v1555 = vpow.pop %v1554
  %v1556 = vmul.f32 %v1475, 1.442695
  %v1557 = vpow.pop %v1556
  %v1558 = vmul.f32 %v1476, 1.442695
  %v1559 = vpow.pop %v1558
  %v1560 = vmul.f32 %v1477, 1.442695
  %v1561 = vpow.pop %v1560
  %v1562 = vmul.f32 %v1478, 1.442695
  %v1563 = vpow.pop %v1562
  %v1564 = vmul.f32 %v1479, 1.442695
  %v1565 = vpow.pop %v1564
  %v1566 = vmul.f32 %v1480, 1.442695
  %v1567 = vpow.pop %v1566
  %v1568 = vmul.f32 %v1481, 1.442695
  %v1569 = vpow.pop %v1568
  %v1570 = vmul.f32 %v1482, 1.442695
  %v1571 = vpow.pop %v1570
  %v1572 = vmul.f32 %v1483, 1.442695
  %v1573 = vpow.pop %v1572
  %v1574 = vmul.f32 %v1484, 1.442695
  %v1575 = vpow.pop %v1574
  %v1576 = vmul.f32 %v1485, 1.442695
  %v1577 = vpow.pop %v1576
  %v1578 = vmul.f32 %v1486, 1.442695
  %v1579 = vpow.pop %v1578
  %v1580 = vmul.f32 %v1487, 1.442695
  %v1581 = vpow.pop %v1580
  %v1582 = vmul.f32 %v1488, 1.442695
  %v1583 = vpow.pop %v1582
  %v1584 = vmul.f32 %v1489, 1.442695
  %v1585 = vpow.pop %v1584
  %v1586 = vmul.f32 %v1490, 1.442695
  %v1587 = vpow.pop %v1586
  %v1588 = vmul.f32 %v1491, 1.442695
  %v1589 = vpow.pop %v1588
  %v1590 = vmul.f32 %v1492, 1.442695
  %v1591 = vpow.pop %v1590
  %v1592 = vmul.f32 %v1493, 1.442695
  %v1593 = vpow.pop %v1592
  %v1594 = vmul.f32 %v1494, 1.442695
  %v1595 = vpow.pop %v1594
  %v1596 = vmul.f32 %v1495, 1.442695
  %v1597 = vpow.pop %v1596
  %v1598 = vmul.f32 %v1496, 1.442695
  %v1599 = vpow.pop %v1598
  %v1600 = vmul.f32 %v1497, 1.442695
  %v1601 = vpow.pop %v1600
  %v1602 = vmul.f32 %v1498, 1.442695
  %v1603 = vpow.pop %v1602
  %v1604 = vmul.f32 %v1499, 1.442695
  %v1605 = vpow.pop %v1604
  %v1606 = vmul.f32 %v1500, 1.442695
  %v1607 = vpow.pop %v1606
  %v1608 = vmul.f32 %v1501, 1.442695
  %v1609 = vpow.pop %v1608
  %v1610 = vmul.f32 %v1502, 1.442695
  %v1611 = vpow.pop %v1610
  %v1612 = vmul.f32 %v1503, 1.442695
  %v1613 = vpow.pop %v1612
  %v1614 = vmul.f32 %v1504, 1.442695
  %v1615 = vpow.pop %v1614
  %v1616 = vmul.f32 %v1505, 1.442695
  %v1617 = vpow.pop %v1616
  %v1618 = vmul.f32 %v1506, 1.442695
  %v1619 = vpow.pop %v1618
  %v1620 = vmul.f32 %v1507, 1.442695
  %v1621 = vpow.pop %v1620
  %v1622 = vmul.f32 %v1508, 1.442695
  %v1623 = vpow.pop %v1622
  %v1624 = vmul.f32 %v1509, 1.442695
  %v1625 = vpow.pop %v1624
  %v1626 = vmul.f32 %v1510, 1.442695
  %v1627 = vpow.pop %v1626
  %v1628 = vmul.f32 %v1511, 1.442695
  %v1629 = vpow.pop %v1628
  %v1630 = vmul.f32 %v1512, 1.442695
  %v1631 = vpow.pop %v1630
  %v1632 = vmul.f32 %v1513, 1.442695
  %v1633 = vpow.pop %v1632
  %v1634 = vmul.f32 %v1514, 1.442695
  %v1635 = vpow.pop %v1634
  %v1636 = vmul.f32 %v1515, 1.442695
  %v1637 = vpow.pop %v1636
  %v1638 = vmul.f32 %v1516, 1.442695
  %v1639 = vpow.pop %v1638
  %v1640 = vmul.f32 %v1517, 1.442695
  %v1641 = vpow.pop %v1640
  %v1642 = vmul.f32 %v1518, 1.442695
  %v1643 = vpow.pop %v1642
  %v1644 = vmul.f32 %v1519, 1.442695
  %v1645 = vpow.pop %v1644
  %v1646 = vmul.f32 %v1520, 1.442695
  %v1647 = vpow.pop %v1646
  %v1648 = vmul.f32 %v1521, 1.442695
  %v1649 = vpow.pop %v1648
  %v1650 = vld [vmem:[%s5] sm:$0xff]
  %v1651 = vld [vmem:[%s5 + $0x8] sm:$0xff]
  %v1652 = vld [vmem:[%s5 + $0x10] sm:$0xff]
  %v1653 = vld [vmem:[%s5 + $0x18] sm:$0xff]
  %v1654 = vld [vmem:[%s5 + $0x20] sm:$0xff]
  %v1655 = vld [vmem:[%s5 + $0x28] sm:$0xff]
  %v1656 = vld [vmem:[%s5 + $0x30] sm:$0xff]
  %v1657 = vld [vmem:[%s5 + $0x38] sm:$0xff]
  %v1658 = vld [vmem:[%s5 + $0x40] sm:$0xff]
  %v1659 = vld [vmem:[%s5 + $0x48] sm:$0xff]
  %v1660 = vld [vmem:[%s5 + $0x50] sm:$0xff]
  %v1661 = vld [vmem:[%s5 + $0x58] sm:$0xff]
  %v1662 = vld [vmem:[%s5 + $0x60] sm:$0xff]
  %v1663 = vld [vmem:[%s5 + $0x68] sm:$0xff]
  %v1664 = vld [vmem:[%s5 + $0x70] sm:$0xff]
  %v1665 = vld [vmem:[%s5 + $0x78] sm:$0xff]
  %v1666 = vld [vmem:[%s5 + $0x80] sm:$0xff]
  %v1667 = vld [vmem:[%s5 + $0x88] sm:$0xff]
  %v1668 = vld [vmem:[%s5 + $0x90] sm:$0xff]
  %v1669 = vld [vmem:[%s5 + $0x98] sm:$0xff]
  %v1670 = vld [vmem:[%s5 + $0xa0] sm:$0xff]
  %v1671 = vld [vmem:[%s5 + $0xa8] sm:$0xff]
  %v1672 = vld [vmem:[%s5 + $0xb0] sm:$0xff]
  %v1673 = vld [vmem:[%s5 + $0xb8] sm:$0xff]
  %v1674 = vld [vmem:[%s5 + $0xc0] sm:$0xff]
  %v1675 = vld [vmem:[%s5 + $0xc8] sm:$0xff]
  %v1676 = vld [vmem:[%s5 + $0xd0] sm:$0xff]
  %v1677 = vld [vmem:[%s5 + $0xd8] sm:$0xff]
  %v1678 = vld [vmem:[%s5 + $0xe0] sm:$0xff]
  %v1679 = vld [vmem:[%s5 + $0xe8] sm:$0xff]
  %v1680 = vld [vmem:[%s5 + $0xf0] sm:$0xff]
  %v1681 = vld [vmem:[%s5 + $0xf8] sm:$0xff]
  %v1682 = vld [vmem:[%s5 + $0x100] sm:$0xff]
  %v1683 = vld [vmem:[%s5 + $0x108] sm:$0xff]
  %v1684 = vld [vmem:[%s5 + $0x110] sm:$0xff]
  %v1685 = vld [vmem:[%s5 + $0x118] sm:$0xff]
  %v1686 = vld [vmem:[%s5 + $0x120] sm:$0xff]
  %v1687 = vld [vmem:[%s5 + $0x128] sm:$0xff]
  %v1688 = vld [vmem:[%s5 + $0x130] sm:$0xff]
  %v1689 = vld [vmem:[%s5 + $0x138] sm:$0xff]
  %v1690 = vld [vmem:[%s5 + $0x140] sm:$0xff]
  %v1691 = vld [vmem:[%s5 + $0x148] sm:$0xff]
  %v1692 = vld [vmem:[%s5 + $0x150] sm:$0xff]
  %v1693 = vld [vmem:[%s5 + $0x158] sm:$0xff]
  %v1694 = vld [vmem:[%s5 + $0x160] sm:$0xff]
  %v1695 = vld [vmem:[%s5 + $0x168] sm:$0xff]
  %v1696 = vld [vmem:[%s5 + $0x170] sm:$0xff]
  %v1697 = vld [vmem:[%s5 + $0x178] sm:$0xff]
  %v1698 = vld [vmem:[%s5 + $0x180] sm:$0xff]
  %v1699 = vld [vmem:[%s5 + $0x188] sm:$0xff]
  %v1700 = vld [vmem:[%s5 + $0x190] sm:$0xff]
  %v1701 = vld [vmem:[%s5 + $0x198] sm:$0xff]
  %v1702 = vld [vmem:[%s5 + $0x1a0] sm:$0xff]
  %v1703 = vld [vmem:[%s5 + $0x1a8] sm:$0xff]
  %v1704 = vld [vmem:[%s5 + $0x1b0] sm:$0xff]
  %v1705 = vld [vmem:[%s5 + $0x1b8] sm:$0xff]
  %v1706 = vld [vmem:[%s5 + $0x1c0] sm:$0xff]
  %v1707 = vld [vmem:[%s5 + $0x1c8] sm:$0xff]
  %v1708 = vld [vmem:[%s5 + $0x1d0] sm:$0xff]
  %v1709 = vld [vmem:[%s5 + $0x1d8] sm:$0xff]
  %v1710 = vld [vmem:[%s5 + $0x1e0] sm:$0xff]
  %v1711 = vld [vmem:[%s5 + $0x1e8] sm:$0xff]
  %v1712 = vld [vmem:[%s5 + $0x1f0] sm:$0xff]
  %v1713 = vld [vmem:[%s5 + $0x1f8] sm:$0xff]
  %1714 = vmatprep.subr.mxu0 0.0
  %1715 = vmatpush1.msra.mxu0 %v1665
  %1716 = vmatprep.subr.mxu0 0.0
  %1717 = vmatpush1.msra.mxu0 %v1664
  %1718 = vmatprep.subr.mxu0 0.0
  %1719 = vmatpush1.msra.mxu0 %v1663
  %1720 = vmatprep.subr.mxu0 0.0
  %1721 = vmatpush1.msra.mxu0 %v1662
  %1722 = vmatprep.subr.mxu0 0.0
  %1723 = vmatpush1.msra.mxu0 %v1661
  %1724 = vmatprep.subr.mxu0 0.0
  %1725 = vmatpush1.msra.mxu0 %v1660
  %1726 = vmatprep.subr.mxu0 0.0
  %1727 = vmatpush1.msra.mxu0 %v1659
  %1728 = vmatprep.subr.mxu0 0.0
  %1729 = vmatpush1.msra.mxu0 %v1658
  %1730 = vmatprep.subr.mxu0 0.0
  %1731 = vmatpush1.msra.mxu0 %v1657
  %1732 = vmatprep.subr.mxu0 0.0
  %1733 = vmatpush1.msra.mxu0 %v1656
  %1734 = vmatprep.subr.mxu0 0.0
  %1735 = vmatpush1.msra.mxu0 %v1655
  %1736 = vmatprep.subr.mxu0 0.0
  %1737 = vmatpush1.msra.mxu0 %v1654
  %1738 = vmatprep.subr.mxu0 0.0
  %1739 = vmatpush1.msra.mxu0 %v1653
  %1740 = vmatprep.subr.mxu0 0.0
  %1741 = vmatpush1.msra.mxu0 %v1652
  %1742 = vmatprep.subr.mxu0 0.0
  %1743 = vmatpush1.msra.mxu0 %v1651
  %1744 = vmatprep.subr.mxu0 0.0
  %1745 = vmatpush1.msra.mxu0 %v1650
  %1746 = vmatprep.subr.mxu0 0.0
  %1747 = vmatpush2.msra.mxu0 %v1681
  %1748 = vmatprep.subr.mxu0 0.0
  %1749 = vmatpush2.msra.mxu0 %v1680
  %1750 = vmatprep.subr.mxu0 0.0
  %1751 = vmatpush2.msra.mxu0 %v1679
  %1752 = vmatprep.subr.mxu0 0.0
  %1753 = vmatpush2.msra.mxu0 %v1678
  %1754 = vmatprep.subr.mxu0 0.0
  %1755 = vmatpush2.msra.mxu0 %v1677
  %1756 = vmatprep.subr.mxu0 0.0
  %1757 = vmatpush2.msra.mxu0 %v1676
  %1758 = vmatprep.subr.mxu0 0.0
  %1759 = vmatpush2.msra.mxu0 %v1675
  %1760 = vmatprep.subr.mxu0 0.0
  %1761 = vmatpush2.msra.mxu0 %v1674
  %1762 = vmatprep.subr.mxu0 0.0
  %1763 = vmatpush2.msra.mxu0 %v1673
  %1764 = vmatprep.subr.mxu0 0.0
  %1765 = vmatpush2.msra.mxu0 %v1672
  %1766 = vmatprep.subr.mxu0 0.0
  %1767 = vmatpush2.msra.mxu0 %v1671
  %1768 = vmatprep.subr.mxu0 0.0
  %1769 = vmatpush2.msra.mxu0 %v1670
  %1770 = vmatprep.subr.mxu0 0.0
  %1771 = vmatpush2.msra.mxu0 %v1669
  %1772 = vmatprep.subr.mxu0 0.0
  %1773 = vmatpush2.msra.mxu0 %v1668
  %1774 = vmatprep.subr.mxu0 0.0
  %1775 = vmatpush2.msra.mxu0 %v1667
  %1776 = vmatprep.subr.mxu0 0.0
  %1777 = vmatpush2.msra.mxu0 %v1666
  %1778 = vmatprep.mubr.f32.mxu0 %v1525
  %1779 = vmatmul.mubr.f32.gmra.mxu0 %v1523
  %v1780 = vpop.f32.mrf.mxu0
  %v1781 = vadd.f32 0.0, %v1780
  %v1782 = vpop.f32.mrf.mxu0
  %1783 = vmatprep.mubr.f32.mxu0 %v1533
  %1784 = vmatmul.mubr.f32.gmra.mxu0 %v1531
  %v1785 = vpop.f32.mrf.mxu0
  %v1786 = vadd.f32 0.0, %v1785
  %v1787 = vpop.f32.mrf.mxu0
  %1788 = vmatprep.mubr.f32.mxu0 %v1541
  %1789 = vmatmul.mubr.f32.gmra.mxu0 %v1539
  %v1790 = vpop.f32.mrf.mxu0
  %v1791 = vadd.f32 0.0, %v1790
  %v1792 = vpop.f32.mrf.mxu0
  %1793 = vmatprep.mubr.f32.mxu0 %v1549
  %1794 = vmatmul.mubr.f32.gmra.mxu0 %v1547
  %v1795 = vpop.f32.mrf.mxu0
  %v1796 = vadd.f32 0.0, %v1795
  %v1797 = vpop.f32.mrf.mxu0
  %1798 = vmatprep.mubr.f32.mxu0 %v1557
  %1799 = vmatmul.mubr.f32.gmra.mxu0 %v1555
  %v1800 = vpop.f32.mrf.mxu0
  %v1801 = vadd.f32 0.0, %v1800
  %v1802 = vpop.f32.mrf.mxu0
  %1803 = vmatprep.mubr.f32.mxu0 %v1565
  %1804 = vmatmul.mubr.f32.gmra.mxu0 %v1563
  %v1805 = vpop.f32.mrf.mxu0
  %v1806 = vadd.f32 0.0, %v1805
  %v1807 = vpop.f32.mrf.mxu0
  %1808 = vmatprep.mubr.f32.mxu0 %v1573
  %1809 = vmatmul.mubr.f32.gmra.mxu0 %v1571
  %v1810 = vpop.f32.mrf.mxu0
  %v1811 = vadd.f32 0.0, %v1810
  %v1812 = vpop.f32.mrf.mxu0
  %1813 = vmatprep.mubr.f32.mxu0 %v1581
  %1814 = vmatmul.mubr.f32.gmra.mxu0 %v1579
  %v1815 = vpop.f32.mrf.mxu0
  %v1816 = vadd.f32 0.0, %v1815
  %v1817 = vpop.f32.mrf.mxu0
  %1818 = vmatprep.mubr.f32.mxu0 %v1589
  %1819 = vmatmul.mubr.f32.gmra.mxu0 %v1587
  %v1820 = vpop.f32.mrf.mxu0
  %v1821 = vadd.f32 0.0, %v1820
  %v1822 = vpop.f32.mrf.mxu0
  %1823 = vmatprep.mubr.f32.mxu0 %v1597
  %1824 = vmatmul.mubr.f32.gmra.mxu0 %v1595
  %v1825 = vpop.f32.mrf.mxu0
  %v1826 = vadd.f32 0.0, %v1825
  %v1827 = vpop.f32.mrf.mxu0
  %1828 = vmatprep.mubr.f32.mxu0 %v1605
  %1829 = vmatmul.mubr.f32.gmra.mxu0 %v1603
  %v1830 = vpop.f32.mrf.mxu0
  %v1831 = vadd.f32 0.0, %v1830
  %v1832 = vpop.f32.mrf.mxu0
  %1833 = vmatprep.mubr.f32.mxu0 %v1613
  %1834 = vmatmul.mubr.f32.gmra.mxu0 %v1611
  %v1835 = vpop.f32.mrf.mxu0
  %v1836 = vadd.f32 0.0, %v1835
  %v1837 = vpop.f32.mrf.mxu0
  %1838 = vmatprep.mubr.f32.mxu0 %v1621
  %1839 = vmatmul.mubr.f32.gmra.mxu0 %v1619
  %v1840 = vpop.f32.mrf.mxu0
  %v1841 = vadd.f32 0.0, %v1840
  %v1842 = vpop.f32.mrf.mxu0
  %1843 = vmatprep.mubr.f32.mxu0 %v1629
  %1844 = vmatmul.mubr.f32.gmra.mxu0 %v1627
  %v1845 = vpop.f32.mrf.mxu0
  %v1846 = vadd.f32 0.0, %v1845
  %v1847 = vpop.f32.mrf.mxu0
  %1848 = vmatprep.mubr.f32.mxu0 %v1637
  %1849 = vmatmul.mubr.f32.gmra.mxu0 %v1635
  %v1850 = vpop.f32.mrf.mxu0
  %v1851 = vadd.f32 0.0, %v1850
  %v1852 = vpop.f32.mrf.mxu0
  %1853 = vmatprep.mubr.f32.mxu0 %v1645
  %1854 = vmatmul.mubr.f32.gmra.mxu0 %v1643
  %v1855 = vpop.f32.mrf.mxu0
  %v1856 = vadd.f32 0.0, %v1855
  %v1857 = vpop.f32.mrf.mxu0
  %1858 = vdwg.mxu0
  %1859 = vmatprep.subr.mxu0 0.0
  %1860 = vmatpush1.msra.mxu0 %v1697
  %1861 = vmatprep.subr.mxu0 0.0
  %1862 = vmatpush1.msra.mxu0 %v1696
  %1863 = vmatprep.subr.mxu0 0.0
  %1864 = vmatpush1.msra.mxu0 %v1695
  %1865 = vmatprep.subr.mxu0 0.0
  %1866 = vmatpush1.msra.mxu0 %v1694
  %1867 = vmatprep.subr.mxu0 0.0
  %1868 = vmatpush1.msra.mxu0 %v1693
  %1869 = vmatprep.subr.mxu0 0.0
  %1870 = vmatpush1.msra.mxu0 %v1692
  %1871 = vmatprep.subr.mxu0 0.0
  %1872 = vmatpush1.msra.mxu0 %v1691
  %1873 = vmatprep.subr.mxu0 0.0
  %1874 = vmatpush1.msra.mxu0 %v1690
  %1875 = vmatprep.subr.mxu0 0.0
  %1876 = vmatpush1.msra.mxu0 %v1689
  %1877 = vmatprep.subr.mxu0 0.0
  %1878 = vmatpush1.msra.mxu0 %v1688
  %1879 = vmatprep.subr.mxu0 0.0
  %1880 = vmatpush1.msra.mxu0 %v1687
  %1881 = vmatprep.subr.mxu0 0.0
  %1882 = vmatpush1.msra.mxu0 %v1686
  %1883 = vmatprep.subr.mxu0 0.0
  %1884 = vmatpush1.msra.mxu0 %v1685
  %1885 = vmatprep.subr.mxu0 0.0
  %1886 = vmatpush1.msra.mxu0 %v1684
  %1887 = vmatprep.subr.mxu0 0.0
  %1888 = vmatpush1.msra.mxu0 %v1683
  %1889 = vmatprep.subr.mxu0 0.0
  %1890 = vmatpush1.msra.mxu0 %v1682
  %1891 = vmatprep.subr.mxu0 0.0
  %1892 = vmatpush2.msra.mxu0 %v1713
  %1893 = vmatprep.subr.mxu0 0.0
  %1894 = vmatpush2.msra.mxu0 %v1712
  %1895 = vmatprep.subr.mxu0 0.0
  %1896 = vmatpush2.msra.mxu0 %v1711
  %1897 = vmatprep.subr.mxu0 0.0
  %1898 = vmatpush2.msra.mxu0 %v1710
  %1899 = vmatprep.subr.mxu0 0.0
  %1900 = vmatpush2.msra.mxu0 %v1709
  %1901 = vmatprep.subr.mxu0 0.0
  %1902 = vmatpush2.msra.mxu0 %v1708
  %1903 = vmatprep.subr.mxu0 0.0
  %1904 = vmatpush2.msra.mxu0 %v1707
  %1905 = vmatprep.subr.mxu0 0.0
  %1906 = vmatpush2.msra.mxu0 %v1706
  %1907 = vmatprep.subr.mxu0 0.0
  %1908 = vmatpush2.msra.mxu0 %v1705
  %1909 = vmatprep.subr.mxu0 0.0
  %1910 = vmatpush2.msra.mxu0 %v1704
  %1911 = vmatprep.subr.mxu0 0.0
  %1912 = vmatpush2.msra.mxu0 %v1703
  %1913 = vmatprep.subr.mxu0 0.0
  %1914 = vmatpush2.msra.mxu0 %v1702
  %1915 = vmatprep.subr.mxu0 0.0
  %1916 = vmatpush2.msra.mxu0 %v1701
  %1917 = vmatprep.subr.mxu0 0.0
  %1918 = vmatpush2.msra.mxu0 %v1700
  %1919 = vmatprep.subr.mxu0 0.0
  %1920 = vmatpush2.msra.mxu0 %v1699
  %1921 = vmatprep.subr.mxu0 0.0
  %1922 = vmatpush2.msra.mxu0 %v1698
  %1923 = vmatprep.mubr.f32.mxu0 %v1529
  %1924 = vmatmul.mubr.f32.gmra.mxu0 %v1527
  %v1925 = vpop.f32.mrf.mxu0
  %v1926 = vadd.f32 %v1781, %v1925
  %v1927 = vpop.f32.mrf.mxu0
  %1928 = vmatprep.mubr.f32.mxu0 %v1537
  %1929 = vmatmul.mubr.f32.gmra.mxu0 %v1535
  %v1930 = vpop.f32.mrf.mxu0
  %v1931 = vadd.f32 %v1786, %v1930
  %v1932 = vpop.f32.mrf.mxu0
  %1933 = vmatprep.mubr.f32.mxu0 %v1545
  %1934 = vmatmul.mubr.f32.gmra.mxu0 %v1543
  %v1935 = vpop.f32.mrf.mxu0
  %v1936 = vadd.f32 %v1791, %v1935
  %v1937 = vpop.f32.mrf.mxu0
  %1938 = vmatprep.mubr.f32.mxu0 %v1553
  %1939 = vmatmul.mubr.f32.gmra.mxu0 %v1551
  %v1940 = vpop.f32.mrf.mxu0
  %v1941 = vadd.f32 %v1796, %v1940
  %v1942 = vpop.f32.mrf.mxu0
  %1943 = vmatprep.mubr.f32.mxu0 %v1561
  %1944 = vmatmul.mubr.f32.gmra.mxu0 %v1559
  %v1945 = vpop.f32.mrf.mxu0
  %v1946 = vadd.f32 %v1801, %v1945
  %v1947 = vpop.f32.mrf.mxu0
  %1948 = vmatprep.mubr.f32.mxu0 %v1569
  %1949 = vmatmul.mubr.f32.gmra.mxu0 %v1567
  %v1950 = vpop.f32.mrf.mxu0
  %v1951 = vadd.f32 %v1806, %v1950
  %v1952 = vpop.f32.mrf.mxu0
  %1953 = vmatprep.mubr.f32.mxu0 %v1577
  %1954 = vmatmul.mubr.f32.gmra.mxu0 %v1575
  %v1955 = vpop.f32.mrf.mxu0
  %v1956 = vadd.f32 %v1811, %v1955
  %v1957 = vpop.f32.mrf.mxu0
  %1958 = vmatprep.mubr.f32.mxu0 %v1585
  %1959 = vmatmul.mubr.f32.gmra.mxu0 %v1583
  %v1960 = vpop.f32.mrf.mxu0
  %v1961 = vadd.f32 %v1816, %v1960
  %v1962 = vpop.f32.mrf.mxu0
  %1963 = vmatprep.mubr.f32.mxu0 %v1593
  %1964 = vmatmul.mubr.f32.gmra.mxu0 %v1591
  %v1965 = vpop.f32.mrf.mxu0
  %v1966 = vadd.f32 %v1821, %v1965
  %v1967 = vpop.f32.mrf.mxu0
  %1968 = vmatprep.mubr.f32.mxu0 %v1601
  %1969 = vmatmul.mubr.f32.gmra.mxu0 %v1599
  %v1970 = vpop.f32.mrf.mxu0
  %v1971 = vadd.f32 %v1826, %v1970
  %v1972 = vpop.f32.mrf.mxu0
  %1973 = vmatprep.mubr.f32.mxu0 %v1609
  %1974 = vmatmul.mubr.f32.gmra.mxu0 %v1607
  %v1975 = vpop.f32.mrf.mxu0
  %v1976 = vadd.f32 %v1831, %v1975
  %v1977 = vpop.f32.mrf.mxu0
  %1978 = vmatprep.mubr.f32.mxu0 %v1617
  %1979 = vmatmul.mubr.f32.gmra.mxu0 %v1615
  %v1980 = vpop.f32.mrf.mxu0
  %v1981 = vadd.f32 %v1836, %v1980
  %v1982 = vpop.f32.mrf.mxu0
  %1983 = vmatprep.mubr.f32.mxu0 %v1625
  %1984 = vmatmul.mubr.f32.gmra.mxu0 %v1623
  %v1985 = vpop.f32.mrf.mxu0
  %v1986 = vadd.f32 %v1841, %v1985
  %v1987 = vpop.f32.mrf.mxu0
  %1988 = vmatprep.mubr.f32.mxu0 %v1633
  %1989 = vmatmul.mubr.f32.gmra.mxu0 %v1631
  %v1990 = vpop.f32.mrf.mxu0
  %v1991 = vadd.f32 %v1846, %v1990
  %v1992 = vpop.f32.mrf.mxu0
  %1993 = vmatprep.mubr.f32.mxu0 %v1641
  %1994 = vmatmul.mubr.f32.gmra.mxu0 %v1639
  %v1995 = vpop.f32.mrf.mxu0
  %v1996 = vadd.f32 %v1851, %v1995
  %v1997 = vpop.f32.mrf.mxu0
  %1998 = vmatprep.mubr.f32.mxu0 %v1649
  %1999 = vmatmul.mubr.f32.gmra.mxu0 %v1647
  %v2000 = vpop.f32.mrf.mxu0
  %v2001 = vadd.f32 %v1856, %v2000
  %v2002 = vpop.f32.mrf.mxu0
  %2003 = vdwg.mxu0
  %v2004 = vrcp.pop %v1926
  %v2005 = vmul.f32 1.0, %v2004
  %v2006 = vrcp.pop %v1931
  %v2007 = vmul.f32 1.0, %v2006
  %v2008 = vrcp.pop %v1936
  %v2009 = vmul.f32 1.0, %v2008
  %v2010 = vrcp.pop %v1941
  %v2011 = vmul.f32 1.0, %v2010
  %v2012 = vrcp.pop %v1946
  %v2013 = vmul.f32 1.0, %v2012
  %v2014 = vrcp.pop %v1951
  %v2015 = vmul.f32 1.0, %v2014
  %v2016 = vrcp.pop %v1956
  %v2017 = vmul.f32 1.0, %v2016
  %v2018 = vrcp.pop %v1961
  %v2019 = vmul.f32 1.0, %v2018
  %v2020 = vrcp.pop %v1966
  %v2021 = vmul.f32 1.0, %v2020
  %v2022 = vrcp.pop %v1971
  %v2023 = vmul.f32 1.0, %v2022
  %v2024 = vrcp.pop %v1976
  %v2025 = vmul.f32 1.0, %v2024
  %v2026 = vrcp.pop %v1981
  %v2027 = vmul.f32 1.0, %v2026
  %v2028 = vrcp.pop %v1986
  %v2029 = vmul.f32 1.0, %v2028
  %v2030 = vrcp.pop %v1991
  %v2031 = vmul.f32 1.0, %v2030
  %v2032 = vrcp.pop %v1996
  %v2033 = vmul.f32 1.0, %v2032
  %v2034 = vrcp.pop %v2001
  %v2035 = vmul.f32 1.0, %v2034
  %vm2036 = vcmask 31744
  %v2038 = vsel %vm2036, %v2005, 0
  %v2041 = vsel %vm2036, %v2007, 0
  %v2044 = vsel %vm2036, %v2009, 0
  %v2047 = vsel %vm2036, %v2011, 0
  %v2050 = vsel %vm2036, %v2013, 0
  %v2053 = vsel %vm2036, %v2015, 0
  %v2056 = vsel %vm2036, %v2017, 0
  %v2059 = vsel %vm2036, %v2019, 0
  %v2062 = vsel %vm2036, %v2021, 0
  %v2065 = vsel %vm2036, %v2023, 0
  %v2068 = vsel %vm2036, %v2025, 0
  %v2071 = vsel %vm2036, %v2027, 0
  %v2074 = vsel %vm2036, %v2029, 0
  %v2077 = vsel %vm2036, %v2031, 0
  %v2080 = vsel %vm2036, %v2033, 0
  %v2083 = vsel %vm2036, %v2035, 0
  %v2086 = vsel %vm2036, %v1650, 0
  %v2089 = vsel %vm2036, %v1651, 0
  %v2092 = vsel %vm2036, %v1652, 0
  %v2095 = vsel %vm2036, %v1653, 0
  %v2098 = vsel %vm2036, %v1654, 0
  %v2101 = vsel %vm2036, %v1655, 0
  %v2104 = vsel %vm2036, %v1656, 0
  %v2107 = vsel %vm2036, %v1657, 0
  %v2110 = vsel %vm2036, %v1658, 0
  %v2113 = vsel %vm2036, %v1659, 0
  %v2116 = vsel %vm2036, %v1660, 0
  %v2119 = vsel %vm2036, %v1661, 0
  %v2122 = vsel %vm2036, %v1662, 0
  %v2125 = vsel %vm2036, %v1663, 0
  %v2128 = vsel %vm2036, %v1664, 0
  %v2131 = vsel %vm2036, %v1665, 0
  %v2134 = vsel %vm2036, %v1666, 0
  %v2137 = vsel %vm2036, %v1667, 0
  %v2140 = vsel %vm2036, %v1668, 0
  %v2143 = vsel %vm2036, %v1669, 0
  %v2146 = vsel %vm2036, %v1670, 0
  %v2149 = vsel %vm2036, %v1671, 0
  %v2152 = vsel %vm2036, %v1672, 0
  %v2155 = vsel %vm2036, %v1673, 0
  %v2158 = vsel %vm2036, %v1674, 0
  %v2161 = vsel %vm2036, %v1675, 0
  %v2164 = vsel %vm2036, %v1676, 0
  %v2167 = vsel %vm2036, %v1677, 0
  %v2170 = vsel %vm2036, %v1678, 0
  %v2173 = vsel %vm2036, %v1679, 0
  %v2176 = vsel %vm2036, %v1680, 0
  %v2179 = vsel %vm2036, %v1681, 0
  %v2182 = vsel %vm2036, %v1682, 0
  %v2185 = vsel %vm2036, %v1683, 0
  %v2188 = vsel %vm2036, %v1684, 0
  %v2191 = vsel %vm2036, %v1685, 0
  %v2194 = vsel %vm2036, %v1686, 0
  %v2197 = vsel %vm2036, %v1687, 0
  %v2200 = vsel %vm2036, %v1688, 0
  %v2203 = vsel %vm2036, %v1689, 0
  %v2206 = vsel %vm2036, %v1690, 0
  %v2209 = vsel %vm2036, %v1691, 0
  %v2212 = vsel %vm2036, %v1692, 0
  %v2215 = vsel %vm2036, %v1693, 0
  %v2218 = vsel %vm2036, %v1694, 0
  %v2221 = vsel %vm2036, %v1695, 0
  %v2224 = vsel %vm2036, %v1696, 0
  %v2227 = vsel %vm2036, %v1697, 0
  %v2230 = vsel %vm2036, %v1698, 0
  %v2233 = vsel %vm2036, %v1699, 0
  %v2236 = vsel %vm2036, %v1700, 0
  %v2239 = vsel %vm2036, %v1701, 0
  %v2242 = vsel %vm2036, %v1702, 0
  %v2245 = vsel %vm2036, %v1703, 0
  %v2248 = vsel %vm2036, %v1704, 0
  %v2251 = vsel %vm2036, %v1705, 0
  %v2254 = vsel %vm2036, %v1706, 0
  %v2257 = vsel %vm2036, %v1707, 0
  %v2260 = vsel %vm2036, %v1708, 0
  %v2263 = vsel %vm2036, %v1709, 0
  %v2266 = vsel %vm2036, %v1710, 0
  %v2269 = vsel %vm2036, %v1711, 0
  %v2272 = vsel %vm2036, %v1712, 0
  %v2275 = vsel %vm2036, %v1713, 0
  %2277 = vmatprep.subr.mxu0 0.0
  %2278 = vmatpush1.xpose.msra.mxu0 %v2131
  %2279 = vmatprep.subr.mxu0 0.0
  %2280 = vmatpush1.xpose.msra.mxu0 %v2128
  %2281 = vmatprep.subr.mxu0 0.0
  %2282 = vmatpush1.xpose.msra.mxu0 %v2125
  %2283 = vmatprep.subr.mxu0 0.0
  %2284 = vmatpush1.xpose.msra.mxu0 %v2122
  %2285 = vmatprep.subr.mxu0 0.0
  %2286 = vmatpush1.xpose.msra.mxu0 %v2119
  %2287 = vmatprep.subr.mxu0 0.0
  %2288 = vmatpush1.xpose.msra.mxu0 %v2116
  %2289 = vmatprep.subr.mxu0 0.0
  %2290 = vmatpush1.xpose.msra.mxu0 %v2113
  %2291 = vmatprep.subr.mxu0 0.0
  %2292 = vmatpush1.xpose.msra.mxu0 %v2110
  %2293 = vmatprep.subr.mxu0 0.0
  %2294 = vmatpush1.xpose.msra.mxu0 %v2107
  %2295 = vmatprep.subr.mxu0 0.0
  %2296 = vmatpush1.xpose.msra.mxu0 %v2104
  %2297 = vmatprep.subr.mxu0 0.0
  %2298 = vmatpush1.xpose.msra.mxu0 %v2101
  %2299 = vmatprep.subr.mxu0 0.0
  %2300 = vmatpush1.xpose.msra.mxu0 %v2098
  %2301 = vmatprep.subr.mxu0 0.0
  %2302 = vmatpush1.xpose.msra.mxu0 %v2095
  %2303 = vmatprep.subr.mxu0 0.0
  %2304 = vmatpush1.xpose.msra.mxu0 %v2092
  %2305 = vmatprep.subr.mxu0 0.0
  %2306 = vmatpush1.xpose.msra.mxu0 %v2089
  %2307 = vmatprep.subr.mxu0 0.0
  %2308 = vmatpush1.xpose.msra.mxu0 %v2086
  %2309 = vmatprep.subr.mxu0 0.0
  %2310 = vmatpush2.xpose.msra.mxu0 %v2179
  %2311 = vmatprep.subr.mxu0 0.0
  %2312 = vmatpush2.xpose.msra.mxu0 %v2176
  %2313 = vmatprep.subr.mxu0 0.0
  %2314 = vmatpush2.xpose.msra.mxu0 %v2173
  %2315 = vmatprep.subr.mxu0 0.0
  %2316 = vmatpush2.xpose.msra.mxu0 %v2170
  %2317 = vmatprep.subr.mxu0 0.0
  %2318 = vmatpush2.xpose.msra.mxu0 %v2167
  %2319 = vmatprep.subr.mxu0 0.0
  %2320 = vmatpush2.xpose.msra.mxu0 %v2164
  %2321 = vmatprep.subr.mxu0 0.0
  %2322 = vmatpush2.xpose.msra.mxu0 %v2161
  %2323 = vmatprep.subr.mxu0 0.0
  %2324 = vmatpush2.xpose.msra.mxu0 %v2158
  %2325 = vmatprep.subr.mxu0 0.0
  %2326 = vmatpush2.xpose.msra.mxu0 %v2155
  %2327 = vmatprep.subr.mxu0 0.0
  %2328 = vmatpush2.xpose.msra.mxu0 %v2152
  %2329 = vmatprep.subr.mxu0 0.0
  %2330 = vmatpush2.xpose.msra.mxu0 %v2149
  %2331 = vmatprep.subr.mxu0 0.0
  %2332 = vmatpush2.xpose.msra.mxu0 %v2146
  %2333 = vmatprep.subr.mxu0 0.0
  %2334 = vmatpush2.xpose.msra.mxu0 %v2143
  %2335 = vmatprep.subr.mxu0 0.0
  %2336 = vmatpush2.xpose.msra.mxu0 %v2140
  %2337 = vmatprep.subr.mxu0 0.0
  %2338 = vmatpush2.xpose.msra.mxu0 %v2137
  %2339 = vmatprep.subr.mxu0 0.0
  %2340 = vmatpush2.xpose.msra.mxu0 %v2134
  %2341 = vmatprep.mubr.f32.mxu0 0.0
  %2342 = vmatmul.mubr.f32.gmra.mxu0 %v2038
  %v2343 = vpop.f32.mrf.mxu0
  %v2344 = vadd.f32 0.0, %v2343
  %v2345 = vpop.f32.mrf.mxu0
  %v2346 = vadd.f32 0.0, %v2345
  %2347 = vmatprep.mubr.f32.mxu0 0.0
  %2348 = vmatmul.mubr.f32.gmra.mxu0 %v2041
  %v2349 = vpop.f32.mrf.mxu0
  %v2350 = vadd.f32 0.0, %v2349
  %v2351 = vpop.f32.mrf.mxu0
  %v2352 = vadd.f32 0.0, %v2351
  %2353 = vmatprep.mubr.f32.mxu0 0.0
  %2354 = vmatmul.mubr.f32.gmra.mxu0 %v2044
  %v2355 = vpop.f32.mrf.mxu0
  %v2356 = vadd.f32 0.0, %v2355
  %v2357 = vpop.f32.mrf.mxu0
  %v2358 = vadd.f32 0.0, %v2357
  %2359 = vmatprep.mubr.f32.mxu0 0.0
  %2360 = vmatmul.mubr.f32.gmra.mxu0 %v2047
  %v2361 = vpop.f32.mrf.mxu0
  %v2362 = vadd.f32 0.0, %v2361
  %v2363 = vpop.f32.mrf.mxu0
  %v2364 = vadd.f32 0.0, %v2363
  %2365 = vmatprep.mubr.f32.mxu0 0.0
  %2366 = vmatmul.mubr.f32.gmra.mxu0 %v2050
  %v2367 = vpop.f32.mrf.mxu0
  %v2368 = vadd.f32 0.0, %v2367
  %v2369 = vpop.f32.mrf.mxu0
  %v2370 = vadd.f32 0.0, %v2369
  %2371 = vmatprep.mubr.f32.mxu0 0.0
  %2372 = vmatmul.mubr.f32.gmra.mxu0 %v2053
  %v2373 = vpop.f32.mrf.mxu0
  %v2374 = vadd.f32 0.0, %v2373
  %v2375 = vpop.f32.mrf.mxu0
  %v2376 = vadd.f32 0.0, %v2375
  %2377 = vmatprep.mubr.f32.mxu0 0.0
  %2378 = vmatmul.mubr.f32.gmra.mxu0 %v2056
  %v2379 = vpop.f32.mrf.mxu0
  %v2380 = vadd.f32 0.0, %v2379
  %v2381 = vpop.f32.mrf.mxu0
  %v2382 = vadd.f32 0.0, %v2381
  %2383 = vmatprep.mubr.f32.mxu0 0.0
  %2384 = vmatmul.mubr.f32.gmra.mxu0 %v2059
  %v2385 = vpop.f32.mrf.mxu0
  %v2386 = vadd.f32 0.0, %v2385
  %v2387 = vpop.f32.mrf.mxu0
  %v2388 = vadd.f32 0.0, %v2387
  %2389 = vmatprep.mubr.f32.mxu0 0.0
  %2390 = vmatmul.mubr.f32.gmra.mxu0 %v2062
  %v2391 = vpop.f32.mrf.mxu0
  %v2392 = vadd.f32 0.0, %v2391
  %v2393 = vpop.f32.mrf.mxu0
  %v2394 = vadd.f32 0.0, %v2393
  %2395 = vmatprep.mubr.f32.mxu0 0.0
  %2396 = vmatmul.mubr.f32.gmra.mxu0 %v2065
  %v2397 = vpop.f32.mrf.mxu0
  %v2398 = vadd.f32 0.0, %v2397
  %v2399 = vpop.f32.mrf.mxu0
  %v2400 = vadd.f32 0.0, %v2399
  %2401 = vmatprep.mubr.f32.mxu0 0.0
  %2402 = vmatmul.mubr.f32.gmra.mxu0 %v2068
  %v2403 = vpop.f32.mrf.mxu0
  %v2404 = vadd.f32 0.0, %v2403
  %v2405 = vpop.f32.mrf.mxu0
  %v2406 = vadd.f32 0.0, %v2405
  %2407 = vmatprep.mubr.f32.mxu0 0.0
  %2408 = vmatmul.mubr.f32.gmra.mxu0 %v2071
  %v2409 = vpop.f32.mrf.mxu0
  %v2410 = vadd.f32 0.0, %v2409
  %v2411 = vpop.f32.mrf.mxu0
  %v2412 = vadd.f32 0.0, %v2411
  %2413 = vmatprep.mubr.f32.mxu0 0.0
  %2414 = vmatmul.mubr.f32.gmra.mxu0 %v2074
  %v2415 = vpop.f32.mrf.mxu0
  %v2416 = vadd.f32 0.0, %v2415
  %v2417 = vpop.f32.mrf.mxu0
  %v2418 = vadd.f32 0.0, %v2417
  %2419 = vmatprep.mubr.f32.mxu0 0.0
  %2420 = vmatmul.mubr.f32.gmra.mxu0 %v2077
  %v2421 = vpop.f32.mrf.mxu0
  %v2422 = vadd.f32 0.0, %v2421
  %v2423 = vpop.f32.mrf.mxu0
  %v2424 = vadd.f32 0.0, %v2423
  %2425 = vmatprep.mubr.f32.mxu0 0.0
  %2426 = vmatmul.mubr.f32.gmra.mxu0 %v2080
  %v2427 = vpop.f32.mrf.mxu0
  %v2428 = vadd.f32 0.0, %v2427
  %v2429 = vpop.f32.mrf.mxu0
  %v2430 = vadd.f32 0.0, %v2429
  %2431 = vmatprep.mubr.f32.mxu0 0.0
  %2432 = vmatmul.mubr.f32.gmra.mxu0 %v2083
  %v2433 = vpop.f32.mrf.mxu0
  %v2434 = vadd.f32 0.0, %v2433
  %v2435 = vpop.f32.mrf.mxu0
  %v2436 = vadd.f32 0.0, %v2435
  %2437 = vdwg.mxu0
  %2438 = vmatprep.subr.mxu0 0.0
  %2439 = vmatpush1.xpose.msra.mxu0 %v2227
  %2440 = vmatprep.subr.mxu0 0.0
  %2441 = vmatpush1.xpose.msra.mxu0 %v2224
  %2442 = vmatprep.subr.mxu0 0.0
  %2443 = vmatpush1.xpose.msra.mxu0 %v2221
  %2444 = vmatprep.subr.mxu0 0.0
  %2445 = vmatpush1.xpose.msra.mxu0 %v2218
  %2446 = vmatprep.subr.mxu0 0.0
  %2447 = vmatpush1.xpose.msra.mxu0 %v2215
  %2448 = vmatprep.subr.mxu0 0.0
  %2449 = vmatpush1.xpose.msra.mxu0 %v2212
  %2450 = vmatprep.subr.mxu0 0.0
  %2451 = vmatpush1.xpose.msra.mxu0 %v2209
  %2452 = vmatprep.subr.mxu0 0.0
  %2453 = vmatpush1.xpose.msra.mxu0 %v2206
  %2454 = vmatprep.subr.mxu0 0.0
  %2455 = vmatpush1.xpose.msra.mxu0 %v2203
  %2456 = vmatprep.subr.mxu0 0.0
  %2457 = vmatpush1.xpose.msra.mxu0 %v2200
  %2458 = vmatprep.subr.mxu0 0.0
  %2459 = vmatpush1.xpose.msra.mxu0 %v2197
  %2460 = vmatprep.subr.mxu0 0.0
  %2461 = vmatpush1.xpose.msra.mxu0 %v2194
  %2462 = vmatprep.subr.mxu0 0.0
  %2463 = vmatpush1.xpose.msra.mxu0 %v2191
  %2464 = vmatprep.subr.mxu0 0.0
  %2465 = vmatpush1.xpose.msra.mxu0 %v2188
  %2466 = vmatprep.subr.mxu0 0.0
  %2467 = vmatpush1.xpose.msra.mxu0 %v2185
  %2468 = vmatprep.subr.mxu0 0.0
  %2469 = vmatpush1.xpose.msra.mxu0 %v2182
  %2470 = vmatprep.subr.mxu0 0.0
  %2471 = vmatpush2.xpose.msra.mxu0 %v2275
  %2472 = vmatprep.subr.mxu0 0.0
  %2473 = vmatpush2.xpose.msra.mxu0 %v2272
  %2474 = vmatprep.subr.mxu0 0.0
  %2475 = vmatpush2.xpose.msra.mxu0 %v2269
  %2476 = vmatprep.subr.mxu0 0.0
  %2477 = vmatpush2.xpose.msra.mxu0 %v2266
  %2478 = vmatprep.subr.mxu0 0.0
  %2479 = vmatpush2.xpose.msra.mxu0 %v2263
  %2480 = vmatprep.subr.mxu0 0.0
  %2481 = vmatpush2.xpose.msra.mxu0 %v2260
  %2482 = vmatprep.subr.mxu0 0.0
  %2483 = vmatpush2.xpose.msra.mxu0 %v2257
  %2484 = vmatprep.subr.mxu0 0.0
  %2485 = vmatpush2.xpose.msra.mxu0 %v2254
  %2486 = vmatprep.subr.mxu0 0.0
  %2487 = vmatpush2.xpose.msra.mxu0 %v2251
  %2488 = vmatprep.subr.mxu0 0.0
  %2489 = vmatpush2.xpose.msra.mxu0 %v2248
  %2490 = vmatprep.subr.mxu0 0.0
  %2491 = vmatpush2.xpose.msra.mxu0 %v2245
  %2492 = vmatprep.subr.mxu0 0.0
  %2493 = vmatpush2.xpose.msra.mxu0 %v2242
  %2494 = vmatprep.subr.mxu0 0.0
  %2495 = vmatpush2.xpose.msra.mxu0 %v2239
  %2496 = vmatprep.subr.mxu0 0.0
  %2497 = vmatpush2.xpose.msra.mxu0 %v2236
  %2498 = vmatprep.subr.mxu0 0.0
  %2499 = vmatpush2.xpose.msra.mxu0 %v2233
  %2500 = vmatprep.subr.mxu0 0.0
  %2501 = vmatpush2.xpose.msra.mxu0 %v2230
  %2502 = vmatprep.mubr.f32.mxu0 0.0
  %2503 = vmatmul.mubr.f32.gmra.mxu0 %v2038
  %v2504 = vpop.f32.mrf.mxu0
  %v2505 = vadd.f32 0.0, %v2504
  %v2506 = vpop.f32.mrf.mxu0
  %v2507 = vadd.f32 0.0, %v2506
  %2508 = vmatprep.mubr.f32.mxu0 0.0
  %2509 = vmatmul.mubr.f32.gmra.mxu0 %v2041
  %v2510 = vpop.f32.mrf.mxu0
  %v2511 = vadd.f32 0.0, %v2510
  %v2512 = vpop.f32.mrf.mxu0
  %v2513 = vadd.f32 0.0, %v2512
  %2514 = vmatprep.mubr.f32.mxu0 0.0
  %2515 = vmatmul.mubr.f32.gmra.mxu0 %v2044
  %v2516 = vpop.f32.mrf.mxu0
  %v2517 = vadd.f32 0.0, %v2516
  %v2518 = vpop.f32.mrf.mxu0
  %v2519 = vadd.f32 0.0, %v2518
  %2520 = vmatprep.mubr.f32.mxu0 0.0
  %2521 = vmatmul.mubr.f32.gmra.mxu0 %v2047
  %v2522 = vpop.f32.mrf.mxu0
  %v2523 = vadd.f32 0.0, %v2522
  %v2524 = vpop.f32.mrf.mxu0
  %v2525 = vadd.f32 0.0, %v2524
  %2526 = vmatprep.mubr.f32.mxu0 0.0
  %2527 = vmatmul.mubr.f32.gmra.mxu0 %v2050
  %v2528 = vpop.f32.mrf.mxu0
  %v2529 = vadd.f32 0.0, %v2528
  %v2530 = vpop.f32.mrf.mxu0
  %v2531 = vadd.f32 0.0, %v2530
  %2532 = vmatprep.mubr.f32.mxu0 0.0
  %2533 = vmatmul.mubr.f32.gmra.mxu0 %v2053
  %v2534 = vpop.f32.mrf.mxu0
  %v2535 = vadd.f32 0.0, %v2534
  %v2536 = vpop.f32.mrf.mxu0
  %v2537 = vadd.f32 0.0, %v2536
  %2538 = vmatprep.mubr.f32.mxu0 0.0
  %2539 = vmatmul.mubr.f32.gmra.mxu0 %v2056
  %v2540 = vpop.f32.mrf.mxu0
  %v2541 = vadd.f32 0.0, %v2540
  %v2542 = vpop.f32.mrf.mxu0
  %v2543 = vadd.f32 0.0, %v2542
  %2544 = vmatprep.mubr.f32.mxu0 0.0
  %2545 = vmatmul.mubr.f32.gmra.mxu0 %v2059
  %v2546 = vpop.f32.mrf.mxu0
  %v2547 = vadd.f32 0.0, %v2546
  %v2548 = vpop.f32.mrf.mxu0
  %v2549 = vadd.f32 0.0, %v2548
  %2550 = vmatprep.mubr.f32.mxu0 0.0
  %2551 = vmatmul.mubr.f32.gmra.mxu0 %v2062
  %v2552 = vpop.f32.mrf.mxu0
  %v2553 = vadd.f32 0.0, %v2552
  %v2554 = vpop.f32.mrf.mxu0
  %v2555 = vadd.f32 0.0, %v2554
  %2556 = vmatprep.mubr.f32.mxu0 0.0
  %2557 = vmatmul.mubr.f32.gmra.mxu0 %v2065
  %v2558 = vpop.f32.mrf.mxu0
  %v2559 = vadd.f32 0.0, %v2558
  %v2560 = vpop.f32.mrf.mxu0
  %v2561 = vadd.f32 0.0, %v2560
  %2562 = vmatprep.mubr.f32.mxu0 0.0
  %2563 = vmatmul.mubr.f32.gmra.mxu0 %v2068
  %v2564 = vpop.f32.mrf.mxu0
  %v2565 = vadd.f32 0.0, %v2564
  %v2566 = vpop.f32.mrf.mxu0
  %v2567 = vadd.f32 0.0, %v2566
  %2568 = vmatprep.mubr.f32.mxu0 0.0
  %2569 = vmatmul.mubr.f32.gmra.mxu0 %v2071
  %v2570 = vpop.f32.mrf.mxu0
  %v2571 = vadd.f32 0.0, %v2570
  %v2572 = vpop.f32.mrf.mxu0
  %v2573 = vadd.f32 0.0, %v2572
  %2574 = vmatprep.mubr.f32.mxu0 0.0
  %2575 = vmatmul.mubr.f32.gmra.mxu0 %v2074
  %v2576 = vpop.f32.mrf.mxu0
  %v2577 = vadd.f32 0.0, %v2576
  %v2578 = vpop.f32.mrf.mxu0
  %v2579 = vadd.f32 0.0, %v2578
  %2580 = vmatprep.mubr.f32.mxu0 0.0
  %2581 = vmatmul.mubr.f32.gmra.mxu0 %v2077
  %v2582 = vpop.f32.mrf.mxu0
  %v2583 = vadd.f32 0.0, %v2582
  %v2584 = vpop.f32.mrf.mxu0
  %v2585 = vadd.f32 0.0, %v2584
  %2586 = vmatprep.mubr.f32.mxu0 0.0
  %2587 = vmatmul.mubr.f32.gmra.mxu0 %v2080
  %v2588 = vpop.f32.mrf.mxu0
  %v2589 = vadd.f32 0.0, %v2588
  %v2590 = vpop.f32.mrf.mxu0
  %v2591 = vadd.f32 0.0, %v2590
  %2592 = vmatprep.mubr.f32.mxu0 0.0
  %2593 = vmatmul.mubr.f32.gmra.mxu0 %v2083
  %v2594 = vpop.f32.mrf.mxu0
  %v2595 = vadd.f32 0.0, %v2594
  %v2596 = vpop.f32.mrf.mxu0
  %v2597 = vadd.f32 0.0, %v2596
  %2598 = vdwg.mxu0
  %v2599 = vmul.f32 %v1523, %v2344
  %v2600 = vmul.f32 %v1525, %v2346
  %v2601 = vmul.f32 %v1527, %v2505
  %v2602 = vmul.f32 %v1529, %v2507
  %v2603 = vmul.f32 %v1531, %v2350
  %v2604 = vmul.f32 %v1533, %v2352
  %v2605 = vmul.f32 %v1535, %v2511
  %v2606 = vmul.f32 %v1537, %v2513
  %v2607 = vmul.f32 %v1539, %v2356
  %v2608 = vmul.f32 %v1541, %v2358
  %v2609 = vmul.f32 %v1543, %v2517
  %v2610 = vmul.f32 %v1545, %v2519
  %v2611 = vmul.f32 %v1547, %v2362
  %v2612 = vmul.f32 %v1549, %v2364
  %v2613 = vmul.f32 %v1551, %v2523
  %v2614 = vmul.f32 %v1553, %v2525
  %v2615 = vmul.f32 %v1555, %v2368
  %v2616 = vmul.f32 %v1557, %v2370
  %v2617 = vmul.f32 %v1559, %v2529
  %v2618 = vmul.f32 %v1561, %v2531
  %v2619 = vmul.f32 %v1563, %v2374
  %v2620 = vmul.f32 %v1565, %v2376
  %v2621 = vmul.f32 %v1567, %v2535
  %v2622 = vmul.f32 %v1569, %v2537
  %v2623 = vmul.f32 %v1571, %v2380
  %v2624 = vmul.f32 %v1573, %v2382
  %v2625 = vmul.f32 %v1575, %v2541
  %v2626 = vmul.f32 %v1577, %v2543
  %v2627 = vmul.f32 %v1579, %v2386
  %v2628 = vmul.f32 %v1581, %v2388
  %v2629 = vmul.f32 %v1583, %v2547
  %v2630 = vmul.f32 %v1585, %v2549
  %v2631 = vmul.f32 %v1587, %v2392
  %v2632 = vmul.f32 %v1589, %v2394
  %v2633 = vmul.f32 %v1591, %v2553
  %v2634 = vmul.f32 %v1593, %v2555
  %v2635 = vmul.f32 %v1595, %v2398
  %v2636 = vmul.f32 %v1597, %v2400
  %v2637 = vmul.f32 %v1599, %v2559
  %v2638 = vmul.f32 %v1601, %v2561
  %v2639 = vmul.f32 %v1603, %v2404
  %v2640 = vmul.f32 %v1605, %v2406
  %v2641 = vmul.f32 %v1607, %v2565
  %v2642 = vmul.f32 %v1609, %v2567
  %v2643 = vmul.f32 %v1611, %v2410
  %v2644 = vmul.f32 %v1613, %v2412
  %v2645 = vmul.f32 %v1615, %v2571
  %v2646 = vmul.f32 %v1617, %v2573
  %v2647 = vmul.f32 %v1619, %v2416
  %v2648 = vmul.f32 %v1621, %v2418
  %v2649 = vmul.f32 %v1623, %v2577
  %v2650 = vmul.f32 %v1625, %v2579
  %v2651 = vmul.f32 %v1627, %v2422
  %v2652 = vmul.f32 %v1629, %v2424
  %v2653 = vmul.f32 %v1631, %v2583
  %v2654 = vmul.f32 %v1633, %v2585
  %v2655 = vmul.f32 %v1635, %v2428
  %v2656 = vmul.f32 %v1637, %v2430
  %v2657 = vmul.f32 %v1639, %v2589
  %v2658 = vmul.f32 %v1641, %v2591
  %v2659 = vmul.f32 %v1643, %v2434
  %v2660 = vmul.f32 %v1645, %v2436
  %v2661 = vmul.f32 %v1647, %v2595
  %v2662 = vmul.f32 %v1649, %v2597
  %2663 = vmatprep.subr.mxu0 %v2660
  %2664 = vmatpush1.xpose.msra.mxu0 %v2659
  %2665 = vmatprep.subr.mxu0 %v2656
  %2666 = vmatpush1.xpose.msra.mxu0 %v2655
  %2667 = vmatprep.subr.mxu0 %v2652
  %2668 = vmatpush1.xpose.msra.mxu0 %v2651
  %2669 = vmatprep.subr.mxu0 %v2648
  %2670 = vmatpush1.xpose.msra.mxu0 %v2647
  %2671 = vmatprep.subr.mxu0 %v2644
  %2672 = vmatpush1.xpose.msra.mxu0 %v2643
  %2673 = vmatprep.subr.mxu0 %v2640
  %2674 = vmatpush1.xpose.msra.mxu0 %v2639
  %2675 = vmatprep.subr.mxu0 %v2636
  %2676 = vmatpush1.xpose.msra.mxu0 %v2635
  %2677 = vmatprep.subr.mxu0 %v2632
  %2678 = vmatpush1.xpose.msra.mxu0 %v2631
  %2679 = vmatprep.subr.mxu0 %v2628
  %2680 = vmatpush1.xpose.msra.mxu0 %v2627
  %2681 = vmatprep.subr.mxu0 %v2624
  %2682 = vmatpush1.xpose.msra.mxu0 %v2623
  %2683 = vmatprep.subr.mxu0 %v2620
  %2684 = vmatpush1.xpose.msra.mxu0 %v2619
  %2685 = vmatprep.subr.mxu0 %v2616
  %2686 = vmatpush1.xpose.msra.mxu0 %v2615
  %2687 = vmatprep.subr.mxu0 %v2612
  %2688 = vmatpush1.xpose.msra.mxu0 %v2611
  %2689 = vmatprep.subr.mxu0 %v2608
  %2690 = vmatpush1.xpose.msra.mxu0 %v2607
  %2691 = vmatprep.subr.mxu0 %v2604
  %2692 = vmatpush1.xpose.msra.mxu0 %v2603
  %2693 = vmatprep.subr.mxu0 %v2600
  %2694 = vmatpush1.xpose.msra.mxu0 %v2599
  %2695 = vmatprep.subr.mxu0 0.0
  %2696 = vmatpush2.xpose.msra.mxu0 0.0
  %2697 = vmatprep.subr.mxu0 0.0
  %2698 = vmatpush2.xpose.msra.mxu0 0.0
  %2699 = vmatprep.subr.mxu0 0.0
  %2700 = vmatpush2.xpose.msra.mxu0 0.0
  %2701 = vmatprep.subr.mxu0 0.0
  %2702 = vmatpush2.xpose.msra.mxu0 0.0
  %2703 = vmatprep.subr.mxu0 0.0
  %2704 = vmatpush2.xpose.msra.mxu0 0.0
  %2705 = vmatprep.subr.mxu0 0.0
  %2706 = vmatpush2.xpose.msra.mxu0 0.0
  %2707 = vmatprep.subr.mxu0 0.0
  %2708 = vmatpush2.xpose.msra.mxu0 0.0
  %2709 = vmatprep.subr.mxu0 0.0
  %2710 = vmatpush2.xpose.msra.mxu0 0.0
  %2711 = vmatprep.subr.mxu0 0.0
  %2712 = vmatpush2.xpose.msra.mxu0 0.0
  %2713 = vmatprep.subr.mxu0 0.0
  %2714 = vmatpush2.xpose.msra.mxu0 0.0
  %2715 = vmatprep.subr.mxu0 0.0
  %2716 = vmatpush2.xpose.msra.mxu0 0.0
  %2717 = vmatprep.subr.mxu0 0.0
  %2718 = vmatpush2.xpose.msra.mxu0 0.0
  %2719 = vmatprep.subr.mxu0 0.0
  %2720 = vmatpush2.xpose.msra.mxu0 0.0
  %2721 = vmatprep.subr.mxu0 0.0
  %2722 = vmatpush2.xpose.msra.mxu0 0.0
  %2723 = vmatprep.subr.mxu0 0.0
  %2724 = vmatpush2.xpose.msra.mxu0 0.0
  %2725 = vmatprep.subr.mxu0 0.0
  %2726 = vmatpush2.xpose.msra.mxu0 0.0
  %2727 = vmatprep.mubr.f32.mxu0 %v896
  %2728 = vmatmul.mubr.f32.gmra.mxu0 %v895
  %v2729 = vpop.f32.mrf.mxu0
  %v2730 = vadd.f32 0.0, %v2729
  %v2731 = vpop.f32.mrf.mxu0
  %2732 = vmatprep.mubr.f32.mxu0 %v900
  %2733 = vmatmul.mubr.f32.gmra.mxu0 %v899
  %v2734 = vpop.f32.mrf.mxu0
  %v2735 = vadd.f32 0.0, %v2734
  %v2736 = vpop.f32.mrf.mxu0
  %2737 = vmatprep.mubr.f32.mxu0 %v904
  %2738 = vmatmul.mubr.f32.gmra.mxu0 %v903
  %v2739 = vpop.f32.mrf.mxu0
  %v2740 = vadd.f32 0.0, %v2739
  %v2741 = vpop.f32.mrf.mxu0
  %2742 = vmatprep.mubr.f32.mxu0 %v908
  %2743 = vmatmul.mubr.f32.gmra.mxu0 %v907
  %v2744 = vpop.f32.mrf.mxu0
  %v2745 = vadd.f32 0.0, %v2744
  %v2746 = vpop.f32.mrf.mxu0
  %2747 = vdwg.mxu0
  %2748 = vmatprep.subr.mxu0 %v2662
  %2749 = vmatpush1.xpose.msra.mxu0 %v2661
  %2750 = vmatprep.subr.mxu0 %v2658
  %2751 = vmatpush1.xpose.msra.mxu0 %v2657
  %2752 = vmatprep.subr.mxu0 %v2654
  %2753 = vmatpush1.xpose.msra.mxu0 %v2653
  %2754 = vmatprep.subr.mxu0 %v2650
  %2755 = vmatpush1.xpose.msra.mxu0 %v2649
  %2756 = vmatprep.subr.mxu0 %v2646
  %2757 = vmatpush1.xpose.msra.mxu0 %v2645
  %2758 = vmatprep.subr.mxu0 %v2642
  %2759 = vmatpush1.xpose.msra.mxu0 %v2641
  %2760 = vmatprep.subr.mxu0 %v2638
  %2761 = vmatpush1.xpose.msra.mxu0 %v2637
  %2762 = vmatprep.subr.mxu0 %v2634
  %2763 = vmatpush1.xpose.msra.mxu0 %v2633
  %2764 = vmatprep.subr.mxu0 %v2630
  %2765 = vmatpush1.xpose.msra.mxu0 %v2629
  %2766 = vmatprep.subr.mxu0 %v2626
  %2767 = vmatpush1.xpose.msra.mxu0 %v2625
  %2768 = vmatprep.subr.mxu0 %v2622
  %2769 = vmatpush1.xpose.msra.mxu0 %v2621
  %2770 = vmatprep.subr.mxu0 %v2618
  %2771 = vmatpush1.xpose.msra.mxu0 %v2617
  %2772 = vmatprep.subr.mxu0 %v2614
  %2773 = vmatpush1.xpose.msra.mxu0 %v2613
  %2774 = vmatprep.subr.mxu0 %v2610
  %2775 = vmatpush1.xpose.msra.mxu0 %v2609
  %2776 = vmatprep.subr.mxu0 %v2606
  %2777 = vmatpush1.xpose.msra.mxu0 %v2605
  %2778 = vmatprep.subr.mxu0 %v2602
  %2779 = vmatpush1.xpose.msra.mxu0 %v2601
  %2780 = vmatprep.subr.mxu0 0.0
  %2781 = vmatpush2.xpose.msra.mxu0 0.0
  %2782 = vmatprep.subr.mxu0 0.0
  %2783 = vmatpush2.xpose.msra.mxu0 0.0
  %2784 = vmatprep.subr.mxu0 0.0
  %2785 = vmatpush2.xpose.msra.mxu0 0.0
  %2786 = vmatprep.subr.mxu0 0.0
  %2787 = vmatpush2.xpose.msra.mxu0 0.0
  %2788 = vmatprep.subr.mxu0 0.0
  %2789 = vmatpush2.xpose.msra.mxu0 0.0
  %2790 = vmatprep.subr.mxu0 0.0
  %2791 = vmatpush2.xpose.msra.mxu0 0.0
  %2792 = vmatprep.subr.mxu0 0.0
  %2793 = vmatpush2.xpose.msra.mxu0 0.0
  %2794 = vmatprep.subr.mxu0 0.0
  %2795 = vmatpush2.xpose.msra.mxu0 0.0
  %2796 = vmatprep.subr.mxu0 0.0
  %2797 = vmatpush2.xpose.msra.mxu0 0.0
  %2798 = vmatprep.subr.mxu0 0.0
  %2799 = vmatpush2.xpose.msra.mxu0 0.0
  %2800 = vmatprep.subr.mxu0 0.0
  %2801 = vmatpush2.xpose.msra.mxu0 0.0
  %2802 = vmatprep.subr.mxu0 0.0
  %2803 = vmatpush2.xpose.msra.mxu0 0.0
  %2804 = vmatprep.subr.mxu0 0.0
  %2805 = vmatpush2.xpose.msra.mxu0 0.0
  %2806 = vmatprep.subr.mxu0 0.0
  %2807 = vmatpush2.xpose.msra.mxu0 0.0
  %2808 = vmatprep.subr.mxu0 0.0
  %2809 = vmatpush2.xpose.msra.mxu0 0.0
  %2810 = vmatprep.subr.mxu0 0.0
  %2811 = vmatpush2.xpose.msra.mxu0 0.0
  %2812 = vmatprep.mubr.f32.mxu0 %v898
  %2813 = vmatmul.mubr.f32.gmra.mxu0 %v897
  %v2814 = vpop.f32.mrf.mxu0
  %v2815 = vadd.f32 %v2730, %v2814
  %v2816 = vpop.f32.mrf.mxu0
  %2817 = vmatprep.mubr.f32.mxu0 %v902
  %2818 = vmatmul.mubr.f32.gmra.mxu0 %v901
  %v2819 = vpop.f32.mrf.mxu0
  %v2820 = vadd.f32 %v2735, %v2819
  %v2821 = vpop.f32.mrf.mxu0
  %2822 = vmatprep.mubr.f32.mxu0 %v906
  %2823 = vmatmul.mubr.f32.gmra.mxu0 %v905
  %v2824 = vpop.f32.mrf.mxu0
  %v2825 = vadd.f32 %v2740, %v2824
  %v2826 = vpop.f32.mrf.mxu0
  %2827 = vmatprep.mubr.f32.mxu0 %v910
  %2828 = vmatmul.mubr.f32.gmra.mxu0 %v909
  %v2829 = vpop.f32.mrf.mxu0
  %v2830 = vadd.f32 %v2745, %v2829
  %v2831 = vpop.f32.mrf.mxu0
  %2832 = vdwg.mxu0
  %v2834 = vsel %vm1007, %v49, 0
  %v2837 = vsel %vm1007, %v50, 0
  %v2840 = vsel %vm1007, %v51, 0
  %v2843 = vsel %vm1007, %v52, 0
  %2845 = vmatprep.subr.mxu0 0.0
  %2846 = vmatpush1.msra.mxu0 0.0
  %2847 = vmatprep.subr.mxu0 0.0
  %2848 = vmatpush1.msra.mxu0 0.0
  %2849 = vmatprep.subr.mxu0 0.0
  %2850 = vmatpush1.msra.mxu0 0.0
  %2851 = vmatprep.subr.mxu0 0.0
  %2852 = vmatpush1.msra.mxu0 0.0
  %2853 = vmatprep.subr.mxu0 0.0
  %2854 = vmatpush1.msra.mxu0 0.0
  %2855 = vmatprep.subr.mxu0 0.0
  %2856 = vmatpush1.msra.mxu0 0.0
  %2857 = vmatprep.subr.mxu0 0.0
  %2858 = vmatpush1.msra.mxu0 0.0
  %2859 = vmatprep.subr.mxu0 0.0
  %2860 = vmatpush1.msra.mxu0 0.0
  %2861 = vmatprep.subr.mxu0 0.0
  %2862 = vmatpush1.msra.mxu0 0.0
  %2863 = vmatprep.subr.mxu0 0.0
  %2864 = vmatpush1.msra.mxu0 0.0
  %2865 = vmatprep.subr.mxu0 0.0
  %2866 = vmatpush1.msra.mxu0 0.0
  %2867 = vmatprep.subr.mxu0 0.0
  %2868 = vmatpush1.msra.mxu0 0.0
  %2869 = vmatprep.subr.mxu0 0.0
  %2870 = vmatpush1.msra.mxu0 %v2830
  %2871 = vmatprep.subr.mxu0 0.0
  %2872 = vmatpush1.msra.mxu0 %v2825
  %2873 = vmatprep.subr.mxu0 0.0
  %2874 = vmatpush1.msra.mxu0 %v2820
  %2875 = vmatprep.subr.mxu0 0.0
  %2876 = vmatpush1.msra.mxu0 %v2815
  %2877 = vmatprep.subr.mxu0 0.0
  %2878 = vmatpush2.msra.mxu0 0.0
  %2879 = vmatprep.subr.mxu0 0.0
  %2880 = vmatpush2.msra.mxu0 0.0
  %2881 = vmatprep.subr.mxu0 0.0
  %2882 = vmatpush2.msra.mxu0 0.0
  %2883 = vmatprep.subr.mxu0 0.0
  %2884 = vmatpush2.msra.mxu0 0.0
  %2885 = vmatprep.subr.mxu0 0.0
  %2886 = vmatpush2.msra.mxu0 0.0
  %2887 = vmatprep.subr.mxu0 0.0
  %2888 = vmatpush2.msra.mxu0 0.0
  %2889 = vmatprep.subr.mxu0 0.0
  %2890 = vmatpush2.msra.mxu0 0.0
  %2891 = vmatprep.subr.mxu0 0.0
  %2892 = vmatpush2.msra.mxu0 0.0
  %2893 = vmatprep.subr.mxu0 0.0
  %2894 = vmatpush2.msra.mxu0 0.0
  %2895 = vmatprep.subr.mxu0 0.0
  %2896 = vmatpush2.msra.mxu0 0.0
  %2897 = vmatprep.subr.mxu0 0.0
  %2898 = vmatpush2.msra.mxu0 0.0
  %2899 = vmatprep.subr.mxu0 0.0
  %2900 = vmatpush2.msra.mxu0 0.0
  %2901 = vmatprep.subr.mxu0 0.0
  %2902 = vmatpush2.msra.mxu0 0.0
  %2903 = vmatprep.subr.mxu0 0.0
  %2904 = vmatpush2.msra.mxu0 0.0
  %2905 = vmatprep.subr.mxu0 0.0
  %2906 = vmatpush2.msra.mxu0 0.0
  %2907 = vmatprep.subr.mxu0 0.0
  %2908 = vmatpush2.msra.mxu0 0.0
  %2909 = vmatprep.mubr.f32.mxu0 0.0
  %2910 = vmatmul.mubr.f32.gmra.mxu0 %v2834
  %v2911 = vpop.f32.mrf.mxu0
  %v2912 = vadd.f32 0.0, %v2911
  %v2913 = vpop.f32.mrf.mxu0
  %2914 = vmatprep.mubr.f32.mxu0 0.0
  %2915 = vmatmul.mubr.f32.gmra.mxu0 %v2837
  %v2916 = vpop.f32.mrf.mxu0
  %v2917 = vadd.f32 0.0, %v2916
  %v2918 = vpop.f32.mrf.mxu0
  %2919 = vmatprep.mubr.f32.mxu0 0.0
  %2920 = vmatmul.mubr.f32.gmra.mxu0 %v2840
  %v2921 = vpop.f32.mrf.mxu0
  %v2922 = vadd.f32 0.0, %v2921
  %v2923 = vpop.f32.mrf.mxu0
  %2924 = vmatprep.mubr.f32.mxu0 0.0
  %2925 = vmatmul.mubr.f32.gmra.mxu0 %v2843
  %v2926 = vpop.f32.mrf.mxu0
  %v2927 = vadd.f32 0.0, %v2926
  %v2928 = vpop.f32.mrf.mxu0
  %2929 = vdwg.mxu0
  %v2930 = vadd.f32 %v107, %v2912
  %v2931 = vadd.f32 %v108, %v2917
  %v2932 = vadd.f32 %v109, %v2922
  %v2933 = vadd.f32 %v110, %v2927
  %2934 = vset.pattern.permute.xlu0 12
  %2935 = vperm.xlu0 %2934, %v85
  %v2936 = vpop.permute.xlu0 %2935
  %2938 = vset.pattern.permute.xlu0 12
  %2939 = vperm.xlu0 %2938, %v86
  %v2940 = vpop.permute.xlu0 %2939
  %2942 = vset.pattern.permute.xlu0 12
  %2943 = vperm.xlu0 %2942, %v87
  %v2944 = vpop.permute.xlu0 %2943
  %2946 = vset.pattern.permute.xlu0 12
  %2947 = vperm.xlu0 %2946, %v88
  %v2948 = vpop.permute.xlu0 %2947
  %v2950 = vadd.f32 %v2930, %v2936
  %v2951 = vadd.f32 %v2931, %v2940
  %v2952 = vadd.f32 %v2932, %v2944
  %v2953 = vadd.f32 %v2933, %v2948
  %v2954 = vadd.f32 %v2950, %v2951
  %v2955 = vadd.f32 %v2954, %v2952
  %v2956 = vadd.f32 %v2955, %v2953
  %v2957 = vrot.slane %v2956, 4
  %v2958 = vadd.f32 %v2956, %v2957
  %v2959 = vrot.slane %v2958, 2
  %v2960 = vadd.f32 %v2958, %v2959
  %v2961 = vrot.slane %v2960, 1
  %v2962 = vadd.f32 %v2960, %v2961
  %v2963 = vmul.f32 %v2962, %v120
  %v2964 = vsub.f32 %v2950, %v2963
  %v2965 = vsub.f32 %v2951, %v2963
  %v2966 = vsub.f32 %v2952, %v2963
  %v2967 = vsub.f32 %v2953, %v2963
  %v2968 = vmul.f32 %v2964, %v2964
  %v2969 = vmul.f32 %v2965, %v2965
  %v2970 = vmul.f32 %v2966, %v2966
  %v2971 = vmul.f32 %v2967, %v2967
  %v2972 = vadd.f32 %v2968, %v2969
  %v2973 = vadd.f32 %v2972, %v2970
  %v2974 = vadd.f32 %v2973, %v2971
  %v2975 = vrot.slane %v2974, 4
  %v2976 = vadd.f32 %v2974, %v2975
  %v2977 = vrot.slane %v2976, 2
  %v2978 = vadd.f32 %v2976, %v2977
  %v2979 = vrot.slane %v2978, 1
  %v2980 = vadd.f32 %v2978, %v2979
  %v2981 = vmul.f32 %v2980, %v120
  %v2982 = vadd.f32 %v2981, 1e-05
  %v2983 = vrsqrt.pop %v2982
  %v2984 = vmul.f32 %v2964, %v2983
  %v2985 = vmul.f32 %v2965, %v2983
  %v2986 = vmul.f32 %v2966, %v2983
  %v2987 = vmul.f32 %v2967, %v2983
  %2988 = vset.pattern.permute.xlu0 13
  %2989 = vperm.xlu0 %2988, %v85
  %v2990 = vpop.permute.xlu0 %2989
  %2992 = vset.pattern.permute.xlu0 13
  %2993 = vperm.xlu0 %2992, %v86
  %v2994 = vpop.permute.xlu0 %2993
  %2996 = vset.pattern.permute.xlu0 13
  %2997 = vperm.xlu0 %2996, %v87
  %v2998 = vpop.permute.xlu0 %2997
  %3000 = vset.pattern.permute.xlu0 13
  %3001 = vperm.xlu0 %3000, %v88
  %v3002 = vpop.permute.xlu0 %3001
  %v3004 = vmul.f32 %v2984, %v2990
  %v3005 = vmul.f32 %v2985, %v2994
  %v3006 = vmul.f32 %v2986, %v2998
  %v3007 = vmul.f32 %v2987, %v3002
  %3008 = vset.pattern.permute.xlu0 14
  %3009 = vperm.xlu0 %3008, %v85
  %v3010 = vpop.permute.xlu0 %3009
  %3012 = vset.pattern.permute.xlu0 14
  %3013 = vperm.xlu0 %3012, %v86
  %v3014 = vpop.permute.xlu0 %3013
  %3016 = vset.pattern.permute.xlu0 14
  %3017 = vperm.xlu0 %3016, %v87
  %v3018 = vpop.permute.xlu0 %3017
  %3020 = vset.pattern.permute.xlu0 14
  %3021 = vperm.xlu0 %3020, %v88
  %v3022 = vpop.permute.xlu0 %3021
  %v3024 = vadd.f32 %v3004, %v3010
  %v3025 = vadd.f32 %v3005, %v3014
  %v3026 = vadd.f32 %v3006, %v3018
  %v3027 = vadd.f32 %v3007, %v3022
  %3028 = vset.pattern.permute.xlu0 15
  %3029 = vperm.xlu0 %3028, %v85
  %v3030 = vpop.permute.xlu0 %3029
  %3032 = vset.pattern.permute.xlu0 15
  %3033 = vperm.xlu0 %3032, %v86
  %v3034 = vpop.permute.xlu0 %3033
  %3036 = vset.pattern.permute.xlu0 15
  %3037 = vperm.xlu0 %3036, %v87
  %v3038 = vpop.permute.xlu0 %3037
  %3040 = vset.pattern.permute.xlu0 15
  %3041 = vperm.xlu0 %3040, %v88
  %v3042 = vpop.permute.xlu0 %3041
  %3044 = vset.pattern.permute.xlu0 15
  %3045 = vperm.xlu0 %3044, %v89
  %v3046 = vpop.permute.xlu0 %3045
  %3048 = vset.pattern.permute.xlu0 15
  %3049 = vperm.xlu0 %3048, %v90
  %v3050 = vpop.permute.xlu0 %3049
  %3052 = vset.pattern.permute.xlu0 15
  %3053 = vperm.xlu0 %3052, %v91
  %v3054 = vpop.permute.xlu0 %3053
  %3056 = vset.pattern.permute.xlu0 15
  %3057 = vperm.xlu0 %3056, %v92
  %v3058 = vpop.permute.xlu0 %3057
  %3060 = vset.pattern.permute.xlu0 15
  %3061 = vperm.xlu0 %3060, %v93
  %v3062 = vpop.permute.xlu0 %3061
  %3064 = vset.pattern.permute.xlu0 15
  %3065 = vperm.xlu0 %3064, %v94
  %v3066 = vpop.permute.xlu0 %3065
  %3068 = vset.pattern.permute.xlu0 15
  %3069 = vperm.xlu0 %3068, %v95
  %v3070 = vpop.permute.xlu0 %3069
  %3072 = vset.pattern.permute.xlu0 15
  %3073 = vperm.xlu0 %3072, %v96
  %v3074 = vpop.permute.xlu0 %3073
  %3077 = vset.pattern.permute.xlu0 15
  %3078 = vperm.xlu0 %3077, %v97
  %v3079 = vpop.permute.xlu0 %3078
  %3082 = vset.pattern.permute.xlu0 15
  %3083 = vperm.xlu0 %3082, %v98
  %v3084 = vpop.permute.xlu0 %3083
  %3087 = vset.pattern.permute.xlu0 15
  %3088 = vperm.xlu0 %3087, %v99
  %v3089 = vpop.permute.xlu0 %3088
  %3092 = vset.pattern.permute.xlu0 15
  %3093 = vperm.xlu0 %3092, %v100
  %v3094 = vpop.permute.xlu0 %3093
  %v3097 = vsel %vm1007, %v53, 0
  %v3100 = vsel %vm1007, %v54, 0
  %v3103 = vsel %vm1007, %v55, 0
  %v3106 = vsel %vm1007, %v56, 0
  %v3109 = vsel %vm1007, %v57, 0
  %v3112 = vsel %vm1007, %v58, 0
  %v3115 = vsel %vm1007, %v59, 0
  %v3118 = vsel %vm1007, %v60, 0
  %v3121 = vsel %vm1007, %v61, 0
  %v3124 = vsel %vm1007, %v62, 0
  %v3127 = vsel %vm1007, %v63, 0
  %v3130 = vsel %vm1007, %v64, 0
  %v3133 = vsel %vm1007, %v65, 0
  %v3136 = vsel %vm1007, %v66, 0
  %v3139 = vsel %vm1007, %v67, 0
  %v3142 = vsel %vm1007, %v68, 0
  %3144 = vmatprep.subr.mxu0 0.0
  %3145 = vmatpush1.msra.mxu0 0.0
  %3146 = vmatprep.subr.mxu0 0.0
  %3147 = vmatpush1.msra.mxu0 0.0
  %3148 = vmatprep.subr.mxu0 0.0
  %3149 = vmatpush1.msra.mxu0 0.0
  %3150 = vmatprep.subr.mxu0 0.0
  %3151 = vmatpush1.msra.mxu0 0.0
  %3152 = vmatprep.subr.mxu0 0.0
  %3153 = vmatpush1.msra.mxu0 0.0
  %3154 = vmatprep.subr.mxu0 0.0
  %3155 = vmatpush1.msra.mxu0 0.0
  %3156 = vmatprep.subr.mxu0 0.0
  %3157 = vmatpush1.msra.mxu0 0.0
  %3158 = vmatprep.subr.mxu0 0.0
  %3159 = vmatpush1.msra.mxu0 0.0
  %3160 = vmatprep.subr.mxu0 0.0
  %3161 = vmatpush1.msra.mxu0 0.0
  %3162 = vmatprep.subr.mxu0 0.0
  %3163 = vmatpush1.msra.mxu0 0.0
  %3164 = vmatprep.subr.mxu0 0.0
  %3165 = vmatpush1.msra.mxu0 0.0
  %3166 = vmatprep.subr.mxu0 0.0
  %3167 = vmatpush1.msra.mxu0 0.0
  %3168 = vmatprep.subr.mxu0 0.0
  %3169 = vmatpush1.msra.mxu0 %v3027
  %3170 = vmatprep.subr.mxu0 0.0
  %3171 = vmatpush1.msra.mxu0 %v3026
  %3172 = vmatprep.subr.mxu0 0.0
  %3173 = vmatpush1.msra.mxu0 %v3025
  %3174 = vmatprep.subr.mxu0 0.0
  %3175 = vmatpush1.msra.mxu0 %v3024
  %3176 = vmatprep.subr.mxu0 0.0
  %3177 = vmatpush2.msra.mxu0 0.0
  %3178 = vmatprep.subr.mxu0 0.0
  %3179 = vmatpush2.msra.mxu0 0.0
  %3180 = vmatprep.subr.mxu0 0.0
  %3181 = vmatpush2.msra.mxu0 0.0
  %3182 = vmatprep.subr.mxu0 0.0
  %3183 = vmatpush2.msra.mxu0 0.0
  %3184 = vmatprep.subr.mxu0 0.0
  %3185 = vmatpush2.msra.mxu0 0.0
  %3186 = vmatprep.subr.mxu0 0.0
  %3187 = vmatpush2.msra.mxu0 0.0
  %3188 = vmatprep.subr.mxu0 0.0
  %3189 = vmatpush2.msra.mxu0 0.0
  %3190 = vmatprep.subr.mxu0 0.0
  %3191 = vmatpush2.msra.mxu0 0.0
  %3192 = vmatprep.subr.mxu0 0.0
  %3193 = vmatpush2.msra.mxu0 0.0
  %3194 = vmatprep.subr.mxu0 0.0
  %3195 = vmatpush2.msra.mxu0 0.0
  %3196 = vmatprep.subr.mxu0 0.0
  %3197 = vmatpush2.msra.mxu0 0.0
  %3198 = vmatprep.subr.mxu0 0.0
  %3199 = vmatpush2.msra.mxu0 0.0
  %3200 = vmatprep.subr.mxu0 0.0
  %3201 = vmatpush2.msra.mxu0 0.0
  %3202 = vmatprep.subr.mxu0 0.0
  %3203 = vmatpush2.msra.mxu0 0.0
  %3204 = vmatprep.subr.mxu0 0.0
  %3205 = vmatpush2.msra.mxu0 0.0
  %3206 = vmatprep.subr.mxu0 0.0
  %3207 = vmatpush2.msra.mxu0 0.0
  %3208 = vmatprep.mubr.f32.mxu0 0.0
  %3209 = vmatmul.mubr.f32.gmra.mxu0 %v3097
  %v3210 = vpop.f32.mrf.mxu0
  %v3211 = vadd.f32 %v3030, %v3210
  %v3212 = vpop.f32.mrf.mxu0
  %3213 = vmatprep.mubr.f32.mxu0 0.0
  %3214 = vmatmul.mubr.f32.gmra.mxu0 %v3100
  %v3215 = vpop.f32.mrf.mxu0
  %v3216 = vadd.f32 %v3034, %v3215
  %v3217 = vpop.f32.mrf.mxu0
  %3218 = vmatprep.mubr.f32.mxu0 0.0
  %3219 = vmatmul.mubr.f32.gmra.mxu0 %v3103
  %v3220 = vpop.f32.mrf.mxu0
  %v3221 = vadd.f32 %v3038, %v3220
  %v3222 = vpop.f32.mrf.mxu0
  %3223 = vmatprep.mubr.f32.mxu0 0.0
  %3224 = vmatmul.mubr.f32.gmra.mxu0 %v3106
  %v3225 = vpop.f32.mrf.mxu0
  %v3226 = vadd.f32 %v3042, %v3225
  %v3227 = vpop.f32.mrf.mxu0
  %3228 = vmatprep.mubr.f32.mxu0 0.0
  %3229 = vmatmul.mubr.f32.gmra.mxu0 %v3109
  %v3230 = vpop.f32.mrf.mxu0
  %v3231 = vadd.f32 %v3046, %v3230
  %v3232 = vpop.f32.mrf.mxu0
  %3233 = vmatprep.mubr.f32.mxu0 0.0
  %3234 = vmatmul.mubr.f32.gmra.mxu0 %v3112
  %v3235 = vpop.f32.mrf.mxu0
  %v3236 = vadd.f32 %v3050, %v3235
  %v3237 = vpop.f32.mrf.mxu0
  %3238 = vmatprep.mubr.f32.mxu0 0.0
  %3239 = vmatmul.mubr.f32.gmra.mxu0 %v3115
  %v3240 = vpop.f32.mrf.mxu0
  %v3241 = vadd.f32 %v3054, %v3240
  %v3242 = vpop.f32.mrf.mxu0
  %3243 = vmatprep.mubr.f32.mxu0 0.0
  %3244 = vmatmul.mubr.f32.gmra.mxu0 %v3118
  %v3245 = vpop.f32.mrf.mxu0
  %v3246 = vadd.f32 %v3058, %v3245
  %v3247 = vpop.f32.mrf.mxu0
  %3248 = vmatprep.mubr.f32.mxu0 0.0
  %3249 = vmatmul.mubr.f32.gmra.mxu0 %v3121
  %v3250 = vpop.f32.mrf.mxu0
  %v3251 = vadd.f32 %v3062, %v3250
  %v3252 = vpop.f32.mrf.mxu0
  %3253 = vmatprep.mubr.f32.mxu0 0.0
  %3254 = vmatmul.mubr.f32.gmra.mxu0 %v3124
  %v3255 = vpop.f32.mrf.mxu0
  %v3256 = vadd.f32 %v3066, %v3255
  %v3257 = vpop.f32.mrf.mxu0
  %3258 = vmatprep.mubr.f32.mxu0 0.0
  %3259 = vmatmul.mubr.f32.gmra.mxu0 %v3127
  %v3260 = vpop.f32.mrf.mxu0
  %v3261 = vadd.f32 %v3070, %v3260
  %v3262 = vpop.f32.mrf.mxu0
  %3263 = vmatprep.mubr.f32.mxu0 0.0
  %3264 = vmatmul.mubr.f32.gmra.mxu0 %v3130
  %v3265 = vpop.f32.mrf.mxu0
  %v3266 = vadd.f32 %v3074, %v3265
  %v3267 = vpop.f32.mrf.mxu0
  %3268 = vmatprep.mubr.f32.mxu0 0.0
  %3269 = vmatmul.mubr.f32.gmra.mxu0 %v3133
  %v3270 = vpop.f32.mrf.mxu0
  %v3271 = vadd.f32 %v3079, %v3270
  %v3272 = vpop.f32.mrf.mxu0
  %3273 = vmatprep.mubr.f32.mxu0 0.0
  %3274 = vmatmul.mubr.f32.gmra.mxu0 %v3136
  %v3275 = vpop.f32.mrf.mxu0
  %v3276 = vadd.f32 %v3084, %v3275
  %v3277 = vpop.f32.mrf.mxu0
  %3278 = vmatprep.mubr.f32.mxu0 0.0
  %3279 = vmatmul.mubr.f32.gmra.mxu0 %v3139
  %v3280 = vpop.f32.mrf.mxu0
  %v3281 = vadd.f32 %v3089, %v3280
  %v3282 = vpop.f32.mrf.mxu0
  %3283 = vmatprep.mubr.f32.mxu0 0.0
  %3284 = vmatmul.mubr.f32.gmra.mxu0 %v3142
  %v3285 = vpop.f32.mrf.mxu0
  %v3286 = vadd.f32 %v3094, %v3285
  %v3287 = vpop.f32.mrf.mxu0
  %3288 = vdwg.mxu0
  %v3289 = vmul.f32 %v3211, 0.5
  %v3290 = vmul.f32 %v3216, 0.5
  %v3291 = vmul.f32 %v3221, 0.5
  %v3292 = vmul.f32 %v3226, 0.5
  %v3293 = vmul.f32 %v3231, 0.5
  %v3294 = vmul.f32 %v3236, 0.5
  %v3295 = vmul.f32 %v3241, 0.5
  %v3296 = vmul.f32 %v3246, 0.5
  %v3297 = vmul.f32 %v3251, 0.5
  %v3298 = vmul.f32 %v3256, 0.5
  %v3299 = vmul.f32 %v3261, 0.5
  %v3300 = vmul.f32 %v3266, 0.5
  %v3301 = vmul.f32 %v3271, 0.5
  %v3302 = vmul.f32 %v3276, 0.5
  %v3303 = vmul.f32 %v3281, 0.5
  %v3304 = vmul.f32 %v3286, 0.5
  %v3305 = vmul.f32 %v3211, 0.70710677
  %v3306 = vmul.f32 %v3216, 0.70710677
  %v3307 = vmul.f32 %v3221, 0.70710677
  %v3308 = vmul.f32 %v3226, 0.70710677
  %v3309 = vmul.f32 %v3231, 0.70710677
  %v3310 = vmul.f32 %v3236, 0.70710677
  %v3311 = vmul.f32 %v3241, 0.70710677
  %v3312 = vmul.f32 %v3246, 0.70710677
  %v3313 = vmul.f32 %v3251, 0.70710677
  %v3314 = vmul.f32 %v3256, 0.70710677
  %v3315 = vmul.f32 %v3261, 0.70710677
  %v3316 = vmul.f32 %v3266, 0.70710677
  %v3317 = vmul.f32 %v3271, 0.70710677
  %v3318 = vmul.f32 %v3276, 0.70710677
  %v3319 = vmul.f32 %v3281, 0.70710677
  %v3320 = vmul.f32 %v3286, 0.70710677
  %v3321 = vand.u32 2147483647, %v3305
  %v3322 = vand.u32 2147483647, %v3306
  %v3323 = vand.u32 2147483647, %v3307
  %v3324 = vand.u32 2147483647, %v3308
  %v3325 = vand.u32 2147483647, %v3309
  %v3326 = vand.u32 2147483647, %v3310
  %v3327 = vand.u32 2147483647, %v3311
  %v3328 = vand.u32 2147483647, %v3312
  %v3329 = vand.u32 2147483647, %v3313
  %v3330 = vand.u32 2147483647, %v3314
  %v3331 = vand.u32 2147483647, %v3315
  %v3332 = vand.u32 2147483647, %v3316
  %v3333 = vand.u32 2147483647, %v3317
  %v3334 = vand.u32 2147483647, %v3318
  %v3335 = vand.u32 2147483647, %v3319
  %v3336 = vand.u32 2147483647, %v3320
  %v3337 = vmul.f32 %v3321, 0.5
  %v3338 = vmul.f32 %v3322, 0.5
  %v3339 = vmul.f32 %v3323, 0.5
  %v3340 = vmul.f32 %v3324, 0.5
  %v3341 = vmul.f32 %v3325, 0.5
  %v3342 = vmul.f32 %v3326, 0.5
  %v3343 = vmul.f32 %v3327, 0.5
  %v3344 = vmul.f32 %v3328, 0.5
  %v3345 = vmul.f32 %v3329, 0.5
  %v3346 = vmul.f32 %v3330, 0.5
  %v3347 = vmul.f32 %v3331, 0.5
  %v3348 = vmul.f32 %v3332, 0.5
  %v3349 = vmul.f32 %v3333, 0.5
  %v3350 = vmul.f32 %v3334, 0.5
  %v3351 = vmul.f32 %v3335, 0.5
  %v3352 = vmul.f32 %v3336, 0.5
  %v3353 = vadd.f32 %v3337, 1.0
  %v3354 = vadd.f32 %v3338, 1.0
  %v3355 = vadd.f32 %v3339, 1.0
  %v3356 = vadd.f32 %v3340, 1.0
  %v3357 = vadd.f32 %v3341, 1.0
  %v3358 = vadd.f32 %v3342, 1.0
  %v3359 = vadd.f32 %v3343, 1.0
  %v3360 = vadd.f32 %v3344, 1.0
  %v3361 = vadd.f32 %v3345, 1.0
  %v3362 = vadd.f32 %v3346, 1.0
  %v3363 = vadd.f32 %v3347, 1.0
  %v3364 = vadd.f32 %v3348, 1.0
  %v3365 = vadd.f32 %v3349, 1.0
  %v3366 = vadd.f32 %v3350, 1.0
  %v3367 = vadd.f32 %v3351, 1.0
  %v3368 = vadd.f32 %v3352, 1.0
  %v3369 = vrcp.pop %v3353
  %v3370 = vmul.f32 1.0, %v3369
  %v3371 = vrcp.pop %v3354
  %v3372 = vmul.f32 1.0, %v3371
  %v3373 = vrcp.pop %v3355
  %v3374 = vmul.f32 1.0, %v3373
  %v3375 = vrcp.pop %v3356
  %v3376 = vmul.f32 1.0, %v3375
  %v3377 = vrcp.pop %v3357
  %v3378 = vmul.f32 1.0, %v3377
  %v3379 = vrcp.pop %v3358
  %v3380 = vmul.f32 1.0, %v3379
  %v3381 = vrcp.pop %v3359
  %v3382 = vmul.f32 1.0, %v3381
  %v3383 = vrcp.pop %v3360
  %v3384 = vmul.f32 1.0, %v3383
  %v3385 = vrcp.pop %v3361
  %v3386 = vmul.f32 1.0, %v3385
  %v3387 = vrcp.pop %v3362
  %v3388 = vmul.f32 1.0, %v3387
  %v3389 = vrcp.pop %v3363
  %v3390 = vmul.f32 1.0, %v3389
  %v3391 = vrcp.pop %v3364
  %v3392 = vmul.f32 1.0, %v3391
  %v3393 = vrcp.pop %v3365
  %v3394 = vmul.f32 1.0, %v3393
  %v3395 = vrcp.pop %v3366
  %v3396 = vmul.f32 1.0, %v3395
  %v3397 = vrcp.pop %v3367
  %v3398 = vmul.f32 1.0, %v3397
  %v3399 = vrcp.pop %v3368
  %v3400 = vmul.f32 1.0, %v3399
  %v3401 = vsub.f32 0.0, %v3321
  %v3402 = vsub.f32 0.0, %v3322
  %v3403 = vsub.f32 0.0, %v3323
  %v3404 = vsub.f32 0.0, %v3324
  %v3405 = vsub.f32 0.0, %v3325
  %v3406 = vsub.f32 0.0, %v3326
  %v3407 = vsub.f32 0.0, %v3327
  %v3408 = vsub.f32 0.0, %v3328
  %v3409 = vsub.f32 0.0, %v3329
  %v3410 = vsub.f32 0.0, %v3330
  %v3411 = vsub.f32 0.0, %v3331
  %v3412 = vsub.f32 0.0, %v3332
  %v3413 = vsub.f32 0.0, %v3333
  %v3414 = vsub.f32 0.0, %v3334
  %v3415 = vsub.f32 0.0, %v3335
  %v3416 = vsub.f32 0.0, %v3336
  %v3417 = vmul.f32 %v3401, %v3321
  %v3418 = vmul.f32 %v3402, %v3322
  %v3419 = vmul.f32 %v3403, %v3323
  %v3420 = vmul.f32 %v3404, %v3324
  %v3421 = vmul.f32 %v3405, %v3325
  %v3422 = vmul.f32 %v3406, %v3326
  %v3423 = vmul.f32 %v3407, %v3327
  %v3424 = vmul.f32 %v3408, %v3328
  %v3425 = vmul.f32 %v3409, %v3329
  %v3426 = vmul.f32 %v3410, %v3330
  %v3427 = vmul.f32 %v3411, %v3331
  %v3428 = vmul.f32 %v3412, %v3332
  %v3429 = vmul.f32 %v3413, %v3333
  %v3430 = vmul.f32 %v3414, %v3334
  %v3431 = vmul.f32 %v3415, %v3335
  %v3432 = vmul.f32 %v3416, %v3336
  %v3433 = vsub.f32 %v3417, 1.2655122
  %v3434 = vsub.f32 %v3418, 1.2655122
  %v3435 = vsub.f32 %v3419, 1.2655122
  %v3436 = vsub.f32 %v3420, 1.2655122
  %v3437 = vsub.f32 %v3421, 1.2655122
  %v3438 = vsub.f32 %v3422, 1.2655122
  %v3439 = vsub.f32 %v3423, 1.2655122
  %v3440 = vsub.f32 %v3424, 1.2655122
  %v3441 = vsub.f32 %v3425, 1.2655122
  %v3442 = vsub.f32 %v3426, 1.2655122
  %v3443 = vsub.f32 %v3427, 1.2655122
  %v3444 = vsub.f32 %v3428, 1.2655122
  %v3445 = vsub.f32 %v3429, 1.2655122
  %v3446 = vsub.f32 %v3430, 1.2655122
  %v3447 = vsub.f32 %v3431, 1.2655122
  %v3448 = vsub.f32 %v3432, 1.2655122
  %v3449 = vmul.f32 %v3370, 0.17087276
  %v3450 = vmul.f32 %v3372, 0.17087276
  %v3451 = vmul.f32 %v3374, 0.17087276
  %v3452 = vmul.f32 %v3376, 0.17087276
  %v3453 = vmul.f32 %v3378, 0.17087276
  %v3454 = vmul.f32 %v3380, 0.17087276
  %v3455 = vmul.f32 %v3382, 0.17087276
  %v3456 = vmul.f32 %v3384, 0.17087276
  %v3457 = vmul.f32 %v3386, 0.17087276
  %v3458 = vmul.f32 %v3388, 0.17087276
  %v3459 = vmul.f32 %v3390, 0.17087276
  %v3460 = vmul.f32 %v3392, 0.17087276
  %v3461 = vmul.f32 %v3394, 0.17087276
  %v3462 = vmul.f32 %v3396, 0.17087276
  %v3463 = vmul.f32 %v3398, 0.17087276
  %v3464 = vmul.f32 %v3400, 0.17087276
  %v3465 = vadd.f32 %v3449, -0.82215226
  %v3466 = vadd.f32 %v3450, -0.82215226
  %v3467 = vadd.f32 %v3451, -0.82215226
  %v3468 = vadd.f32 %v3452, -0.82215226
  %v3469 = vadd.f32 %v3453, -0.82215226
  %v3470 = vadd.f32 %v3454, -0.82215226
  %v3471 = vadd.f32 %v3455, -0.82215226
  %v3472 = vadd.f32 %v3456, -0.82215226
  %v3473 = vadd.f32 %v3457, -0.82215226
  %v3474 = vadd.f32 %v3458, -0.82215226
  %v3475 = vadd.f32 %v3459, -0.82215226
  %v3476 = vadd.f32 %v3460, -0.82215226
  %v3477 = vadd.f32 %v3461, -0.82215226
  %v3478 = vadd.f32 %v3462, -0.82215226
  %v3479 = vadd.f32 %v3463, -0.82215226
  %v3480 = vadd.f32 %v3464, -0.82215226
  %v3481 = vmul.f32 %v3370, %v3465
  %v3482 = vmul.f32 %v3372, %v3466
  %v3483 = vmul.f32 %v3374, %v3467
  %v3484 = vmul.f32 %v3376, %v3468
  %v3485 = vmul.f32 %v3378, %v3469
  %v3486 = vmul.f32 %v3380, %v3470
  %v3487 = vmul.f32 %v3382, %v3471
  %v3488 = vmul.f32 %v3384, %v3472
  %v3489 = vmul.f32 %v3386, %v3473
  %v3490 = vmul.f32 %v3388, %v3474
  %v3491 = vmul.f32 %v3390, %v3475
  %v3492 = vmul.f32 %v3392, %v3476
  %v3493 = vmul.f32 %v3394, %v3477
  %v3494 = vmul.f32 %v3396, %v3478
  %v3495 = vmul.f32 %v3398, %v3479
  %v3496 = vmul.f32 %v3400, %v3480
  %v3497 = vadd.f32 %v3481, 1.4885159
  %v3498 = vadd.f32 %v3482, 1.4885159
  %v3499 = vadd.f32 %v3483, 1.4885159
  %v3500 = vadd.f32 %v3484, 1.4885159
  %v3501 = vadd.f32 %v3485, 1.4885159
  %v3502 = vadd.f32 %v3486, 1.4885159
  %v3503 = vadd.f32 %v3487, 1.4885159
  %v3504 = vadd.f32 %v3488, 1.4885159
  %v3505 = vadd.f32 %v3489, 1.4885159
  %v3506 = vadd.f32 %v3490, 1.4885159
  %v3507 = vadd.f32 %v3491, 1.4885159
  %v3508 = vadd.f32 %v3492, 1.4885159
  %v3509 = vadd.f32 %v3493, 1.4885159
  %v3510 = vadd.f32 %v3494, 1.4885159
  %v3511 = vadd.f32 %v3495, 1.4885159
  %v3512 = vadd.f32 %v3496, 1.4885159
  %v3513 = vmul.f32 %v3370, %v3497
  %v3514 = vmul.f32 %v3372, %v3498
  %v3515 = vmul.f32 %v3374, %v3499
  %v3516 = vmul.f32 %v3376, %v3500
  %v3517 = vmul.f32 %v3378, %v3501
  %v3518 = vmul.f32 %v3380, %v3502
  %v3519 = vmul.f32 %v3382, %v3503
  %v3520 = vmul.f32 %v3384, %v3504
  %v3521 = vmul.f32 %v3386, %v3505
  %v3522 = vmul.f32 %v3388, %v3506
  %v3523 = vmul.f32 %v3390, %v3507
  %v3524 = vmul.f32 %v3392, %v3508
  %v3525 = vmul.f32 %v3394, %v3509
  %v3526 = vmul.f32 %v3396, %v3510
  %v3527 = vmul.f32 %v3398, %v3511
  %v3528 = vmul.f32 %v3400, %v3512
  %v3529 = vadd.f32 %v3513, -1.135204
  %v3530 = vadd.f32 %v3514, -1.135204
  %v3531 = vadd.f32 %v3515, -1.135204
  %v3532 = vadd.f32 %v3516, -1.135204
  %v3533 = vadd.f32 %v3517, -1.135204
  %v3534 = vadd.f32 %v3518, -1.135204
  %v3535 = vadd.f32 %v3519, -1.135204
  %v3536 = vadd.f32 %v3520, -1.135204
  %v3537 = vadd.f32 %v3521, -1.135204
  %v3538 = vadd.f32 %v3522, -1.135204
  %v3539 = vadd.f32 %v3523, -1.135204
  %v3540 = vadd.f32 %v3524, -1.135204
  %v3541 = vadd.f32 %v3525, -1.135204
  %v3542 = vadd.f32 %v3526, -1.135204
  %v3543 = vadd.f32 %v3527, -1.135204
  %v3544 = vadd.f32 %v3528, -1.135204
  %v3545 = vmul.f32 %v3370, %v3529
  %v3546 = vmul.f32 %v3372, %v3530
  %v3547 = vmul.f32 %v3374, %v3531
  %v3548 = vmul.f32 %v3376, %v3532
  %v3549 = vmul.f32 %v3378, %v3533
  %v3550 = vmul.f32 %v3380, %v3534
  %v3551 = vmul.f32 %v3382, %v3535
  %v3552 = vmul.f32 %v3384, %v3536
  %v3553 = vmul.f32 %v3386, %v3537
  %v3554 = vmul.f32 %v3388, %v3538
  %v3555 = vmul.f32 %v3390, %v3539
  %v3556 = vmul.f32 %v3392, %v3540
  %v3557 = vmul.f32 %v3394, %v3541
  %v3558 = vmul.f32 %v3396, %v3542
  %v3559 = vmul.f32 %v3398, %v3543
  %v3560 = vmul.f32 %v3400, %v3544
  %v3561 = vadd.f32 %v3545, 0.27886808
  %v3562 = vadd.f32 %v3546, 0.27886808
  %v3563 = vadd.f32 %v3547, 0.27886808
  %v3564 = vadd.f32 %v3548, 0.27886808
  %v3565 = vadd.f32 %v3549, 0.27886808
  %v3566 = vadd.f32 %v3550, 0.27886808
  %v3567 = vadd.f32 %v3551, 0.27886808
  %v3568 = vadd.f32 %v3552, 0.27886808
  %v3569 = vadd.f32 %v3553, 0.27886808
  %v3570 = vadd.f32 %v3554, 0.27886808
  %v3571 = vadd.f32 %v3555, 0.27886808
  %v3572 = vadd.f32 %v3556, 0.27886808
  %v3573 = vadd.f32 %v3557, 0.27886808
  %v3574 = vadd.f32 %v3558, 0.27886808
  %v3575 = vadd.f32 %v3559, 0.27886808
  %v3576 = vadd.f32 %v3560, 0.27886808
  %v3577 = vmul.f32 %v3370, %v3561
  %v3578 = vmul.f32 %v3372, %v3562
  %v3579 = vmul.f32 %v3374, %v3563
  %v3580 = vmul.f32 %v3376, %v3564
  %v3581 = vmul.f32 %v3378, %v3565
  %v3582 = vmul.f32 %v3380, %v3566
  %v3583 = vmul.f32 %v3382, %v3567
  %v3584 = vmul.f32 %v3384, %v3568
  %v3585 = vmul.f32 %v3386, %v3569
  %v3586 = vmul.f32 %v3388, %v3570
  %v3587 = vmul.f32 %v3390, %v3571
  %v3588 = vmul.f32 %v3392, %v3572
  %v3589 = vmul.f32 %v3394, %v3573
  %v3590 = vmul.f32 %v3396, %v3574
  %v3591 = vmul.f32 %v3398, %v3575
  %v3592 = vmul.f32 %v3400, %v3576
  %v3593 = vadd.f32 %v3577, -0.18628806
  %v3594 = vadd.f32 %v3578, -0.18628806
  %v3595 = vadd.f32 %v3579, -0.18628806
  %v3596 = vadd.f32 %v3580, -0.18628806
  %v3597 = vadd.f32 %v3581, -0.18628806
  %v3598 = vadd.f32 %v3582, -0.18628806
  %v3599 = vadd.f32 %v3583, -0.18628806
  %v3600 = vadd.f32 %v3584, -0.18628806
  %v3601 = vadd.f32 %v3585, -0.18628806
  %v3602 = vadd.f32 %v3586, -0.18628806
  %v3603 = vadd.f32 %v3587, -0.18628806
  %v3604 = vadd.f32 %v3588, -0.18628806
  %v3605 = vadd.f32 %v3589, -0.18628806
  %v3606 = vadd.f32 %v3590, -0.18628806
  %v3607 = vadd.f32 %v3591, -0.18628806
  %v3608 = vadd.f32 %v3592, -0.18628806
  %v3609 = vmul.f32 %v3370, %v3593
  %v3610 = vmul.f32 %v3372, %v3594
  %v3611 = vmul.f32 %v3374, %v3595
  %v3612 = vmul.f32 %v3376, %v3596
  %v3613 = vmul.f32 %v3378, %v3597
  %v3614 = vmul.f32 %v3380, %v3598
  %v3615 = vmul.f32 %v3382, %v3599
  %v3616 = vmul.f32 %v3384, %v3600
  %v3617 = vmul.f32 %v3386, %v3601
  %v3618 = vmul.f32 %v3388, %v3602
  %v3619 = vmul.f32 %v3390, %v3603
  %v3620 = vmul.f32 %v3392, %v3604
  %v3621 = vmul.f32 %v3394, %v3605
  %v3622 = vmul.f32 %v3396, %v3606
  %v3623 = vmul.f32 %v3398, %v3607
  %v3624 = vmul.f32 %v3400, %v3608
  %v3625 = vadd.f32 %v3609, 0.09678418
  %v3626 = vadd.f32 %v3610, 0.09678418
  %v3627 = vadd.f32 %v3611, 0.09678418
  %v3628 = vadd.f32 %v3612, 0.09678418
  %v3629 = vadd.f32 %v3613, 0.09678418
  %v3630 = vadd.f32 %v3614, 0.09678418
  %v3631 = vadd.f32 %v3615, 0.09678418
  %v3632 = vadd.f32 %v3616, 0.09678418
  %v3633 = vadd.f32 %v3617, 0.09678418
  %v3634 = vadd.f32 %v3618, 0.09678418
  %v3635 = vadd.f32 %v3619, 0.09678418
  %v3636 = vadd.f32 %v3620, 0.09678418
  %v3637 = vadd.f32 %v3621, 0.09678418
  %v3638 = vadd.f32 %v3622, 0.09678418
  %v3639 = vadd.f32 %v3623, 0.09678418
  %v3640 = vadd.f32 %v3624, 0.09678418
  %v3641 = vmul.f32 %v3370, %v3625
  %v3642 = vmul.f32 %v3372, %v3626
  %v3643 = vmul.f32 %v3374, %v3627
  %v3644 = vmul.f32 %v3376, %v3628
  %v3645 = vmul.f32 %v3378, %v3629
  %v3646 = vmul.f32 %v3380, %v3630
  %v3647 = vmul.f32 %v3382, %v3631
  %v3648 = vmul.f32 %v3384, %v3632
  %v3649 = vmul.f32 %v3386, %v3633
  %v3650 = vmul.f32 %v3388, %v3634
  %v3651 = vmul.f32 %v3390, %v3635
  %v3652 = vmul.f32 %v3392, %v3636
  %v3653 = vmul.f32 %v3394, %v3637
  %v3654 = vmul.f32 %v3396, %v3638
  %v3655 = vmul.f32 %v3398, %v3639
  %v3656 = vmul.f32 %v3400, %v3640
  %v3657 = vadd.f32 %v3641, 0.37409195
  %v3658 = vadd.f32 %v3642, 0.37409195
  %v3659 = vadd.f32 %v3643, 0.37409195
  %v3660 = vadd.f32 %v3644, 0.37409195
  %v3661 = vadd.f32 %v3645, 0.37409195
  %v3662 = vadd.f32 %v3646, 0.37409195
  %v3663 = vadd.f32 %v3647, 0.37409195
  %v3664 = vadd.f32 %v3648, 0.37409195
  %v3665 = vadd.f32 %v3649, 0.37409195
  %v3666 = vadd.f32 %v3650, 0.37409195
  %v3667 = vadd.f32 %v3651, 0.37409195
  %v3668 = vadd.f32 %v3652, 0.37409195
  %v3669 = vadd.f32 %v3653, 0.37409195
  %v3670 = vadd.f32 %v3654, 0.37409195
  %v3671 = vadd.f32 %v3655, 0.37409195
  %v3672 = vadd.f32 %v3656, 0.37409195
  %v3673 = vmul.f32 %v3370, %v3657
  %v3674 = vmul.f32 %v3372, %v3658
  %v3675 = vmul.f32 %v3374, %v3659
  %v3676 = vmul.f32 %v3376, %v3660
  %v3677 = vmul.f32 %v3378, %v3661
  %v3678 = vmul.f32 %v3380, %v3662
  %v3679 = vmul.f32 %v3382, %v3663
  %v3680 = vmul.f32 %v3384, %v3664
  %v3681 = vmul.f32 %v3386, %v3665
  %v3682 = vmul.f32 %v3388, %v3666
  %v3683 = vmul.f32 %v3390, %v3667
  %v3684 = vmul.f32 %v3392, %v3668
  %v3685 = vmul.f32 %v3394, %v3669
  %v3686 = vmul.f32 %v3396, %v3670
  %v3687 = vmul.f32 %v3398, %v3671
  %v3688 = vmul.f32 %v3400, %v3672
  %v3689 = vadd.f32 %v3673, 1.0000237
  %v3690 = vadd.f32 %v3674, 1.0000237
  %v3691 = vadd.f32 %v3675, 1.0000237
  %v3692 = vadd.f32 %v3676, 1.0000237
  %v3693 = vadd.f32 %v3677, 1.0000237
  %v3694 = vadd.f32 %v3678, 1.0000237
  %v3695 = vadd.f32 %v3679, 1.0000237
  %v3696 = vadd.f32 %v3680, 1.0000237
  %v3697 = vadd.f32 %v3681, 1.0000237
  %v3698 = vadd.f32 %v3682, 1.0000237
  %v3699 = vadd.f32 %v3683, 1.0000237
  %v3700 = vadd.f32 %v3684, 1.0000237
  %v3701 = vadd.f32 %v3685, 1.0000237
  %v3702 = vadd.f32 %v3686, 1.0000237
  %v3703 = vadd.f32 %v3687, 1.0000237
  %v3704 = vadd.f32 %v3688, 1.0000237
  %v3705 = vmul.f32 %v3370, %v3689
  %v3706 = vmul.f32 %v3372, %v3690
  %v3707 = vmul.f32 %v3374, %v3691
  %v3708 = vmul.f32 %v3376, %v3692
  %v3709 = vmul.f32 %v3378, %v3693
  %v3710 = vmul.f32 %v3380, %v3694
  %v3711 = vmul.f32 %v3382, %v3695
  %v3712 = vmul.f32 %v3384, %v3696
  %v3713 = vmul.f32 %v3386, %v3697
  %v3714 = vmul.f32 %v3388, %v3698
  %v3715 = vmul.f32 %v3390, %v3699
  %v3716 = vmul.f32 %v3392, %v3700
  %v3717 = vmul.f32 %v3394, %v3701
  %v3718 = vmul.f32 %v3396, %v3702
  %v3719 = vmul.f32 %v3398, %v3703
  %v3720 = vmul.f32 %v3400, %v3704
  %v3721 = vadd.f32 %v3433, %v3705
  %v3722 = vadd.f32 %v3434, %v3706
  %v3723 = vadd.f32 %v3435, %v3707
  %v3724 = vadd.f32 %v3436, %v3708
  %v3725 = vadd.f32 %v3437, %v3709
  %v3726 = vadd.f32 %v3438, %v3710
  %v3727 = vadd.f32 %v3439, %v3711
  %v3728 = vadd.f32 %v3440, %v3712
  %v3729 = vadd.f32 %v3441, %v3713
  %v3730 = vadd.f32 %v3442, %v3714
  %v3731 = vadd.f32 %v3443, %v3715
  %v3732 = vadd.f32 %v3444, %v3716
  %v3733 = vadd.f32 %v3445, %v3717
  %v3734 = vadd.f32 %v3446, %v3718
  %v3735 = vadd.f32 %v3447, %v3719
  %v3736 = vadd.f32 %v3448, %v3720
  %v3737 = vmul.f32 %v3721, 1.442695
  %v3738 = vpow.pop %v3737
  %v3739 = vmul.f32 %v3722, 1.442695
  %v3740 = vpow.pop %v3739
  %v3741 = vmul.f32 %v3723, 1.442695
  %v3742 = vpow.pop %v3741
  %v3743 = vmul.f32 %v3724, 1.442695
  %v3744 = vpow.pop %v3743
  %v3745 = vmul.f32 %v3725, 1.442695
  %v3746 = vpow.pop %v3745
  %v3747 = vmul.f32 %v3726, 1.442695
  %v3748 = vpow.pop %v3747
  %v3749 = vmul.f32 %v3727, 1.442695
  %v3750 = vpow.pop %v3749
  %v3751 = vmul.f32 %v3728, 1.442695
  %v3752 = vpow.pop %v3751
  %v3753 = vmul.f32 %v3729, 1.442695
  %v3754 = vpow.pop %v3753
  %v3755 = vmul.f32 %v3730, 1.442695
  %v3756 = vpow.pop %v3755
  %v3757 = vmul.f32 %v3731, 1.442695
  %v3758 = vpow.pop %v3757
  %v3759 = vmul.f32 %v3732, 1.442695
  %v3760 = vpow.pop %v3759
  %v3761 = vmul.f32 %v3733, 1.442695
  %v3762 = vpow.pop %v3761
  %v3763 = vmul.f32 %v3734, 1.442695
  %v3764 = vpow.pop %v3763
  %v3765 = vmul.f32 %v3735, 1.442695
  %v3766 = vpow.pop %v3765
  %v3767 = vmul.f32 %v3736, 1.442695
  %v3768 = vpow.pop %v3767
  %v3769 = vmul.f32 %v3370, %v3738
  %v3770 = vmul.f32 %v3372, %v3740
  %v3771 = vmul.f32 %v3374, %v3742
  %v3772 = vmul.f32 %v3376, %v3744
  %v3773 = vmul.f32 %v3378, %v3746
  %v3774 = vmul.f32 %v3380, %v3748
  %v3775 = vmul.f32 %v3382, %v3750
  %v3776 = vmul.f32 %v3384, %v3752
  %v3777 = vmul.f32 %v3386, %v3754
  %v3778 = vmul.f32 %v3388, %v3756
  %v3779 = vmul.f32 %v3390, %v3758
  %v3780 = vmul.f32 %v3392, %v3760
  %v3781 = vmul.f32 %v3394, %v3762
  %v3782 = vmul.f32 %v3396, %v3764
  %v3783 = vmul.f32 %v3398, %v3766
  %v3784 = vmul.f32 %v3400, %v3768
  %vm3785 = vcmp.ge.f32.partialorder %v3305, 0.0
  %vm3786 = vcmp.ge.f32.partialorder %v3306, 0.0
  %vm3787 = vcmp.ge.f32.partialorder %v3307, 0.0
  %vm3788 = vcmp.ge.f32.partialorder %v3308, 0.0
  %vm3789 = vcmp.ge.f32.partialorder %v3309, 0.0
  %vm3790 = vcmp.ge.f32.partialorder %v3310, 0.0
  %vm3791 = vcmp.ge.f32.partialorder %v3311, 0.0
  %vm3792 = vcmp.ge.f32.partialorder %v3312, 0.0
  %vm3793 = vcmp.ge.f32.partialorder %v3313, 0.0
  %vm3794 = vcmp.ge.f32.partialorder %v3314, 0.0
  %vm3795 = vcmp.ge.f32.partialorder %v3315, 0.0
  %vm3796 = vcmp.ge.f32.partialorder %v3316, 0.0
  %vm3797 = vcmp.ge.f32.partialorder %v3317, 0.0
  %vm3798 = vcmp.ge.f32.partialorder %v3318, 0.0
  %vm3799 = vcmp.ge.f32.partialorder %v3319, 0.0
  %vm3800 = vcmp.ge.f32.partialorder %v3320, 0.0
  %v3801 = vsub.f32 1.0, %v3769
  %v3802 = vsub.f32 1.0, %v3770
  %v3803 = vsub.f32 1.0, %v3771
  %v3804 = vsub.f32 1.0, %v3772
  %v3805 = vsub.f32 1.0, %v3773
  %v3806 = vsub.f32 1.0, %v3774
  %v3807 = vsub.f32 1.0, %v3775
  %v3808 = vsub.f32 1.0, %v3776
  %v3809 = vsub.f32 1.0, %v3777
  %v3810 = vsub.f32 1.0, %v3778
  %v3811 = vsub.f32 1.0, %v3779
  %v3812 = vsub.f32 1.0, %v3780
  %v3813 = vsub.f32 1.0, %v3781
  %v3814 = vsub.f32 1.0, %v3782
  %v3815 = vsub.f32 1.0, %v3783
  %v3816 = vsub.f32 1.0, %v3784
  %v3817 = vsub.f32 %v3769, 1.0
  %v3818 = vsub.f32 %v3770, 1.0
  %v3819 = vsub.f32 %v3771, 1.0
  %v3820 = vsub.f32 %v3772, 1.0
  %v3821 = vsub.f32 %v3773, 1.0
  %v3822 = vsub.f32 %v3774, 1.0
  %v3823 = vsub.f32 %v3775, 1.0
  %v3824 = vsub.f32 %v3776, 1.0
  %v3825 = vsub.f32 %v3777, 1.0
  %v3826 = vsub.f32 %v3778, 1.0
  %v3827 = vsub.f32 %v3779, 1.0
  %v3828 = vsub.f32 %v3780, 1.0
  %v3829 = vsub.f32 %v3781, 1.0
  %v3830 = vsub.f32 %v3782, 1.0
  %v3831 = vsub.f32 %v3783, 1.0
  %v3832 = vsub.f32 %v3784, 1.0
  %v3833 = vsel %vm3785, %v3801, %v3817
  %v3834 = vsel %vm3786, %v3802, %v3818
  %v3835 = vsel %vm3787, %v3803, %v3819
  %v3836 = vsel %vm3788, %v3804, %v3820
  %v3837 = vsel %vm3789, %v3805, %v3821
  %v3838 = vsel %vm3790, %v3806, %v3822
  %v3839 = vsel %vm3791, %v3807, %v3823
  %v3840 = vsel %vm3792, %v3808, %v3824
  %v3841 = vsel %vm3793, %v3809, %v3825
  %v3842 = vsel %vm3794, %v3810, %v3826
  %v3843 = vsel %vm3795, %v3811, %v3827
  %v3844 = vsel %vm3796, %v3812, %v3828
  %v3845 = vsel %vm3797, %v3813, %v3829
  %v3846 = vsel %vm3798, %v3814, %v3830
  %v3847 = vsel %vm3799, %v3815, %v3831
  %v3848 = vsel %vm3800, %v3816, %v3832
  %v3849 = vadd.f32 %v3833, 1.0
  %v3850 = vadd.f32 %v3834, 1.0
  %v3851 = vadd.f32 %v3835, 1.0
  %v3852 = vadd.f32 %v3836, 1.0
  %v3853 = vadd.f32 %v3837, 1.0
  %v3854 = vadd.f32 %v3838, 1.0
  %v3855 = vadd.f32 %v3839, 1.0
  %v3856 = vadd.f32 %v3840, 1.0
  %v3857 = vadd.f32 %v3841, 1.0
  %v3858 = vadd.f32 %v3842, 1.0
  %v3859 = vadd.f32 %v3843, 1.0
  %v3860 = vadd.f32 %v3844, 1.0
  %v3861 = vadd.f32 %v3845, 1.0
  %v3862 = vadd.f32 %v3846, 1.0
  %v3863 = vadd.f32 %v3847, 1.0
  %v3864 = vadd.f32 %v3848, 1.0
  %v3865 = vmul.f32 %v3289, %v3849
  %v3866 = vmul.f32 %v3290, %v3850
  %v3867 = vmul.f32 %v3291, %v3851
  %v3868 = vmul.f32 %v3292, %v3852
  %v3869 = vmul.f32 %v3293, %v3853
  %v3870 = vmul.f32 %v3294, %v3854
  %v3871 = vmul.f32 %v3295, %v3855
  %v3872 = vmul.f32 %v3296, %v3856
  %v3873 = vmul.f32 %v3297, %v3857
  %v3874 = vmul.f32 %v3298, %v3858
  %v3875 = vmul.f32 %v3299, %v3859
  %v3876 = vmul.f32 %v3300, %v3860
  %v3877 = vmul.f32 %v3301, %v3861
  %v3878 = vmul.f32 %v3302, %v3862
  %v3879 = vmul.f32 %v3303, %v3863
  %v3880 = vmul.f32 %v3304, %v3864
  %3881 = vset.pattern.permute.xlu0 16
  %3882 = vperm.xlu0 %3881, %v85
  %v3883 = vpop.permute.xlu0 %3882
  %3885 = vset.pattern.permute.xlu0 16
  %3886 = vperm.xlu0 %3885, %v86
  %v3887 = vpop.permute.xlu0 %3886
  %3889 = vset.pattern.permute.xlu0 16
  %3890 = vperm.xlu0 %3889, %v87
  %v3891 = vpop.permute.xlu0 %3890
  %3893 = vset.pattern.permute.xlu0 16
  %3894 = vperm.xlu0 %3893, %v88
  %v3895 = vpop.permute.xlu0 %3894
  %3897 = vxpose.xlu0.b32.start [1/16] %v69, 128
  %3898 = vxpose.xlu0.b32.cont [2/16] %v70, 128
  %3899 = vxpose.xlu0.b32.cont [3/16] %v71, 128
  %3900 = vxpose.xlu0.b32.cont [4/16] %v72, 128
  %3901 = vxpose.xlu0.b32.cont [5/16] %v73, 128
  %3902 = vxpose.xlu0.b32.cont [6/16] %v74, 128
  %3903 = vxpose.xlu0.b32.cont [7/16] %v75, 128
  %3904 = vxpose.xlu0.b32.cont [8/16] %v76, 128
  %3905 = vxpose.xlu0.b32.cont [9/16] %v77, 128
  %3906 = vxpose.xlu0.b32.cont [10/16] %v78, 128
  %3907 = vxpose.xlu0.b32.cont [11/16] %v79, 128
  %3908 = vxpose.xlu0.b32.cont [12/16] %v80, 128
  %3909 = vxpose.xlu0.b32.cont [13/16] %v81, 128
  %3910 = vxpose.xlu0.b32.cont [14/16] %v82, 128
  %3911 = vxpose.xlu0.b32.cont [15/16] %v83, 128
  %3912 = vxpose.xlu0.b32.end [16/16] %v84, 128
  %v3913 = vpop.trf.xlu0
  %v3914 = vpop.trf.xlu0
  %v3915 = vpop.trf.xlu0
  %v3916 = vpop.trf.xlu0
  %v3917 = vpop.trf.xlu0
  %v3918 = vpop.trf.xlu0
  %v3919 = vpop.trf.xlu0
  %v3920 = vpop.trf.xlu0
  %v3921 = vpop.trf.xlu0
  %v3922 = vpop.trf.xlu0
  %v3923 = vpop.trf.xlu0
  %v3924 = vpop.trf.xlu0
  %v3925 = vpop.trf.xlu0
  %v3926 = vpop.trf.xlu0
  %v3927 = vpop.trf.xlu0
  %v3928 = vpop.trf.xlu0
  %3929 = vmatprep.subr.mxu0 0.0
  %3930 = vmatpush1.msra.mxu0 %v3880
  %3931 = vmatprep.subr.mxu0 0.0
  %3932 = vmatpush1.msra.mxu0 %v3879
  %3933 = vmatprep.subr.mxu0 0.0
  %3934 = vmatpush1.msra.mxu0 %v3878
  %3935 = vmatprep.subr.mxu0 0.0
  %3936 = vmatpush1.msra.mxu0 %v3877
  %3937 = vmatprep.subr.mxu0 0.0
  %3938 = vmatpush1.msra.mxu0 %v3876
  %3939 = vmatprep.subr.mxu0 0.0
  %3940 = vmatpush1.msra.mxu0 %v3875
  %3941 = vmatprep.subr.mxu0 0.0
  %3942 = vmatpush1.msra.mxu0 %v3874
  %3943 = vmatprep.subr.mxu0 0.0
  %3944 = vmatpush1.msra.mxu0 %v3873
  %3945 = vmatprep.subr.mxu0 0.0
  %3946 = vmatpush1.msra.mxu0 %v3872
  %3947 = vmatprep.subr.mxu0 0.0
  %3948 = vmatpush1.msra.mxu0 %v3871
  %3949 = vmatprep.subr.mxu0 0.0
  %3950 = vmatpush1.msra.mxu0 %v3870
  %3951 = vmatprep.subr.mxu0 0.0
  %3952 = vmatpush1.msra.mxu0 %v3869
  %3953 = vmatprep.subr.mxu0 0.0
  %3954 = vmatpush1.msra.mxu0 %v3868
  %3955 = vmatprep.subr.mxu0 0.0
  %3956 = vmatpush1.msra.mxu0 %v3867
  %3957 = vmatprep.subr.mxu0 0.0
  %3958 = vmatpush1.msra.mxu0 %v3866
  %3959 = vmatprep.subr.mxu0 0.0
  %3960 = vmatpush1.msra.mxu0 %v3865
  %3961 = vmatprep.subr.mxu0 0.0
  %3962 = vmatpush2.msra.mxu0 0.0
  %3963 = vmatprep.subr.mxu0 0.0
  %3964 = vmatpush2.msra.mxu0 0.0
  %3965 = vmatprep.subr.mxu0 0.0
  %3966 = vmatpush2.msra.mxu0 0.0
  %3967 = vmatprep.subr.mxu0 0.0
  %3968 = vmatpush2.msra.mxu0 0.0
  %3969 = vmatprep.subr.mxu0 0.0
  %3970 = vmatpush2.msra.mxu0 0.0
  %3971 = vmatprep.subr.mxu0 0.0
  %3972 = vmatpush2.msra.mxu0 0.0
  %3973 = vmatprep.subr.mxu0 0.0
  %3974 = vmatpush2.msra.mxu0 0.0
  %3975 = vmatprep.subr.mxu0 0.0
  %3976 = vmatpush2.msra.mxu0 0.0
  %3977 = vmatprep.subr.mxu0 0.0
  %3978 = vmatpush2.msra.mxu0 0.0
  %3979 = vmatprep.subr.mxu0 0.0
  %3980 = vmatpush2.msra.mxu0 0.0
  %3981 = vmatprep.subr.mxu0 0.0
  %3982 = vmatpush2.msra.mxu0 0.0
  %3983 = vmatprep.subr.mxu0 0.0
  %3984 = vmatpush2.msra.mxu0 0.0
  %3985 = vmatprep.subr.mxu0 0.0
  %3986 = vmatpush2.msra.mxu0 0.0
  %3987 = vmatprep.subr.mxu0 0.0
  %3988 = vmatpush2.msra.mxu0 0.0
  %3989 = vmatprep.subr.mxu0 0.0
  %3990 = vmatpush2.msra.mxu0 0.0
  %3991 = vmatprep.subr.mxu0 0.0
  %3992 = vmatpush2.msra.mxu0 0.0
  %3993 = vmatprep.mubr.f32.mxu0 0.0
  %3994 = vmatmul.mubr.f32.gmra.mxu0 %v3913
  %v3995 = vpop.f32.mrf.mxu0
  %v3996 = vadd.f32 %v3883, %v3995
  %v3997 = vpop.f32.mrf.mxu0
  %3998 = vmatprep.mubr.f32.mxu0 0.0
  %3999 = vmatmul.mubr.f32.gmra.mxu0 %v3914
  %v4000 = vpop.f32.mrf.mxu0
  %v4001 = vadd.f32 %v3887, %v4000
  %v4002 = vpop.f32.mrf.mxu0
  %4003 = vmatprep.mubr.f32.mxu0 0.0
  %4004 = vmatmul.mubr.f32.gmra.mxu0 %v3915
  %v4005 = vpop.f32.mrf.mxu0
  %v4006 = vadd.f32 %v3891, %v4005
  %v4007 = vpop.f32.mrf.mxu0
  %4008 = vmatprep.mubr.f32.mxu0 0.0
  %4009 = vmatmul.mubr.f32.gmra.mxu0 %v3916
  %v4010 = vpop.f32.mrf.mxu0
  %v4011 = vadd.f32 %v3895, %v4010
  %v4012 = vpop.f32.mrf.mxu0
  %4013 = vdwg.mxu0
  %v4014 = vmul.f32 %v3996, %v105
  %v4015 = vmul.f32 %v4001, %v105
  %v4016 = vmul.f32 %v4006, %v105
  %v4017 = vmul.f32 %v4011, %v105
  %v4018 = vadd.f32 %v2950, %v4014
  %v4019 = vadd.f32 %v2951, %v4015
  %v4020 = vadd.f32 %v2952, %v4016
  %v4021 = vadd.f32 %v2953, %v4017
  %4022 = vst [vmem:[%s9] sm:$0xff] %v4018
  %4023 = vst [vmem:[%s9 + $0x8] sm:$0xff] %v4019
  %4024 = vst [vmem:[%s9 + $0x10] sm:$0xff] %v4020
  %4025 = vst [vmem:[%s9 + $0x18] sm:$0xff] %v4021
  // Predicated region
  $region38: #{transformer_encoder.1} parent=0 // pred_check
    _
  $region39: #{transformer_encoder.1} parent=0 // pred_check_branch
    %4027 = sbr.rel (0) target = $region41
  $region40: #{transformer_encoder.1} parent=0 // pred_region
    _
  $region41: #{transformer_encoder.1} parent=0 // pred_fallthru
    _
  // Predicated region
  $region42: #{transformer_encoder.1} parent=0 // pred_check
    _
  $region43: #{transformer_encoder.1} parent=0 // pred_check_branch
    %4029 = sbr.rel (0) target = $region45
  $region44: #{transformer_encoder.1} parent=0 // pred_region
    _
  $region45: #{transformer_encoder.1} parent=0 // pred_fallthru
    _

</llo_original>
